<compile_context>
chip_gen: v7x
topology: tpu7x:2x2x1
jax: 0.10.0
libtpu: 0.0.40
codegen_flags: <defaults>
</compile_context>

<pallas_src>
import functools
import math

import jax
import jax.numpy as jnp
from jax.experimental import pallas as pl
from jax.experimental.pallas import tpu as pltpu

INV_SQRT2 = 1.0 / math.sqrt(2.0)
LN_EPS = 1e-5                      # torch LayerNorm default
VMEM_LIMIT = 32 * 1024 * 1024      # explicit scoped-VMEM budget (safe on v5e/v6e/v7x)


# ---------------------------------------------------------------------------
# math helpers (usable inside kernels and in the pure-JAX reference)
# ---------------------------------------------------------------------------
def _scaled_silu(x):
    # ScaledSiLU: silu(x) * (1 / 0.6)
    return x * jax.nn.sigmoid(x) * (1.0 / 0.6)


def _nn_dot(a, w):
    # a [m,k] @ w [k,n]; weights are pre-transposed at pack time so this is a
    # plain NN contraction (no per-step XLU transpose of a loop-invariant RHS).
    return jnp.dot(a, w, preferred_element_type=jnp.float32)


def _matmul_nt(a, b):
    # a [m,k] @ b[n,k].T -> [m,n]  (activation x activation)
    return jax.lax.dot_general(a, b, (((1,), (1,)), ((), ())),
                               preferred_element_type=jnp.float32)


def _matmul_tn(a, b):
    # a [k,m].T @ b[k,n] -> [m,n]
    return jax.lax.dot_general(a, b, (((0,), (0,)), ((), ())),
                               preferred_element_type=jnp.float32)


def _layernorm(x, g, b):
    mu = jnp.mean(x, axis=-1, keepdims=True)
    var = jnp.mean((x - mu) ** 2, axis=-1, keepdims=True)
    return (x - mu) * jax.lax.rsqrt(var + LN_EPS) * g + b


# ---------------------------------------------------------------------------
# Kernel 1: fused node-wise MLP chain on lane-packed rows.
#   optional: y = ScaledSiLU(x @ Wbig)   (Dense of linear_heads, block-diag)
#   then n_res residual blocks (ResidualLayer, block-diag weights)
# Used for both pre_residual (no head, 1 residual pair) and linear_heads.
# ---------------------------------------------------------------------------
def _node_chain_kernel(*refs, act, use_head, n_res):
    x_ref = refs[0]
    o_ref = refs[-1]
    idx = 1
    y = x_ref[...]
    if use_head:
        y = _nn_dot(y, refs[idx][...])
        idx += 1
        if act:
            y = _scaled_silu(y)
    if n_res:
        w1_ref, w2_ref = refs[idx], refs[idx + 1]
        for j in range(n_res):                    # static, small unrolled loop
            r = _nn_dot(y, w1_ref[j])
            if act:
                r = _scaled_silu(r)
            r = _nn_dot(r, w2_ref[j])
            if act:
                r = _scaled_silu(r)
            y = (y + r) * INV_SQRT2
    o_ref[...] = y.astype(o_ref.dtype)


def node_chain(x, head_w_big, res_w1, res_w2, act, pack_factor, tile_rows=2048):
    """x: [N, D] flat nodes.  Weights are pre-packed kron(I_pack, W.T) of
    shape [pack*D, pack*D] so `pack_factor` nodes share one lane-dense row."""
    n, d = x.shape
    p = pack_factor
    n_pad = -(-n // p) * p
    if n_pad != n:
        x = jnp.pad(x, ((0, n_pad - n), (0, 0)))
    xp = x.reshape(n_pad // p, p * d)            # [rows, pack*D] lane-dense
    rows, dd = xp.shape

    use_head = head_w_big is not None
    n_res = 0 if res_w1 is None else res_w1.shape[0]

    # Tile selection: big tiles amortize the ~0.35us per-step overhead; when
    # everything fits one tile, still split into 2 blocks so v7x's second
    # TensorCore gets work on the "parallel" grid axis.
    if rows > tile_rows:
        tn = tile_rows
    elif rows >= 16:
        half = (rows + 1) // 2
        tn = ((half + 7) // 8) * 8
    else:
        tn = rows
    grid = (pl.cdiv(rows, tn),)

    args = [xp]
    in_specs = [pl.BlockSpec((tn, dd), lambda i: (i, 0))]
    if use_head:
        args.append(head_w_big)
        in_specs.append(pl.BlockSpec((dd, dd), lambda i: (0, 0)))
    if n_res:
        args += [res_w1, res_w2]
        wspec = pl.BlockSpec((n_res, dd, dd), lambda i: (0, 0, 0))
        in_specs += [wspec, wspec]

    outp = pl.pallas_call(
        functools.partial(_node_chain_kernel, act=act, use_head=use_head,
                          n_res=n_res),
        out_shape=jax.ShapeDtypeStruct((rows, dd), x.dtype),
        grid=grid,
        in_specs=in_specs,
        out_specs=pl.BlockSpec((tn, dd), lambda i: (i, 0)),
        compiler_params=pltpu.CompilerParams(
            dimension_semantics=("parallel",),
            vmem_limit_bytes=VMEM_LIMIT),
    )(*args)
    return outp.reshape(n_pad, d)[:n]


# ---------------------------------------------------------------------------
# Kernel 2: fused NeuralAtom core, G graphs per grid step:
#   Porjecting BaseMHA (heads=1, additive -1e9 mask, softmax over SEED axis),
#   Exchanging BaseMHA (heads=2, softmax over QUERY axis),
#   final einsum  S[b,c,n] * NAs[b,c,d] -> [b,n,d]   (or its transpose).
# All intermediates (na0, na, attention map) stay in VMEM / vregs.
# ---------------------------------------------------------------------------
def _na_kernel(seeds_ref, x_ref, mask_ref, p_w_ref, p_vec_ref,
               s_w_ref, s_vec_ref, out_ref, *, d, num_heads, g, transpose_out):
    seeds = seeds_ref[0]                                  # [ns, D]
    # packed MHA params: weights pre-transposed [4,D,D], vectors [8,D]
    p_wq, p_wk, p_wv, p_wo = p_w_ref[0], p_w_ref[1], p_w_ref[2], p_w_ref[3]
    p_bq, p_bk = p_vec_ref[0:1, :], p_vec_ref[1:2, :]
    p_bv, p_bo = p_vec_ref[2:3, :], p_vec_ref[3:4, :]
    p_g0, p_be0 = p_vec_ref[4:5, :], p_vec_ref[5:6, :]
    p_g1, p_be1 = p_vec_ref[6:7, :], p_vec_ref[7:8, :]
    s_wq, s_wk, s_wv, s_wo = s_w_ref[0], s_w_ref[1], s_w_ref[2], s_w_ref[3]
    s_bq, s_bk = s_vec_ref[0:1, :], s_vec_ref[1:2, :]
    s_bv, s_bo = s_vec_ref[2:3, :], s_vec_ref[3:4, :]
    s_g0, s_be0 = s_vec_ref[4:5, :], s_vec_ref[5:6, :]
    s_g1, s_be1 = s_vec_ref[6:7, :], s_vec_ref[7:8, :]

    inv_sqrt_d = 1.0 / math.sqrt(d)
    dh = d // num_heads
    # loop-invariant work hoisted out of the per-graph loop:
    q_seed = _nn_dot(seeds, p_wq) + p_bq                  # [ns, D] (shared seeds)
    col = jax.lax.broadcasted_iota(jnp.int32, (1, d), 1)
    head_masks = [jnp.where((col >= h * dh) & (col < (h + 1) * dh), 1.0, 0.0)
                  for h in range(num_heads)]

    for gi in range(g):                                   # static unroll over graphs
        x = x_ref[gi]                                     # [Nmax, D]
        m = mask_ref[gi]                                  # [1, Nmax] additive

        # ---- Porjecting MHA (heads=1, softmax over the SEED axis) ----
        k = _nn_dot(x, p_wk) + p_bk                       # [Nmax, D]
        v = _nn_dot(x, p_wv) + p_bv                       # [Nmax, D]
        score = _matmul_nt(q_seed, k) * inv_sqrt_d + m    # [ns, Nmax]
        smax = jnp.max(score, axis=0, keepdims=True)
        e = jnp.exp(score - smax)
        a = e * pl.reciprocal(jnp.sum(e, axis=0, keepdims=True), approx=True)
        na0 = q_seed + jnp.dot(a, v, preferred_element_type=jnp.float32)
        na0 = _layernorm(na0, p_g0, p_be0)
        na0 = na0 + jnp.maximum(_nn_dot(na0, p_wo) + p_bo, 0.0)
        na0 = _layernorm(na0, p_g1, p_be1)

        # ---- Exchanging MHA (heads=2, no mask, softmax over QUERY axis) ----
        q2 = _nn_dot(na0, s_wq) + s_bq
        k2 = _nn_dot(na0, s_wk) + s_bk
        v2 = _nn_dot(na0, s_wv) + s_bv
        out2 = q2
        for mh in head_masks:
            # (q2*mh)@k2.T == Qh@Kh.T ; sum_h Ah@(v2*mh) == per-head concat.
            sc = _matmul_nt(q2 * mh, k2) * inv_sqrt_d     # [ns, ns]
            smx = jnp.max(sc, axis=0, keepdims=True)
            eh = jnp.exp(sc - smx)
            ah = eh * pl.reciprocal(jnp.sum(eh, axis=0, keepdims=True),
                                    approx=True)
            out2 = out2 + jnp.dot(ah, v2 * mh,
                                  preferred_element_type=jnp.float32)
        na = _layernorm(out2, s_g0, s_be0)
        na = na + jnp.maximum(_nn_dot(na, s_wo) + s_bo, 0.0)
        na = _layernorm(na, s_g1, s_be1)

        # ---- broadcast back: einsum('bcn,bcd->bnd')  (h=1 => mean is id) ----
        if transpose_out:
            out_ref[gi] = _matmul_tn(na, a).astype(out_ref.dtype)   # [D, Nmax]
        else:
            out_ref[gi] = _matmul_tn(a, na).astype(out_ref.dtype)   # [Nmax, D]


def fused_neural_atoms(seeds, batch_x, mask_add, proj_w, proj_vec,
                       inter_w, inter_vec, num_heads=2, graphs_per_step=None):
    b, nmax, d = batch_x.shape
    ns = seeds.shape[1]

    # Graphs per grid step: amortize step overhead but keep >=2 grid steps so
    # v7x can shard the "parallel" axis across both TensorCores.
    if graphs_per_step is None:
        g = min(8, max(1, b // 2)) if b >= 2 else 1
    else:
        g = graphs_per_step
    b_pad = -(-b // g) * g
    if b_pad != b:
        batch_x = jnp.pad(batch_x, ((0, b_pad - b), (0, 0), (0, 0)))
        mask_add = jnp.pad(mask_add, ((0, b_pad - b), (0, 0), (0, 0)))
    # TODO(synk): when B == 1, split nmax / seed work to feed both v7x cores.

    # Lane-dense output (last dim >= 128) when Nmax fills the lanes; otherwise
    # keep the [Nmax, D] layout (tiny Nmax -> DMA-bound either way).
    transpose_out = nmax >= 128
    out_dims = (b_pad, d, nmax) if transpose_out else (b_pad, nmax, d)
    out_block = (g, d, nmax) if transpose_out else (g, nmax, d)

    in_specs = [
        pl.BlockSpec((1, ns, d), lambda i: (0, 0, 0)),    # shared seeds
        pl.BlockSpec((g, nmax, d), lambda i: (i, 0, 0)),  # dense batch x
        pl.BlockSpec((g, 1, nmax), lambda i: (i, 0, 0)),  # additive mask
        pl.BlockSpec((4, d, d), lambda i: (0, 0, 0)),     # proj W (q,k,v,o).T
        pl.BlockSpec((8, d), lambda i: (0, 0)),           # proj biases + LN
        pl.BlockSpec((4, d, d), lambda i: (0, 0, 0)),     # inter W (q,k,v,o).T
        pl.BlockSpec((8, d), lambda i: (0, 0)),           # inter biases + LN
    ]

    out = pl.pallas_call(
        functools.partial(_na_kernel, d=d, num_heads=num_heads, g=g,
                          transpose_out=transpose_out),
        out_shape=jax.ShapeDtypeStruct(out_dims, batch_x.dtype),
        grid=(b_pad // g,),
        in_specs=in_specs,
        out_specs=pl.BlockSpec(out_block, lambda i: (i, 0, 0)),
        compiler_params=pltpu.CompilerParams(
            dimension_semantics=("parallel",),
            vmem_limit_bytes=VMEM_LIMIT),
    )(seeds, batch_x, mask_add, proj_w, proj_vec, inter_w, inter_vec)
    return out[:b], transpose_out


# ---------------------------------------------------------------------------
# Plain-JAX glue: to_dense_batch (scatter) and the masked gather back.
# TODO(synk): data-dependent scatter/gather stays in JAX (no clean rectangular
#             BlockSpec equivalent); everything dense runs in Pallas kernels.
# ---------------------------------------------------------------------------
def to_dense_batch(x, batch, num_graphs, max_nodes):
    n, d = x.shape
    counts = jax.ops.segment_sum(jnp.ones((n,), jnp.int32), batch,
                                 num_segments=num_graphs)
    offsets = jnp.concatenate(
        [jnp.zeros((1,), jnp.int32), jnp.cumsum(counts)[:-1]])
    pos = jnp.arange(n, dtype=jnp.int32) - offsets[batch]
    dense = jnp.zeros((num_graphs, max_nodes, d), x.dtype).at[batch, pos].set(x)
    mask = jnp.zeros((num_graphs, max_nodes), jnp.bool_).at[batch, pos].set(True)
    mask_add = jnp.where(mask, 0.0, -1e9).astype(x.dtype)[:, None, :]  # [B,1,Nmax]
    return dense, mask_add, pos, mask


# ---------------------------------------------------------------------------
# One-time parameter packing (hoisted out of the per-call forward).
# ---------------------------------------------------------------------------
def pack_params(p):
    d = p['head_w'].shape[0]
    pack = max(1, 128 // d)
    eye = jnp.eye(pack, dtype=jnp.float32)

    def big(w):           # [dout, din] -> block-diag kron(I_pack, w.T)
        return jnp.kron(eye, w.T)

    def mha_pack(m):
        w = jnp.stack([m['wq'].T, m['wk'].T, m['wv'].T, m['wo'].T])     # [4,D,D]
        vec = jnp.concatenate([m['bq'], m['bk'], m['bv'], m['bo'],
                               m['g0'], m['be0'], m['g1'], m['be1']], axis=0)
        return w, vec                                                    # [8,D]

    proj_w, proj_vec = mha_pack(p['proj'])
    inter_w, inter_vec = mha_pack(p['inter'])
    if p['head_res']:
        head_res_w1 = jnp.stack([big(w1) for w1, _ in p['head_res']])
        head_res_w2 = jnp.stack([big(w2) for _, w2 in p['head_res']])
    else:
        head_res_w1 = head_res_w2 = None
    return dict(
        seeds=p['seeds'],
        pre_w1_big=big(p['pre_w1'])[None],
        pre_w2_big=big(p['pre_w2'])[None],
        proj_w=proj_w, proj_vec=proj_vec,
        inter_w=inter_w, inter_vec=inter_vec,
        head_w_big=big(p['head_w']),
        head_res_w1=head_res_w1, head_res_w2=head_res_w2,
    )


# ---------------------------------------------------------------------------
# NeuralAtom forward (Pallas path)
# ---------------------------------------------------------------------------
def neural_atom_forward(pp, h, batch_seg, num_graphs, max_nodes, act=True):
    d = h.shape[-1]
    pack = max(1, 128 // d)
    # pre_residual: one fused lane-packed node-wise kernel
    hres = node_chain(h, None, pp['pre_w1_big'], pp['pre_w2_big'], act, pack)
    # get_NAs_emb
    batch_x, mask_add, pos, _ = to_dense_batch(hres, batch_seg, num_graphs,
                                               max_nodes)
    dense_out, transposed = fused_neural_atoms(
        pp['seeds'], batch_x, mask_add, pp['proj_w'], pp['proj_vec'],
        pp['inter_w'], pp['inter_vec'], num_heads=2)
    if transposed:
        h_upd = dense_out[batch_seg, :, pos]              # [N, D]
    else:
        h_upd = dense_out[batch_seg, pos]                 # == [ori_mask]
    # linear_heads: Dense + all residual blocks, one fused lane-packed kernel
    h_upd = node_chain(h_upd, pp['head_w_big'], pp['head_res_w1'],
                       pp['head_res_w2'], act, pack)
    return h_upd


# ---------------------------------------------------------------------------
# Pure-JAX reference (mirrors the PyTorch math) for a sanity check.
# ---------------------------------------------------------------------------
def _ref_act(x, act):
    return _scaled_silu(x) if act else x


def _ref_residual(x, w1, w2, act):
    y = _ref_act(x @ w1.T, act)
    y = _ref_act(y @ w2.T, act)
    return (x + y) * INV_SQRT2


def _ref_ln(x, g, b):
    mu = jnp.mean(x, axis=-1, keepdims=True)
    var = jnp.mean((x - mu) ** 2, axis=-1, keepdims=True)
    return (x - mu) * jax.lax.rsqrt(var + LN_EPS) * g + b


def _ref_mha(q_in, k_in, prm, num_heads, dim_v, mask_add=None):
    hp = jax.lax.Precision.HIGHEST
    q = q_in @ prm['wq'].T + prm['bq']
    k = k_in @ prm['wk'].T + prm['bk']
    v = k_in @ prm['wv'].T + prm['bv']
    q_ = jnp.concatenate(jnp.split(q, num_heads, axis=2), axis=0)
    k_ = jnp.concatenate(jnp.split(k, num_heads, axis=2), axis=0)
    v_ = jnp.concatenate(jnp.split(v, num_heads, axis=2), axis=0)
    score = jnp.einsum('bqd,bkd->bqk', q_, k_, precision=hp) / math.sqrt(dim_v)
    if mask_add is not None:
        score = score + jnp.concatenate([mask_add] * num_heads, axis=0)
    a = jax.nn.softmax(score, axis=1)                       # dim=1, as in torch
    out = q_ + jnp.einsum('bqk,bkd->bqd', a, v_, precision=hp)
    out = jnp.concatenate(jnp.split(out, num_heads, axis=0), axis=2)
    out = _ref_ln(out, prm['g0'], prm['be0'])
    out = out + jnp.maximum(out @ prm['wo'].T + prm['bo'], 0.0)
    out = _ref_ln(out, prm['g1'], prm['be1'])
    return out, a


def reference_forward(p, h, batch_seg, num_graphs, max_nodes, act=True):
    d = h.shape[-1]
    hres = _ref_residual(h, p['pre_w1'], p['pre_w2'], act)
    batch_x, mask_add, pos, _ = to_dense_batch(hres, batch_seg, num_graphs,
                                               max_nodes)
    seeds = jnp.broadcast_to(p['seeds'],
                             (num_graphs,) + p['seeds'].shape[1:])
    na0, s_att = _ref_mha(seeds, batch_x, p['proj'], 1, d, mask_add)
    na, _ = _ref_mha(na0, na0, p['inter'], 2, d, None)
    t = jnp.einsum('bcn,bcd->bnd', s_att, na,
                   precision=jax.lax.Precision.HIGHEST)
    h_upd = t[batch_seg, pos]
    h_upd = _ref_act(h_upd @ p['head_w'].T, act)
    for w1, w2 in p['head_res']:
        h_upd = _ref_residual(h_upd, w1, w2, act)
    return h_upd


# ---------------------------------------------------------------------------
# Deterministic parameter init (shapes follow the module __init__)
# ---------------------------------------------------------------------------
def init_params(key, d, num_seeds, num_hidden):
    keys = iter(jax.random.split(key, 64))

    def w(din, dout):
        return jax.random.normal(next(keys), (dout, din),
                                 jnp.float32) / math.sqrt(din)

    def b(dout):
        return jax.random.normal(next(keys), (1, dout), jnp.float32) * 0.02

    def mha():
        return dict(wq=w(d, d), bq=b(d), wk=w(d, d), bk=b(d),
                    wv=w(d, d), bv=b(d), wo=w(d, d), bo=b(d),
                    g0=jnp.ones((1, d), jnp.float32),
                    be0=jnp.zeros((1, d), jnp.float32),
                    g1=jnp.ones((1, d), jnp.float32),
                    be1=jnp.zeros((1, d), jnp.float32))

    return dict(
        pre_w1=w(d, d), pre_w2=w(d, d),
        seeds=jax.random.normal(next(keys), (1, num_seeds, d), jnp.float32)
        * math.sqrt(2.0 / (num_seeds + d)),
        proj=mha(), inter=mha(),
        head_w=w(d, d),
        head_res=[(w(d, d), w(d, d)) for _ in range(num_hidden)],
    )


if __name__ == "__main__":
    key = jax.random.PRNGKey(0)
    kp, kh = jax.random.split(key)

    emb_size_atom = 32       # D
    num_hidden = 1           # residual blocks in linear_heads
    number_atoms = 40
    num_seeds = int(number_atoms * 0.1)   # 4 neural atoms
    counts = [8, 6]          # nodes per graph (batch of 2 graphs)
    num_graphs = len(counts)
    max_nodes = max(counts)
    n_nodes = sum(counts)

    batch_seg = jnp.concatenate(
        [jnp.full((c,), i, jnp.int32) for i, c in enumerate(counts)])
    h = jax.random.normal(kh, (n_nodes, emb_size_atom), jnp.float32)

    params = init_params(kp, emb_size_atom, num_seeds, num_hidden)
    packed = pack_params(params)           # one-time packing, outside jit

    fwd = jax.jit(functools.partial(neural_atom_forward,
                                    num_graphs=num_graphs,
                                    max_nodes=max_nodes, act=True))
    out = fwd(packed, h, batch_seg)
    jax.block_until_ready(out)

    ref = reference_forward(params, h, batch_seg, num_graphs, max_nodes,
                            act=True)
    max_err = float(jnp.max(jnp.abs(out - ref)))
    assert out.shape == (n_nodes, emb_size_atom)
    assert max_err < 5e-2, f"max abs err too large: {max_err}"
    print("KERNEL_OK")
</pallas_src>

<mosaic_0001>
module attributes {stable_mosaic.version = 11 : i64} {
  func.func @_node_chain_kernel(%arg0: i32, %arg1: memref<4x128xf32, #tpu.memory_space<vmem>>, %arg2: memref<1x128x128xf32, #tpu.memory_space<vmem>>, %arg3: memref<1x128x128xf32, #tpu.memory_space<vmem>>, %arg4: memref<4x128xf32, #tpu.memory_space<vmem>>) attributes {dimension_semantics = [#tpu.dimension_semantics<parallel>], iteration_bounds = array<i64: 1>, scalar_prefetch = 0 : i64, scratch_operands = 0 : i64, tpu.core_type = #tpu.core_type<tc>, window_params = [{transform_indices = @transform_0, window_bounds = array<i64: 4, 128>}, {pipeline_mode = #tpu.pipeline_mode<synchronous>, transform_indices = @transform_1, window_bounds = array<i64: 1, 128, 128>}, {pipeline_mode = #tpu.pipeline_mode<synchronous>, transform_indices = @transform_2, window_bounds = array<i64: 1, 128, 128>}, {transform_indices = @transform_3, window_bounds = array<i64: 4, 128>}]} {
    %c0 = arith.constant 0 : index
    %c0_0 = arith.constant 0 : index
    %0 = vector.load %arg1[%c0, %c0_0] : memref<4x128xf32, #tpu.memory_space<vmem>>, vector<4x128xf32>
    %c0_1 = arith.constant 0 : index
    %c0_2 = arith.constant 0 : index
    %c0_3 = arith.constant 0 : index
    %1 = vector.load %arg2[%c0_1, %c0_2, %c0_3] : memref<1x128x128xf32, #tpu.memory_space<vmem>>, vector<1x128x128xf32>
    %2 = vector.shape_cast %1 : vector<1x128x128xf32> to vector<128x128xf32>
    %cst = arith.constant dense<0.000000e+00> : vector<4x128xf32>
    %3 = tpu.matmul %0, %2, %cst {dimension_numbers = #tpu.dot_dimension_numbers<[1], [0], [0], [1], [0, 0, 1, 1], [], []>} : vector<4x128xf32>, vector<128x128xf32>, vector<4x128xf32> -> vector<4x128xf32>
    %4 = arith.negf %3 : vector<4x128xf32>
    %5 = math.exp %4 : vector<4x128xf32>
    %cst_4 = arith.constant 1.000000e+00 : f32
    %6 = vector.broadcast %cst_4 : f32 to vector<4x128xf32>
    %7 = arith.addf %6, %5 : vector<4x128xf32>
    %8 = arith.divf %6, %7 : vector<4x128xf32>
    %9 = arith.mulf %3, %8 : vector<4x128xf32>
    %cst_5 = arith.constant 1.66666663 : f32
    %10 = vector.broadcast %cst_5 : f32 to vector<4x128xf32>
    %11 = arith.mulf %9, %10 : vector<4x128xf32>
    %c0_6 = arith.constant 0 : index
    %c0_7 = arith.constant 0 : index
    %c0_8 = arith.constant 0 : index
    %12 = vector.load %arg3[%c0_6, %c0_7, %c0_8] : memref<1x128x128xf32, #tpu.memory_space<vmem>>, vector<1x128x128xf32>
    %13 = vector.shape_cast %12 : vector<1x128x128xf32> to vector<128x128xf32>
    %cst_9 = arith.constant dense<0.000000e+00> : vector<4x128xf32>
    %14 = tpu.matmul %11, %13, %cst_9 {dimension_numbers = #tpu.dot_dimension_numbers<[1], [0], [0], [1], [0, 0, 1, 1], [], []>} : vector<4x128xf32>, vector<128x128xf32>, vector<4x128xf32> -> vector<4x128xf32>
    %15 = arith.negf %14 : vector<4x128xf32>
    %16 = math.exp %15 : vector<4x128xf32>
    %cst_10 = arith.constant 1.000000e+00 : f32
    %17 = vector.broadcast %cst_10 : f32 to vector<4x128xf32>
    %18 = arith.addf %17, %16 : vector<4x128xf32>
    %19 = arith.divf %17, %18 : vector<4x128xf32>
    %20 = arith.mulf %14, %19 : vector<4x128xf32>
    %cst_11 = arith.constant 1.66666663 : f32
    %21 = vector.broadcast %cst_11 : f32 to vector<4x128xf32>
    %22 = arith.mulf %20, %21 : vector<4x128xf32>
    %23 = arith.addf %0, %22 : vector<4x128xf32>
    %cst_12 = arith.constant 0.707106769 : f32
    %24 = vector.broadcast %cst_12 : f32 to vector<4x128xf32>
    %25 = arith.mulf %23, %24 : vector<4x128xf32>
    %c0_13 = arith.constant 0 : index
    %c0_14 = arith.constant 0 : index
    %26 = vector.load %arg4[%c0_13, %c0_14] : memref<4x128xf32, #tpu.memory_space<vmem>>, vector<4x128xf32>
    tpu.vector_store %arg4[%c0_13, %c0_14], %25 {strides = array<i32>} : memref<4x128xf32, #tpu.memory_space<vmem>>, vector<4x128xf32>,
    return
  }
  func.func @transform_0(%arg0: i32) -> (i32, i32) {
    %c0_i32 = arith.constant 0 : i32
    %c0_i32_0 = arith.constant 0 : i32
    return %arg0, %c0_i32 : i32, i32
  }
  func.func @transform_1(%arg0: i32) -> (i32, i32, i32) {
    %c0_i32 = arith.constant 0 : i32
    %c0_i32_0 = arith.constant 0 : i32
    %c0_i32_1 = arith.constant 0 : i32
    %c0_i32_2 = arith.constant 0 : i32
    return %c0_i32, %c0_i32_0, %c0_i32_1 : i32, i32, i32
  }
  func.func @transform_2(%arg0: i32) -> (i32, i32, i32) {
    %c0_i32 = arith.constant 0 : i32
    %c0_i32_0 = arith.constant 0 : i32
    %c0_i32_1 = arith.constant 0 : i32
    %c0_i32_2 = arith.constant 0 : i32
    return %c0_i32, %c0_i32_0, %c0_i32_1 : i32, i32, i32
  }
  func.func @transform_3(%arg0: i32) -> (i32, i32) {
    %c0_i32 = arith.constant 0 : i32
    %c0_i32_0 = arith.constant 0 : i32
    return %arg0, %c0_i32 : i32, i32
  }
}

module attributes {stable_mosaic.version = 11 : i64} {
  func.func @_na_kernel(%arg0: i32, %arg1: memref<1x4x32xf32, #tpu.memory_space<vmem>>, %arg2: memref<1x8x32xf32, #tpu.memory_space<vmem>>, %arg3: memref<1x1x8xf32, #tpu.memory_space<vmem>>, %arg4: memref<4x32x32xf32, #tpu.memory_space<vmem>>, %arg5: memref<8x32xf32, #tpu.memory_space<vmem>>, %arg6: memref<4x32x32xf32, #tpu.memory_space<vmem>>, %arg7: memref<8x32xf32, #tpu.memory_space<vmem>>, %arg8: memref<1x8x32xf32, #tpu.memory_space<vmem>>) attributes {dimension_semantics = [#tpu.dimension_semantics<parallel>], iteration_bounds = array<i64: 2>, scalar_prefetch = 0 : i64, scratch_operands = 0 : i64, tpu.core_type = #tpu.core_type<tc>, window_params = [{pipeline_mode = #tpu.pipeline_mode<synchronous>, transform_indices = @transform_0, window_bounds = array<i64: 1, 4, 32>}, {transform_indices = @transform_1, window_bounds = array<i64: 1, 8, 32>}, {transform_indices = @transform_2, window_bounds = array<i64: 1, 1, 8>}, {pipeline_mode = #tpu.pipeline_mode<synchronous>, transform_indices = @transform_3, window_bounds = array<i64: 4, 32, 32>}, {pipeline_mode = #tpu.pipeline_mode<synchronous>, transform_indices = @transform_4, window_bounds = array<i64: 8, 32>}, {pipeline_mode = #tpu.pipeline_mode<synchronous>, transform_indices = @transform_5, window_bounds = array<i64: 4, 32, 32>}, {pipeline_mode = #tpu.pipeline_mode<synchronous>, transform_indices = @transform_6, window_bounds = array<i64: 8, 32>}, {transform_indices = @transform_7, window_bounds = array<i64: 1, 8, 32>}]} {
    %c0 = arith.constant 0 : index
    %c0_0 = arith.constant 0 : index
    %c0_1 = arith.constant 0 : index
    %0 = vector.load %arg1[%c0, %c0_0, %c0_1] : memref<1x4x32xf32, #tpu.memory_space<vmem>>, vector<1x4x32xf32>
    %1 = vector.shape_cast %0 : vector<1x4x32xf32> to vector<4x32xf32>
    %c0_2 = arith.constant 0 : index
    %c0_3 = arith.constant 0 : index
    %c0_4 = arith.constant 0 : index
    %2 = vector.load %arg4[%c0_2, %c0_3, %c0_4] : memref<4x32x32xf32, #tpu.memory_space<vmem>>, vector<1x32x32xf32>
    %3 = vector.shape_cast %2 : vector<1x32x32xf32> to vector<32x32xf32>
    %c1 = arith.constant 1 : index
    %c0_5 = arith.constant 0 : index
    %c0_6 = arith.constant 0 : index
    %4 = vector.load %arg4[%c1, %c0_5, %c0_6] : memref<4x32x32xf32, #tpu.memory_space<vmem>>, vector<1x32x32xf32>
    %5 = vector.shape_cast %4 : vector<1x32x32xf32> to vector<32x32xf32>
    %c2 = arith.constant 2 : index
    %c0_7 = arith.constant 0 : index
    %c0_8 = arith.constant 0 : index
    %6 = vector.load %arg4[%c2, %c0_7, %c0_8] : memref<4x32x32xf32, #tpu.memory_space<vmem>>, vector<1x32x32xf32>
    %7 = vector.shape_cast %6 : vector<1x32x32xf32> to vector<32x32xf32>
    %c3 = arith.constant 3 : index
    %c0_9 = arith.constant 0 : index
    %c0_10 = arith.constant 0 : index
    %8 = vector.load %arg4[%c3, %c0_9, %c0_10] : memref<4x32x32xf32, #tpu.memory_space<vmem>>, vector<1x32x32xf32>
    %9 = vector.shape_cast %8 : vector<1x32x32xf32> to vector<32x32xf32>
    %c0_11 = arith.constant 0 : index
    %c0_12 = arith.constant 0 : index
    %10 = vector.load %arg5[%c0_11, %c0_12] : memref<8x32xf32, #tpu.memory_space<vmem>>, vector<1x32xf32>
    %c1_13 = arith.constant 1 : index
    %c0_14 = arith.constant 0 : index
    %11 = vector.load %arg5[%c1_13, %c0_14] : memref<8x32xf32, #tpu.memory_space<vmem>>, vector<1x32xf32>
    %c2_15 = arith.constant 2 : index
    %c0_16 = arith.constant 0 : index
    %12 = vector.load %arg5[%c2_15, %c0_16] : memref<8x32xf32, #tpu.memory_space<vmem>>, vector<1x32xf32>
    %c3_17 = arith.constant 3 : index
    %c0_18 = arith.constant 0 : index
    %13 = vector.load %arg5[%c3_17, %c0_18] : memref<8x32xf32, #tpu.memory_space<vmem>>, vector<1x32xf32>
    %c4 = arith.constant 4 : index
    %c0_19 = arith.constant 0 : index
    %14 = vector.load %arg5[%c4, %c0_19] : memref<8x32xf32, #tpu.memory_space<vmem>>, vector<1x32xf32>
    %c5 = arith.constant 5 : index
    %c0_20 = arith.constant 0 : index
    %15 = vector.load %arg5[%c5, %c0_20] : memref<8x32xf32, #tpu.memory_space<vmem>>, vector<1x32xf32>
    %c6 = arith.constant 6 : index
    %c0_21 = arith.constant 0 : index
    %16 = vector.load %arg5[%c6, %c0_21] : memref<8x32xf32, #tpu.memory_space<vmem>>, vector<1x32xf32>
    %c7 = arith.constant 7 : index
    %c0_22 = arith.constant 0 : index
    %17 = vector.load %arg5[%c7, %c0_22] : memref<8x32xf32, #tpu.memory_space<vmem>>, vector<1x32xf32>
    %c0_23 = arith.constant 0 : index
    %c0_24 = arith.constant 0 : index
    %c0_25 = arith.constant 0 : index
    %18 = vector.load %arg6[%c0_23, %c0_24, %c0_25] : memref<4x32x32xf32, #tpu.memory_space<vmem>>, vector<1x32x32xf32>
    %19 = vector.shape_cast %18 : vector<1x32x32xf32> to vector<32x32xf32>
    %c1_26 = arith.constant 1 : index
    %c0_27 = arith.constant 0 : index
    %c0_28 = arith.constant 0 : index
    %20 = vector.load %arg6[%c1_26, %c0_27, %c0_28] : memref<4x32x32xf32, #tpu.memory_space<vmem>>, vector<1x32x32xf32>
    %21 = vector.shape_cast %20 : vector<1x32x32xf32> to vector<32x32xf32>
    %c2_29 = arith.constant 2 : index
    %c0_30 = arith.constant 0 : index
    %c0_31 = arith.constant 0 : index
    %22 = vector.load %arg6[%c2_29, %c0_30, %c0_31] : memref<4x32x32xf32, #tpu.memory_space<vmem>>, vector<1x32x32xf32>
    %23 = vector.shape_cast %22 : vector<1x32x32xf32> to vector<32x32xf32>
    %c3_32 = arith.constant 3 : index
    %c0_33 = arith.constant 0 : index
    %c0_34 = arith.constant 0 : index
    %24 = vector.load %arg6[%c3_32, %c0_33, %c0_34] : memref<4x32x32xf32, #tpu.memory_space<vmem>>, vector<1x32x32xf32>
    %25 = vector.shape_cast %24 : vector<1x32x32xf32> to vector<32x32xf32>
    %c0_35 = arith.constant 0 : index
    %c0_36 = arith.constant 0 : index
    %26 = vector.load %arg7[%c0_35, %c0_36] : memref<8x32xf32, #tpu.memory_space<vmem>>, vector<1x32xf32>
    %c1_37 = arith.constant 1 : index
    %c0_38 = arith.constant 0 : index
    %27 = vector.load %arg7[%c1_37, %c0_38] : memref<8x32xf32, #tpu.memory_space<vmem>>, vector<1x32xf32>
    %c2_39 = arith.constant 2 : index
    %c0_40 = arith.constant 0 : index
    %28 = vector.load %arg7[%c2_39, %c0_40] : memref<8x32xf32, #tpu.memory_space<vmem>>, vector<1x32xf32>
    %c3_41 = arith.constant 3 : index
    %c0_42 = arith.constant 0 : index
    %29 = vector.load %arg7[%c3_41, %c0_42] : memref<8x32xf32, #tpu.memory_space<vmem>>, vector<1x32xf32>
    %c4_43 = arith.constant 4 : index
    %c0_44 = arith.constant 0 : index
    %30 = vector.load %arg7[%c4_43, %c0_44] : memref<8x32xf32, #tpu.memory_space<vmem>>, vector<1x32xf32>
    %c5_45 = arith.constant 5 : index
    %c0_46 = arith.constant 0 : index
    %31 = vector.load %arg7[%c5_45, %c0_46] : memref<8x32xf32, #tpu.memory_space<vmem>>, vector<1x32xf32>
    %c6_47 = arith.constant 6 : index
    %c0_48 = arith.constant 0 : index
    %32 = vector.load %arg7[%c6_47, %c0_48] : memref<8x32xf32, #tpu.memory_space<vmem>>, vector<1x32xf32>
    %c7_49 = arith.constant 7 : index
    %c0_50 = arith.constant 0 : index
    %33 = vector.load %arg7[%c7_49, %c0_50] : memref<8x32xf32, #tpu.memory_space<vmem>>, vector<1x32xf32>
    %cst = arith.constant dense<0.000000e+00> : vector<4x32xf32>
    %34 = tpu.matmul %1, %3, %cst {dimension_numbers = #tpu.dot_dimension_numbers<[1], [0], [0], [1], [0, 0, 1, 1], [], []>} : vector<4x32xf32>, vector<32x32xf32>, vector<4x32xf32> -> vector<4x32xf32>
    %35 = vector.broadcast %10 : vector<1x32xf32> to vector<4x32xf32>
    %36 = arith.addf %34, %35 : vector<4x32xf32>
    %37 = tpu.iota {dimensions = array<i32: 1>} : vector<1x32xi32>
    %c0_i32 = arith.constant 0 : i32
    %38 = vector.broadcast %c0_i32 : i32 to vector<1x32xi32>
    %39 = arith.cmpi sge, %37, %38 : vector<1x32xi32>
    %c16_i32 = arith.constant 16 : i32
    %40 = vector.broadcast %c16_i32 : i32 to vector<1x32xi32>
    %41 = arith.cmpi slt, %37, %40 : vector<1x32xi32>
    %42 = arith.andi %39, %41 : vector<1x32xi1>
    %cst_51 = arith.constant 1.000000e+00 : f32
    %cst_52 = arith.constant 0.000000e+00 : f32
    %43 = vector.broadcast %cst_51 : f32 to vector<1x32xf32>
    %44 = vector.broadcast %cst_52 : f32 to vector<1x32xf32>
    %45 = arith.select %42, %43, %44 : vector<1x32xi1>, vector<1x32xf32>
    %c16_i32_53 = arith.constant 16 : i32
    %46 = vector.broadcast %c16_i32_53 : i32 to vector<1x32xi32>
    %47 = arith.cmpi sge, %37, %46 : vector<1x32xi32>
    %c32_i32 = arith.constant 32 : i32
    %48 = vector.broadcast %c32_i32 : i32 to vector<1x32xi32>
    %49 = arith.cmpi slt, %37, %48 : vector<1x32xi32>
    %50 = arith.andi %47, %49 : vector<1x32xi1>
    %cst_54 = arith.constant 1.000000e+00 : f32
    %cst_55 = arith.constant 0.000000e+00 : f32
    %51 = vector.broadcast %cst_54 : f32 to vector<1x32xf32>
    %52 = vector.broadcast %cst_55 : f32 to vector<1x32xf32>
    %53 = arith.select %50, %51, %52 : vector<1x32xi1>, vector<1x32xf32>
    %c0_56 = arith.constant 0 : index
    %c0_57 = arith.constant 0 : index
    %c0_58 = arith.constant 0 : index
    %54 = vector.load %arg2[%c0_56, %c0_57, %c0_58] : memref<1x8x32xf32, #tpu.memory_space<vmem>>, vector<1x8x32xf32>
    %55 = vector.shape_cast %54 : vector<1x8x32xf32> to vector<8x32xf32>
    %c0_59 = arith.constant 0 : index
    %c0_60 = arith.constant 0 : index
    %c0_61 = arith.constant 0 : index
    %56 = vector.load %arg3[%c0_59, %c0_60, %c0_61] : memref<1x1x8xf32, #tpu.memory_space<vmem>>, vector<1x1x8xf32>
    %57 = vector.shape_cast %56 : vector<1x1x8xf32> to vector<1x8xf32>
    %cst_62 = arith.constant dense<0.000000e+00> : vector<8x32xf32>
    %58 = tpu.matmul %55, %5, %cst_62 {dimension_numbers = #tpu.dot_dimension_numbers<[1], [0], [0], [1], [0, 0, 1, 1], [], []>} : vector<8x32xf32>, vector<32x32xf32>, vector<8x32xf32> -> vector<8x32xf32>
    %59 = vector.broadcast %11 : vector<1x32xf32> to vector<8x32xf32>
    %60 = arith.addf %58, %59 : vector<8x32xf32>
    %cst_63 = arith.constant dense<0.000000e+00> : vector<8x32xf32>
    %61 = tpu.matmul %55, %7, %cst_63 {dimension_numbers = #tpu.dot_dimension_numbers<[1], [0], [0], [1], [0, 0, 1, 1], [], []>} : vector<8x32xf32>, vector<32x32xf32>, vector<8x32xf32> -> vector<8x32xf32>
    %62 = vector.broadcast %12 : vector<1x32xf32> to vector<8x32xf32>
    %63 = arith.addf %61, %62 : vector<8x32xf32>
    %cst_64 = arith.constant dense<0.000000e+00> : vector<4x8xf32>
    %64 = tpu.matmul %36, %60, %cst_64 {dimension_numbers = #tpu.dot_dimension_numbers<[1], [1], [0], [0], [0, 0, 1, 0], [], []>} : vector<4x32xf32>, vector<8x32xf32>, vector<4x8xf32> -> vector<4x8xf32>
    %cst_65 = arith.constant 0.176776692 : f32
    %65 = vector.broadcast %cst_65 : f32 to vector<4x8xf32>
    %66 = arith.mulf %64, %65 : vector<4x8xf32>
    %67 = vector.broadcast %57 : vector<1x8xf32> to vector<4x8xf32>
    %68 = arith.addf %66, %67 : vector<4x8xf32>
    %cst_66 = arith.constant dense<0xFF800000> : vector<8xf32>
    %69 = vector.multi_reduction <maximumf>, %68, %cst_66 [0] : vector<4x8xf32> to vector<8xf32>
    %70 = vector.shape_cast %69 : vector<8xf32> to vector<1x8xf32>
    %71 = vector.broadcast %70 : vector<1x8xf32> to vector<4x8xf32>
    %72 = arith.subf %68, %71 : vector<4x8xf32>
    %73 = math.exp %72 : vector<4x8xf32>
    %cst_67 = arith.constant dense<0.000000e+00> : vector<8xf32>
    %74 = vector.multi_reduction <add>, %73, %cst_67 [0] : vector<4x8xf32> to vector<8xf32>
    %75 = vector.shape_cast %74 : vector<8xf32> to vector<1x8xf32>
    %76 = tpu.reciprocal %75 {approx = true} : vector<1x8xf32> -> vector<1x8xf32>
    %77 = vector.broadcast %76 : vector<1x8xf32> to vector<4x8xf32>
    %78 = arith.mulf %73, %77 : vector<4x8xf32>
    %cst_68 = arith.constant dense<0.000000e+00> : vector<4x32xf32>
    %79 = tpu.matmul %78, %63, %cst_68 {dimension_numbers = #tpu.dot_dimension_numbers<[1], [0], [0], [1], [0, 0, 1, 1], [], []>} : vector<4x8xf32>, vector<8x32xf32>, vector<4x32xf32> -> vector<4x32xf32>
    %80 = arith.addf %36, %79 : vector<4x32xf32>
    %cst_69 = arith.constant dense<0.000000e+00> : vector<4xf32>
    %81 = vector.multi_reduction <add>, %80, %cst_69 [1] : vector<4x32xf32> to vector<4xf32>
    %82 = vector.shape_cast %81 : vector<4xf32> to vector<4x1xf32>
    %cst_70 = arith.constant 3.200000e+01 : f32
    %83 = vector.broadcast %cst_70 : f32 to vector<4x1xf32>
    %84 = arith.divf %82, %83 : vector<4x1xf32>
    %85 = vector.broadcast %84 : vector<4x1xf32> to vector<4x32xf32>
    %86 = arith.subf %80, %85 : vector<4x32xf32>
    %87 = arith.mulf %86, %86 : vector<4x32xf32>
    %cst_71 = arith.constant dense<0.000000e+00> : vector<4xf32>
    %88 = vector.multi_reduction <add>, %87, %cst_71 [1] : vector<4x32xf32> to vector<4xf32>
    %89 = vector.shape_cast %88 : vector<4xf32> to vector<4x1xf32>
    %cst_72 = arith.constant 3.200000e+01 : f32
    %90 = vector.broadcast %cst_72 : f32 to vector<4x1xf32>
    %91 = arith.divf %89, %90 : vector<4x1xf32>
    %92 = vector.broadcast %84 : vector<4x1xf32> to vector<4x32xf32>
    %93 = arith.subf %80, %92 : vector<4x32xf32>
    %cst_73 = arith.constant 9.99999974E-6 : f32
    %94 = vector.broadcast %cst_73 : f32 to vector<4x1xf32>
    %95 = arith.addf %91, %94 : vector<4x1xf32>
    %96 = math.rsqrt %95 : vector<4x1xf32>
    %97 = vector.broadcast %96 : vector<4x1xf32> to vector<4x32xf32>
    %98 = arith.mulf %93, %97 : vector<4x32xf32>
    %99 = vector.broadcast %14 : vector<1x32xf32> to vector<4x32xf32>
    %100 = arith.mulf %98, %99 : vector<4x32xf32>
    %101 = vector.broadcast %15 : vector<1x32xf32> to vector<4x32xf32>
    %102 = arith.addf %100, %101 : vector<4x32xf32>
    %cst_74 = arith.constant dense<0.000000e+00> : vector<4x32xf32>
    %103 = tpu.matmul %102, %9, %cst_74 {dimension_numbers = #tpu.dot_dimension_numbers<[1], [0], [0], [1], [0, 0, 1, 1], [], []>} : vector<4x32xf32>, vector<32x32xf32>, vector<4x32xf32> -> vector<4x32xf32>
    %104 = vector.broadcast %13 : vector<1x32xf32> to vector<4x32xf32>
    %105 = arith.addf %103, %104 : vector<4x32xf32>
    %cst_75 = arith.constant 0.000000e+00 : f32
    %106 = vector.broadcast %cst_75 : f32 to vector<4x32xf32>
    %107 = arith.maximumf %105, %106 : vector<4x32xf32>
    %108 = arith.addf %102, %107 : vector<4x32xf32>
    %cst_76 = arith.constant dense<0.000000e+00> : vector<4xf32>
    %109 = vector.multi_reduction <add>, %108, %cst_76 [1] : vector<4x32xf32> to vector<4xf32>
    %110 = vector.shape_cast %109 : vector<4xf32> to vector<4x1xf32>
    %cst_77 = arith.constant 3.200000e+01 : f32
    %111 = vector.broadcast %cst_77 : f32 to vector<4x1xf32>
    %112 = arith.divf %110, %111 : vector<4x1xf32>
    %113 = vector.broadcast %112 : vector<4x1xf32> to vector<4x32xf32>
    %114 = arith.subf %108, %113 : vector<4x32xf32>
    %115 = arith.mulf %114, %114 : vector<4x32xf32>
    %cst_78 = arith.constant dense<0.000000e+00> : vector<4xf32>
    %116 = vector.multi_reduction <add>, %115, %cst_78 [1] : vector<4x32xf32> to vector<4xf32>
    %117 = vector.shape_cast %116 : vector<4xf32> to vector<4x1xf32>
    %cst_79 = arith.constant 3.200000e+01 : f32
    %118 = vector.broadcast %cst_79 : f32 to vector<4x1xf32>
    %119 = arith.divf %117, %118 : vector<4x1xf32>
    %120 = vector.broadcast %112 : vector<4x1xf32> to vector<4x32xf32>
    %121 = arith.subf %108, %120 : vector<4x32xf32>
    %cst_80 = arith.constant 9.99999974E-6 : f32
    %122 = vector.broadcast %cst_80 : f32 to vector<4x1xf32>
    %123 = arith.addf %119, %122 : vector<4x1xf32>
    %124 = math.rsqrt %123 : vector<4x1xf32>
    %125 = vector.broadcast %124 : vector<4x1xf32> to vector<4x32xf32>
    %126 = arith.mulf %121, %125 : vector<4x32xf32>
    %127 = vector.broadcast %16 : vector<1x32xf32> to vector<4x32xf32>
    %128 = arith.mulf %126, %127 : vector<4x32xf32>
    %129 = vector.broadcast %17 : vector<1x32xf32> to vector<4x32xf32>
    %130 = arith.addf %128, %129 : vector<4x32xf32>
    %cst_81 = arith.constant dense<0.000000e+00> : vector<4x32xf32>
    %131 = tpu.matmul %130, %19, %cst_81 {dimension_numbers = #tpu.dot_dimension_numbers<[1], [0], [0], [1], [0, 0, 1, 1], [], []>} : vector<4x32xf32>, vector<32x32xf32>, vector<4x32xf32> -> vector<4x32xf32>
    %132 = vector.broadcast %26 : vector<1x32xf32> to vector<4x32xf32>
    %133 = arith.addf %131, %132 : vector<4x32xf32>
    %cst_82 = arith.constant dense<0.000000e+00> : vector<4x32xf32>
    %134 = tpu.matmul %130, %21, %cst_82 {dimension_numbers = #tpu.dot_dimension_numbers<[1], [0], [0], [1], [0, 0, 1, 1], [], []>} : vector<4x32xf32>, vector<32x32xf32>, vector<4x32xf32> -> vector<4x32xf32>
    %135 = vector.broadcast %27 : vector<1x32xf32> to vector<4x32xf32>
    %136 = arith.addf %134, %135 : vector<4x32xf32>
    %cst_83 = arith.constant dense<0.000000e+00> : vector<4x32xf32>
    %137 = tpu.matmul %130, %23, %cst_83 {dimension_numbers = #tpu.dot_dimension_numbers<[1], [0], [0], [1], [0, 0, 1, 1], [], []>} : vector<4x32xf32>, vector<32x32xf32>, vector<4x32xf32> -> vector<4x32xf32>
    %138 = vector.broadcast %28 : vector<1x32xf32> to vector<4x32xf32>
    %139 = arith.addf %137, %138 : vector<4x32xf32>
    %140 = vector.broadcast %45 : vector<1x32xf32> to vector<4x32xf32>
    %141 = arith.mulf %133, %140 : vector<4x32xf32>
    %cst_84 = arith.constant dense<0.000000e+00> : vector<4x4xf32>
    %142 = tpu.matmul %141, %136, %cst_84 {dimension_numbers = #tpu.dot_dimension_numbers<[1], [1], [0], [0], [0, 0, 1, 0], [], []>} : vector<4x32xf32>, vector<4x32xf32>, vector<4x4xf32> -> vector<4x4xf32>
    %cst_85 = arith.constant 0.176776692 : f32
    %143 = vector.broadcast %cst_85 : f32 to vector<4x4xf32>
    %144 = arith.mulf %142, %143 : vector<4x4xf32>
    %cst_86 = arith.constant dense<0xFF800000> : vector<4xf32>
    %145 = vector.multi_reduction <maximumf>, %144, %cst_86 [0] : vector<4x4xf32> to vector<4xf32>
    %146 = vector.shape_cast %145 : vector<4xf32> to vector<1x4xf32>
    %147 = vector.broadcast %146 : vector<1x4xf32> to vector<4x4xf32>
    %148 = arith.subf %144, %147 : vector<4x4xf32>
    %149 = math.exp %148 : vector<4x4xf32>
    %cst_87 = arith.constant dense<0.000000e+00> : vector<4xf32>
    %150 = vector.multi_reduction <add>, %149, %cst_87 [0] : vector<4x4xf32> to vector<4xf32>
    %151 = vector.shape_cast %150 : vector<4xf32> to vector<1x4xf32>
    %152 = tpu.reciprocal %151 {approx = true} : vector<1x4xf32> -> vector<1x4xf32>
    %153 = vector.broadcast %152 : vector<1x4xf32> to vector<4x4xf32>
    %154 = arith.mulf %149, %153 : vector<4x4xf32>
    %155 = vector.broadcast %45 : vector<1x32xf32> to vector<4x32xf32>
    %156 = arith.mulf %139, %155 : vector<4x32xf32>
    %cst_88 = arith.constant dense<0.000000e+00> : vector<4x32xf32>
    %157 = tpu.matmul %154, %156, %cst_88 {dimension_numbers = #tpu.dot_dimension_numbers<[1], [0], [0], [1], [0, 0, 1, 1], [], []>} : vector<4x4xf32>, vector<4x32xf32>, vector<4x32xf32> -> vector<4x32xf32>
    %158 = arith.addf %133, %157 : vector<4x32xf32>
    %159 = vector.broadcast %53 : vector<1x32xf32> to vector<4x32xf32>
    %160 = arith.mulf %133, %159 : vector<4x32xf32>
    %cst_89 = arith.constant dense<0.000000e+00> : vector<4x4xf32>
    %161 = tpu.matmul %160, %136, %cst_89 {dimension_numbers = #tpu.dot_dimension_numbers<[1], [1], [0], [0], [0, 0, 1, 0], [], []>} : vector<4x32xf32>, vector<4x32xf32>, vector<4x4xf32> -> vector<4x4xf32>
    %cst_90 = arith.constant 0.176776692 : f32
    %162 = vector.broadcast %cst_90 : f32 to vector<4x4xf32>
    %163 = arith.mulf %161, %162 : vector<4x4xf32>
    %cst_91 = arith.constant dense<0xFF800000> : vector<4xf32>
    %164 = vector.multi_reduction <maximumf>, %163, %cst_91 [0] : vector<4x4xf32> to vector<4xf32>
    %165 = vector.shape_cast %164 : vector<4xf32> to vector<1x4xf32>
    %166 = vector.broadcast %165 : vector<1x4xf32> to vector<4x4xf32>
    %167 = arith.subf %163, %166 : vector<4x4xf32>
    %168 = math.exp %167 : vector<4x4xf32>
    %cst_92 = arith.constant dense<0.000000e+00> : vector<4xf32>
    %169 = vector.multi_reduction <add>, %168, %cst_92 [0] : vector<4x4xf32> to vector<4xf32>
    %170 = vector.shape_cast %169 : vector<4xf32> to vector<1x4xf32>
    %171 = tpu.reciprocal %170 {approx = true} : vector<1x4xf32> -> vector<1x4xf32>
    %172 = vector.broadcast %171 : vector<1x4xf32> to vector<4x4xf32>
    %173 = arith.mulf %168, %172 : vector<4x4xf32>
    %174 = vector.broadcast %53 : vector<1x32xf32> to vector<4x32xf32>
    %175 = arith.mulf %139, %174 : vector<4x32xf32>
    %cst_93 = arith.constant dense<0.000000e+00> : vector<4x32xf32>
    %176 = tpu.matmul %173, %175, %cst_93 {dimension_numbers = #tpu.dot_dimension_numbers<[1], [0], [0], [1], [0, 0, 1, 1], [], []>} : vector<4x4xf32>, vector<4x32xf32>, vector<4x32xf32> -> vector<4x32xf32>
    %177 = arith.addf %158, %176 : vector<4x32xf32>
    %cst_94 = arith.constant dense<0.000000e+00> : vector<4xf32>
    %178 = vector.multi_reduction <add>, %177, %cst_94 [1] : vector<4x32xf32> to vector<4xf32>
    %179 = vector.shape_cast %178 : vector<4xf32> to vector<4x1xf32>
    %cst_95 = arith.constant 3.200000e+01 : f32
    %180 = vector.broadcast %cst_95 : f32 to vector<4x1xf32>
    %181 = arith.divf %179, %180 : vector<4x1xf32>
    %182 = vector.broadcast %181 : vector<4x1xf32> to vector<4x32xf32>
    %183 = arith.subf %177, %182 : vector<4x32xf32>
    %184 = arith.mulf %183, %183 : vector<4x32xf32>
    %cst_96 = arith.constant dense<0.000000e+00> : vector<4xf32>
    %185 = vector.multi_reduction <add>, %184, %cst_96 [1] : vector<4x32xf32> to vector<4xf32>
    %186 = vector.shape_cast %185 : vector<4xf32> to vector<4x1xf32>
    %cst_97 = arith.constant 3.200000e+01 : f32
    %187 = vector.broadcast %cst_97 : f32 to vector<4x1xf32>
    %188 = arith.divf %186, %187 : vector<4x1xf32>
    %189 = vector.broadcast %181 : vector<4x1xf32> to vector<4x32xf32>
    %190 = arith.subf %177, %189 : vector<4x32xf32>
    %cst_98 = arith.constant 9.99999974E-6 : f32
    %191 = vector.broadcast %cst_98 : f32 to vector<4x1xf32>
    %192 = arith.addf %188, %191 : vector<4x1xf32>
    %193 = math.rsqrt %192 : vector<4x1xf32>
    %194 = vector.broadcast %193 : vector<4x1xf32> to vector<4x32xf32>
    %195 = arith.mulf %190, %194 : vector<4x32xf32>
    %196 = vector.broadcast %30 : vector<1x32xf32> to vector<4x32xf32>
    %197 = arith.mulf %195, %196 : vector<4x32xf32>
    %198 = vector.broadcast %31 : vector<1x32xf32> to vector<4x32xf32>
    %199 = arith.addf %197, %198 : vector<4x32xf32>
    %cst_99 = arith.constant dense<0.000000e+00> : vector<4x32xf32>
    %200 = tpu.matmul %199, %25, %cst_99 {dimension_numbers = #tpu.dot_dimension_numbers<[1], [0], [0], [1], [0, 0, 1, 1], [], []>} : vector<4x32xf32>, vector<32x32xf32>, vector<4x32xf32> -> vector<4x32xf32>
    %201 = vector.broadcast %29 : vector<1x32xf32> to vector<4x32xf32>
    %202 = arith.addf %200, %201 : vector<4x32xf32>
    %cst_100 = arith.constant 0.000000e+00 : f32
    %203 = vector.broadcast %cst_100 : f32 to vector<4x32xf32>
    %204 = arith.maximumf %202, %203 : vector<4x32xf32>
    %205 = arith.addf %199, %204 : vector<4x32xf32>
    %cst_101 = arith.constant dense<0.000000e+00> : vector<4xf32>
    %206 = vector.multi_reduction <add>, %205, %cst_101 [1] : vector<4x32xf32> to vector<4xf32>
    %207 = vector.shape_cast %206 : vector<4xf32> to vector<4x1xf32>
    %cst_102 = arith.constant 3.200000e+01 : f32
    %208 = vector.broadcast %cst_102 : f32 to vector<4x1xf32>
    %209 = arith.divf %207, %208 : vector<4x1xf32>
    %210 = vector.broadcast %209 : vector<4x1xf32> to vector<4x32xf32>
    %211 = arith.subf %205, %210 : vector<4x32xf32>
    %212 = arith.mulf %211, %211 : vector<4x32xf32>
    %cst_103 = arith.constant dense<0.000000e+00> : vector<4xf32>
    %213 = vector.multi_reduction <add>, %212, %cst_103 [1] : vector<4x32xf32> to vector<4xf32>
    %214 = vector.shape_cast %213 : vector<4xf32> to vector<4x1xf32>
    %cst_104 = arith.constant 3.200000e+01 : f32
    %215 = vector.broadcast %cst_104 : f32 to vector<4x1xf32>
    %216 = arith.divf %214, %215 : vector<4x1xf32>
    %217 = vector.broadcast %209 : vector<4x1xf32> to vector<4x32xf32>
    %218 = arith.subf %205, %217 : vector<4x32xf32>
    %cst_105 = arith.constant 9.99999974E-6 : f32
    %219 = vector.broadcast %cst_105 : f32 to vector<4x1xf32>
    %220 = arith.addf %216, %219 : vector<4x1xf32>
    %221 = math.rsqrt %220 : vector<4x1xf32>
    %222 = vector.broadcast %221 : vector<4x1xf32> to vector<4x32xf32>
    %223 = arith.mulf %218, %222 : vector<4x32xf32>
    %224 = vector.broadcast %32 : vector<1x32xf32> to vector<4x32xf32>
    %225 = arith.mulf %223, %224 : vector<4x32xf32>
    %226 = vector.broadcast %33 : vector<1x32xf32> to vector<4x32xf32>
    %227 = arith.addf %225, %226 : vector<4x32xf32>
    %cst_106 = arith.constant dense<0.000000e+00> : vector<8x32xf32>
    %228 = tpu.matmul %78, %227, %cst_106 {dimension_numbers = #tpu.dot_dimension_numbers<[0], [0], [1], [1], [0, 1, 1, 1], [], []>} : vector<4x8xf32>, vector<4x32xf32>, vector<8x32xf32> -> vector<8x32xf32>
    %c0_107 = arith.constant 0 : index
    %c0_108 = arith.constant 0 : index
    %c0_109 = arith.constant 0 : index
    %229 = vector.load %arg8[%c0_107, %c0_108, %c0_109] : memref<1x8x32xf32, #tpu.memory_space<vmem>>, vector<1x8x32xf32>
    %230 = vector.shape_cast %229 : vector<1x8x32xf32> to vector<8x32xf32>
    %231 = vector.shape_cast %228 : vector<8x32xf32> to vector<1x8x32xf32>
    tpu.vector_store %arg8[%c0_107, %c0_108, %c0_109], %231 {strides = array<i32>} : memref<1x8x32xf32, #tpu.memory_space<vmem>>, vector<1x8x32xf32>,
    return
  }
  func.func @transform_0(%arg0: i32) -> (i32, i32, i32) {
    %c0_i32 = arith.constant 0 : i32
    %c0_i32_0 = arith.constant 0 : i32
    %c0_i32_1 = arith.constant 0 : i32
    %c0_i32_2 = arith.constant 0 : i32
    return %c0_i32, %c0_i32_0, %c0_i32_1 : i32, i32, i32
  }
  func.func @transform_1(%arg0: i32) -> (i32, i32, i32) {
    %c0_i32 = arith.constant 0 : i32
    %c0_i32_0 = arith.constant 0 : i32
    %c0_i32_1 = arith.constant 0 : i32
    return %arg0, %c0_i32, %c0_i32_0 : i32, i32, i32
  }
  func.func @transform_2(%arg0: i32) -> (i32, i32, i32) {
    %c0_i32 = arith.constant 0 : i32
    %c0_i32_0 = arith.constant 0 : i32
    %c0_i32_1 = arith.constant 0 : i32
    return %arg0, %c0_i32, %c0_i32_0 : i32, i32, i32
  }
  func.func @transform_3(%arg0: i32) -> (i32, i32, i32) {
    %c0_i32 = arith.constant 0 : i32
    %c0_i32_0 = arith.constant 0 : i32
    %c0_i32_1 = arith.constant 0 : i32
    %c0_i32_2 = arith.constant 0 : i32
    return %c0_i32, %c0_i32_0, %c0_i32_1 : i32, i32, i32
  }
  func.func @transform_4(%arg0: i32) -> (i32, i32) {
    %c0_i32 = arith.constant 0 : i32
    %c0_i32_0 = arith.constant 0 : i32
    %c0_i32_1 = arith.constant 0 : i32
    return %c0_i32, %c0_i32_0 : i32, i32
  }
  func.func @transform_5(%arg0: i32) -> (i32, i32, i32) {
    %c0_i32 = arith.constant 0 : i32
    %c0_i32_0 = arith.constant 0 : i32
    %c0_i32_1 = arith.constant 0 : i32
    %c0_i32_2 = arith.constant 0 : i32
    return %c0_i32, %c0_i32_0, %c0_i32_1 : i32, i32, i32
  }
  func.func @transform_6(%arg0: i32) -> (i32, i32) {
    %c0_i32 = arith.constant 0 : i32
    %c0_i32_0 = arith.constant 0 : i32
    %c0_i32_1 = arith.constant 0 : i32
    return %c0_i32, %c0_i32_0 : i32, i32
  }
  func.func @transform_7(%arg0: i32) -> (i32, i32, i32) {
    %c0_i32 = arith.constant 0 : i32
    %c0_i32_0 = arith.constant 0 : i32
    %c0_i32_1 = arith.constant 0 : i32
    return %arg0, %c0_i32, %c0_i32_0 : i32, i32, i32
  }
}

module attributes {stable_mosaic.version = 11 : i64} {
  func.func @_node_chain_kernel(%arg0: i32, %arg1: memref<4x128xf32, #tpu.memory_space<vmem>>, %arg2: memref<128x128xf32, #tpu.memory_space<vmem>>, %arg3: memref<1x128x128xf32, #tpu.memory_space<vmem>>, %arg4: memref<1x128x128xf32, #tpu.memory_space<vmem>>, %arg5: memref<4x128xf32, #tpu.memory_space<vmem>>) attributes {dimension_semantics = [#tpu.dimension_semantics<parallel>], iteration_bounds = array<i64: 1>, scalar_prefetch = 0 : i64, scratch_operands = 0 : i64, tpu.core_type = #tpu.core_type<tc>, window_params = [{transform_indices = @transform_0, window_bounds = array<i64: 4, 128>}, {pipeline_mode = #tpu.pipeline_mode<synchronous>, transform_indices = @transform_1, window_bounds = array<i64: 128, 128>}, {pipeline_mode = #tpu.pipeline_mode<synchronous>, transform_indices = @transform_2, window_bounds = array<i64: 1, 128, 128>}, {pipeline_mode = #tpu.pipeline_mode<synchronous>, transform_indices = @transform_3, window_bounds = array<i64: 1, 128, 128>}, {transform_indices = @transform_4, window_bounds = array<i64: 4, 128>}]} {
    %c0 = arith.constant 0 : index
    %c0_0 = arith.constant 0 : index
    %0 = vector.load %arg1[%c0, %c0_0] : memref<4x128xf32, #tpu.memory_space<vmem>>, vector<4x128xf32>
    %c0_1 = arith.constant 0 : index
    %c0_2 = arith.constant 0 : index
    %1 = vector.load %arg2[%c0_1, %c0_2] : memref<128x128xf32, #tpu.memory_space<vmem>>, vector<128x128xf32>
    %cst = arith.constant dense<0.000000e+00> : vector<4x128xf32>
    %2 = tpu.matmul %0, %1, %cst {dimension_numbers = #tpu.dot_dimension_numbers<[1], [0], [0], [1], [0, 0, 1, 1], [], []>} : vector<4x128xf32>, vector<128x128xf32>, vector<4x128xf32> -> vector<4x128xf32>
    %3 = arith.negf %2 : vector<4x128xf32>
    %4 = math.exp %3 : vector<4x128xf32>
    %cst_3 = arith.constant 1.000000e+00 : f32
    %5 = vector.broadcast %cst_3 : f32 to vector<4x128xf32>
    %6 = arith.addf %5, %4 : vector<4x128xf32>
    %7 = arith.divf %5, %6 : vector<4x128xf32>
    %8 = arith.mulf %2, %7 : vector<4x128xf32>
    %cst_4 = arith.constant 1.66666663 : f32
    %9 = vector.broadcast %cst_4 : f32 to vector<4x128xf32>
    %10 = arith.mulf %8, %9 : vector<4x128xf32>
    %c0_5 = arith.constant 0 : index
    %c0_6 = arith.constant 0 : index
    %c0_7 = arith.constant 0 : index
    %11 = vector.load %arg3[%c0_5, %c0_6, %c0_7] : memref<1x128x128xf32, #tpu.memory_space<vmem>>, vector<1x128x128xf32>
    %12 = vector.shape_cast %11 : vector<1x128x128xf32> to vector<128x128xf32>
    %cst_8 = arith.constant dense<0.000000e+00> : vector<4x128xf32>
    %13 = tpu.matmul %10, %12, %cst_8 {dimension_numbers = #tpu.dot_dimension_numbers<[1], [0], [0], [1], [0, 0, 1, 1], [], []>} : vector<4x128xf32>, vector<128x128xf32>, vector<4x128xf32> -> vector<4x128xf32>
    %14 = arith.negf %13 : vector<4x128xf32>
    %15 = math.exp %14 : vector<4x128xf32>
    %cst_9 = arith.constant 1.000000e+00 : f32
    %16 = vector.broadcast %cst_9 : f32 to vector<4x128xf32>
    %17 = arith.addf %16, %15 : vector<4x128xf32>
    %18 = arith.divf %16, %17 : vector<4x128xf32>
    %19 = arith.mulf %13, %18 : vector<4x128xf32>
    %cst_10 = arith.constant 1.66666663 : f32
    %20 = vector.broadcast %cst_10 : f32 to vector<4x128xf32>
    %21 = arith.mulf %19, %20 : vector<4x128xf32>
    %c0_11 = arith.constant 0 : index
    %c0_12 = arith.constant 0 : index
    %c0_13 = arith.constant 0 : index
    %22 = vector.load %arg4[%c0_11, %c0_12, %c0_13] : memref<1x128x128xf32, #tpu.memory_space<vmem>>, vector<1x128x128xf32>
    %23 = vector.shape_cast %22 : vector<1x128x128xf32> to vector<128x128xf32>
    %cst_14 = arith.constant dense<0.000000e+00> : vector<4x128xf32>
    %24 = tpu.matmul %21, %23, %cst_14 {dimension_numbers = #tpu.dot_dimension_numbers<[1], [0], [0], [1], [0, 0, 1, 1], [], []>} : vector<4x128xf32>, vector<128x128xf32>, vector<4x128xf32> -> vector<4x128xf32>
    %25 = arith.negf %24 : vector<4x128xf32>
    %26 = math.exp %25 : vector<4x128xf32>
    %cst_15 = arith.constant 1.000000e+00 : f32
    %27 = vector.broadcast %cst_15 : f32 to vector<4x128xf32>
    %28 = arith.addf %27, %26 : vector<4x128xf32>
    %29 = arith.divf %27, %28 : vector<4x128xf32>
    %30 = arith.mulf %24, %29 : vector<4x128xf32>
    %cst_16 = arith.constant 1.66666663 : f32
    %31 = vector.broadcast %cst_16 : f32 to vector<4x128xf32>
    %32 = arith.mulf %30, %31 : vector<4x128xf32>
    %33 = arith.addf %10, %32 : vector<4x128xf32>
    %cst_17 = arith.constant 0.707106769 : f32
    %34 = vector.broadcast %cst_17 : f32 to vector<4x128xf32>
    %35 = arith.mulf %33, %34 : vector<4x128xf32>
    %c0_18 = arith.constant 0 : index
    %c0_19 = arith.constant 0 : index
    %36 = vector.load %arg5[%c0_18, %c0_19] : memref<4x128xf32, #tpu.memory_space<vmem>>, vector<4x128xf32>
    tpu.vector_store %arg5[%c0_18, %c0_19], %35 {strides = array<i32>} : memref<4x128xf32, #tpu.memory_space<vmem>>, vector<4x128xf32>,
    return
  }
  func.func @transform_0(%arg0: i32) -> (i32, i32) {
    %c0_i32 = arith.constant 0 : i32
    %c0_i32_0 = arith.constant 0 : i32
    return %arg0, %c0_i32 : i32, i32
  }
  func.func @transform_1(%arg0: i32) -> (i32, i32) {
    %c0_i32 = arith.constant 0 : i32
    %c0_i32_0 = arith.constant 0 : i32
    %c0_i32_1 = arith.constant 0 : i32
    return %c0_i32, %c0_i32_0 : i32, i32
  }
  func.func @transform_2(%arg0: i32) -> (i32, i32, i32) {
    %c0_i32 = arith.constant 0 : i32
    %c0_i32_0 = arith.constant 0 : i32
    %c0_i32_1 = arith.constant 0 : i32
    %c0_i32_2 = arith.constant 0 : i32
    return %c0_i32, %c0_i32_0, %c0_i32_1 : i32, i32, i32
  }
  func.func @transform_3(%arg0: i32) -> (i32, i32, i32) {
    %c0_i32 = arith.constant 0 : i32
    %c0_i32_0 = arith.constant 0 : i32
    %c0_i32_1 = arith.constant 0 : i32
    %c0_i32_2 = arith.constant 0 : i32
    return %c0_i32, %c0_i32_0, %c0_i32_1 : i32, i32, i32
  }
  func.func @transform_4(%arg0: i32) -> (i32, i32) {
    %c0_i32 = arith.constant 0 : i32
    %c0_i32_0 = arith.constant 0 : i32
    return %arg0, %c0_i32 : i32, i32
  }
}

</mosaic_0001>

<llo_original>
// kernel: neural_atom_forward.3
$region0: #{neural_atom_forward.3}
  #allocation0 [shape = 'u32[]', space=smem, size = 0x4, offset = 0x4, fixed_abs, tag = 'smem constant byte address 0x4 - core index']
  #allocation1 [shape = 'u32[144,128]{1,0:T(1,128)}', space=vmem, size = 0x12000, scoped, tag = 'internal scratch']
  %s0 = inlined_call_operand.vmem [shape: f32[4,128], index: 0, kind: input, shape index: {}]
  %s1 = inlined_call_operand.hbm [shape: f32[1,128,128], index: 1, kind: input, shape index: {}]
  %s2 = inlined_call_operand.hbm [shape: f32[1,128,128], index: 2, kind: input, shape index: {}]
  %s3 = inlined_call_operand.vmem [shape: f32[4,128], index: 3, kind: output, shape index: {}]
  %s4 = sld [smem:[#allocation0]]
  $region30: #{neural_atom_forward.3} parent=0
    _
  %s6 = ssub.s32 1, %s4
  %s7 = scalar_select 0, %s6, %s4
  $region1: #{neural_atom_forward.3} parent=0
    #allocation2 [shape = 'u8[65536]{0}', space=vmem, size = 0x10000, scoped, tag = 'input window, operand 1, single buffered']
    #allocation3 [shape = 's32[1]{0}', space=sflag, size = 0x4, scoped, tag = 'scoped memory for neural_atom_forward.3']
    #allocation4 [shape = 'u8[65536]{0}', space=vmem, size = 0x10000, scoped, tag = 'input window, operand 2, single buffered']
    #allocation5 [shape = 's32[1]{0}', space=sflag, size = 0x4, scoped, tag = 'scoped memory for neural_atom_forward.3']
    %8 = vsyncpa [#allocation3], 0
    %9 = vsyncpa [#allocation5], 0
    // Predicated region
    $region2: #{neural_atom_forward.3} parent=1 // pred_check
      _
    $region3: #{neural_atom_forward.3} parent=1 // pred_check_branch
      %11 = sbr.rel (0) target = $region5
    $region4: #{neural_atom_forward.3} parent=1 // pred_region
      _
    $region5: #{neural_atom_forward.3} parent=1 // pred_fallthru
      _
    // Predicated region
    $region6: #{neural_atom_forward.3} parent=1 // pred_check
      _
    $region7: #{neural_atom_forward.3} parent=1 // pred_check_branch
      %13 = sbr.rel (0) target = $region9
    $region8: #{neural_atom_forward.3} parent=1 // pred_region
      %s15 = ssub.s32 2048, 2048
      %16 = vsyncadd [#allocation3], %s15
      %s17 = sshll.u32 [#allocation2], 4
      %s18 = int_to_ptr.vmem [resolvable:$true] %s17
      %23 = dma.hbm_to_vmem [thread:$0]  %s1, 2048, %s18, [#allocation3], 128, 128, 8
    $region9: #{neural_atom_forward.3} parent=1 // pred_fallthru
      _
    // Predicated region
    $region10: #{neural_atom_forward.3} parent=1 // pred_check
      _
    $region11: #{neural_atom_forward.3} parent=1 // pred_check_branch
      %25 = sbr.rel (0) target = $region13
    $region12: #{neural_atom_forward.3} parent=1 // pred_region
      %s27 = ssub.s32 2048, 2048
      %28 = vsyncadd [#allocation5], %s27
      %s29 = sshll.u32 [#allocation4], 4
      %s30 = int_to_ptr.vmem [resolvable:$true] %s29
      %35 = dma.hbm_to_vmem [thread:$0]  %s2, 2048, %s30, [#allocation5], 128, 128, 8
    $region13: #{neural_atom_forward.3} parent=1 // pred_fallthru
      _
    // Predicated region
    $region14: #{neural_atom_forward.3} parent=1 // pred_check
      _
    $region15: #{neural_atom_forward.3} parent=1 // pred_check_branch
      %37 = sbr.rel (0) target = $region17
    $region16: #{neural_atom_forward.3} parent=1 // pred_region
      %38 = dma.done [#allocation3], 2048
    $region17: #{neural_atom_forward.3} parent=1 // pred_fallthru
      _
    // Predicated region
    $region18: #{neural_atom_forward.3} parent=1 // pred_check
      _
    $region19: #{neural_atom_forward.3} parent=1 // pred_check_branch
      %40 = sbr.rel (0) target = $region21
    $region20: #{neural_atom_forward.3} parent=1 // pred_region
      %41 = dma.done [#allocation5], 2048
    $region21: #{neural_atom_forward.3} parent=1 // pred_fallthru
      _
    %v42 = vld [vmem:[%s0] sm:$0xf]
    %v43 = vld [vmem:[#allocation2] sm:$0xff]
    %v44 = vld [vmem:[#allocation2 + $0x8] sm:$0xff]
    %v45 = vld [vmem:[#allocation2 + $0x10] sm:$0xff]
    %v46 = vld [vmem:[#allocation2 + $0x18] sm:$0xff]
    %v47 = vld [vmem:[#allocation2 + $0x20] sm:$0xff]
    %v48 = vld [vmem:[#allocation2 + $0x28] sm:$0xff]
    %v49 = vld [vmem:[#allocation2 + $0x30] sm:$0xff]
    %v50 = vld [vmem:[#allocation2 + $0x38] sm:$0xff]
    %v51 = vld [vmem:[#allocation2 + $0x40] sm:$0xff]
    %v52 = vld [vmem:[#allocation2 + $0x48] sm:$0xff]
    %v53 = vld [vmem:[#allocation2 + $0x50] sm:$0xff]
    %v54 = vld [vmem:[#allocation2 + $0x58] sm:$0xff]
    %v55 = vld [vmem:[#allocation2 + $0x60] sm:$0xff]
    %v56 = vld [vmem:[#allocation2 + $0x68] sm:$0xff]
    %v57 = vld [vmem:[#allocation2 + $0x70] sm:$0xff]
    %v58 = vld [vmem:[#allocation2 + $0x78] sm:$0xff]
    %59 = vmatprep.subr.mxu0 0.0
    %60 = vmatpush1.msra.mxu0 %v43
    %61 = vmatprep.subr.mxu0 0.0
    %62 = vmatpush1.msra.mxu0 %v44
    %63 = vmatprep.subr.mxu0 0.0
    %64 = vmatpush1.msra.mxu0 %v45
    %65 = vmatprep.subr.mxu0 0.0
    %66 = vmatpush1.msra.mxu0 %v46
    %67 = vmatprep.subr.mxu0 0.0
    %68 = vmatpush1.msra.mxu0 %v47
    %69 = vmatprep.subr.mxu0 0.0
    %70 = vmatpush1.msra.mxu0 %v48
    %71 = vmatprep.subr.mxu0 0.0
    %72 = vmatpush1.msra.mxu0 %v49
    %73 = vmatprep.subr.mxu0 0.0
    %74 = vmatpush1.msra.mxu0 %v50
    %75 = vmatprep.subr.mxu0 0.0
    %76 = vmatpush1.msra.mxu0 %v51
    %77 = vmatprep.subr.mxu0 0.0
    %78 = vmatpush1.msra.mxu0 %v52
    %79 = vmatprep.subr.mxu0 0.0
    %80 = vmatpush1.msra.mxu0 %v53
    %81 = vmatprep.subr.mxu0 0.0
    %82 = vmatpush1.msra.mxu0 %v54
    %83 = vmatprep.subr.mxu0 0.0
    %84 = vmatpush1.msra.mxu0 %v55
    %85 = vmatprep.subr.mxu0 0.0
    %86 = vmatpush1.msra.mxu0 %v56
    %87 = vmatprep.subr.mxu0 0.0
    %88 = vmatpush1.msra.mxu0 %v57
    %89 = vmatprep.subr.mxu0 0.0
    %90 = vmatpush1.msra.mxu0 %v58
    %91 = vmatprep.subr.mxu0 0.0
    %92 = vmatpush1.msra.mxu0 0.0
    %93 = vmatprep.subr.mxu0 0.0
    %94 = vmatpush1.msra.mxu0 0.0
    %95 = vmatprep.subr.mxu0 0.0
    %96 = vmatpush1.msra.mxu0 0.0
    %97 = vmatprep.subr.mxu0 0.0
    %98 = vmatpush1.msra.mxu0 0.0
    %99 = vmatprep.subr.mxu0 0.0
    %100 = vmatpush1.msra.mxu0 0.0
    %101 = vmatprep.subr.mxu0 0.0
    %102 = vmatpush1.msra.mxu0 0.0
    %103 = vmatprep.subr.mxu0 0.0
    %104 = vmatpush1.msra.mxu0 0.0
    %105 = vmatprep.subr.mxu0 0.0
    %106 = vmatpush1.msra.mxu0 0.0
    %107 = vmatprep.subr.mxu0 0.0
    %108 = vmatpush1.msra.mxu0 0.0
    %109 = vmatprep.subr.mxu0 0.0
    %110 = vmatpush1.msra.mxu0 0.0
    %111 = vmatprep.subr.mxu0 0.0
    %112 = vmatpush1.msra.mxu0 0.0
    %113 = vmatprep.subr.mxu0 0.0
    %114 = vmatpush1.msra.mxu0 0.0
    %115 = vmatprep.subr.mxu0 0.0
    %116 = vmatpush1.msra.mxu0 0.0
    %117 = vmatprep.subr.mxu0 0.0
    %118 = vmatpush1.msra.mxu0 0.0
    %119 = vmatprep.subr.mxu0 0.0
    %120 = vmatpush1.msra.mxu0 0.0
    %121 = vmatprep.subr.mxu0 0.0
    %122 = vmatpush1.msra.mxu0 0.0
    %123 = vmatprep.mubr.f32.mxu0 0.0
    %124 = vmatmul.mubr.f32.gmra.mrb[0].mxu0 %v42
    %v125 = vpop.f32.mrb[0].mxu0
    %v126 = vadd.f32 0.0, %v125
    %v127 = vpop.f32.mrb[0].mxu0
    %128 = vdwg.mxu0
    %v129 = vxor.u32 %v126, 2147483648
    %v130 = vmul.f32 %v129, 1.442695
    %v131 = vpow.pop %v130
    %v132 = vadd.f32 %v131, 1.0
    %v133 = vrcp.pop %v132
    %v134 = vmul.f32 1.0, %v133
    %v135 = vmul.f32 %v126, %v134
    %v136 = vmul.f32 %v135, 1.6666666
    %v137 = vld [vmem:[#allocation4] sm:$0xff]
    %v138 = vld [vmem:[#allocation4 + $0x8] sm:$0xff]
    %v139 = vld [vmem:[#allocation4 + $0x10] sm:$0xff]
    %v140 = vld [vmem:[#allocation4 + $0x18] sm:$0xff]
    %v141 = vld [vmem:[#allocation4 + $0x20] sm:$0xff]
    %v142 = vld [vmem:[#allocation4 + $0x28] sm:$0xff]
    %v143 = vld [vmem:[#allocation4 + $0x30] sm:$0xff]
    %v144 = vld [vmem:[#allocation4 + $0x38] sm:$0xff]
    %v145 = vld [vmem:[#allocation4 + $0x40] sm:$0xff]
    %v146 = vld [vmem:[#allocation4 + $0x48] sm:$0xff]
    %v147 = vld [vmem:[#allocation4 + $0x50] sm:$0xff]
    %v148 = vld [vmem:[#allocation4 + $0x58] sm:$0xff]
    %v149 = vld [vmem:[#allocation4 + $0x60] sm:$0xff]
    %v150 = vld [vmem:[#allocation4 + $0x68] sm:$0xff]
    %v151 = vld [vmem:[#allocation4 + $0x70] sm:$0xff]
    %v152 = vld [vmem:[#allocation4 + $0x78] sm:$0xff]
    %153 = vmatprep.subr.mxu0 0.0
    %154 = vmatpush1.msra.mxu0 %v137
    %155 = vmatprep.subr.mxu0 0.0
    %156 = vmatpush1.msra.mxu0 %v138
    %157 = vmatprep.subr.mxu0 0.0
    %158 = vmatpush1.msra.mxu0 %v139
    %159 = vmatprep.subr.mxu0 0.0
    %160 = vmatpush1.msra.mxu0 %v140
    %161 = vmatprep.subr.mxu0 0.0
    %162 = vmatpush1.msra.mxu0 %v141
    %163 = vmatprep.subr.mxu0 0.0
    %164 = vmatpush1.msra.mxu0 %v142
    %165 = vmatprep.subr.mxu0 0.0
    %166 = vmatpush1.msra.mxu0 %v143
    %167 = vmatprep.subr.mxu0 0.0
    %168 = vmatpush1.msra.mxu0 %v144
    %169 = vmatprep.subr.mxu0 0.0
    %170 = vmatpush1.msra.mxu0 %v145
    %171 = vmatprep.subr.mxu0 0.0
    %172 = vmatpush1.msra.mxu0 %v146
    %173 = vmatprep.subr.mxu0 0.0
    %174 = vmatpush1.msra.mxu0 %v147
    %175 = vmatprep.subr.mxu0 0.0
    %176 = vmatpush1.msra.mxu0 %v148
    %177 = vmatprep.subr.mxu0 0.0
    %178 = vmatpush1.msra.mxu0 %v149
    %179 = vmatprep.subr.mxu0 0.0
    %180 = vmatpush1.msra.mxu0 %v150
    %181 = vmatprep.subr.mxu0 0.0
    %182 = vmatpush1.msra.mxu0 %v151
    %183 = vmatprep.subr.mxu0 0.0
    %184 = vmatpush1.msra.mxu0 %v152
    %185 = vmatprep.subr.mxu0 0.0
    %186 = vmatpush1.msra.mxu0 0.0
    %187 = vmatprep.subr.mxu0 0.0
    %188 = vmatpush1.msra.mxu0 0.0
    %189 = vmatprep.subr.mxu0 0.0
    %190 = vmatpush1.msra.mxu0 0.0
    %191 = vmatprep.subr.mxu0 0.0
    %192 = vmatpush1.msra.mxu0 0.0
    %193 = vmatprep.subr.mxu0 0.0
    %194 = vmatpush1.msra.mxu0 0.0
    %195 = vmatprep.subr.mxu0 0.0
    %196 = vmatpush1.msra.mxu0 0.0
    %197 = vmatprep.subr.mxu0 0.0
    %198 = vmatpush1.msra.mxu0 0.0
    %199 = vmatprep.subr.mxu0 0.0
    %200 = vmatpush1.msra.mxu0 0.0
    %201 = vmatprep.subr.mxu0 0.0
    %202 = vmatpush1.msra.mxu0 0.0
    %203 = vmatprep.subr.mxu0 0.0
    %204 = vmatpush1.msra.mxu0 0.0
    %205 = vmatprep.subr.mxu0 0.0
    %206 = vmatpush1.msra.mxu0 0.0
    %207 = vmatprep.subr.mxu0 0.0
    %208 = vmatpush1.msra.mxu0 0.0
    %209 = vmatprep.subr.mxu0 0.0
    %210 = vmatpush1.msra.mxu0 0.0
    %211 = vmatprep.subr.mxu0 0.0
    %212 = vmatpush1.msra.mxu0 0.0
    %213 = vmatprep.subr.mxu0 0.0
    %214 = vmatpush1.msra.mxu0 0.0
    %215 = vmatprep.subr.mxu0 0.0
    %216 = vmatpush1.msra.mxu0 0.0
    %217 = vmatprep.mubr.f32.mxu0 0.0
    %218 = vmatmul.mubr.f32.gmra.mrb[0].mxu0 %v136
    %v219 = vpop.f32.mrb[0].mxu0
    %v220 = vadd.f32 0.0, %v219
    %v221 = vpop.f32.mrb[0].mxu0
    %222 = vdwg.mxu0
    %v223 = vxor.u32 %v220, 2147483648
    %v224 = vmul.f32 %v223, 1.442695
    %v225 = vpow.pop %v224
    %v226 = vadd.f32 %v225, 1.0
    %v227 = vrcp.pop %v226
    %v228 = vmul.f32 1.0, %v227
    %v229 = vmul.f32 %v220, %v228
    %v230 = vmul.f32 %v229, 1.6666666
    %v231 = vadd.f32 %v42, %v230
    %v232 = vmul.f32 %v231, 0.70710677
    %233 = vst [vmem:[%s3] sm:$0xf] %v232
    // Predicated region
    $region22: #{neural_atom_forward.3} parent=1 // pred_check
      _
    $region23: #{neural_atom_forward.3} parent=1 // pred_check_branch
      %235 = sbr.rel (0) target = $region25
    $region24: #{neural_atom_forward.3} parent=1 // pred_region
      _
    $region25: #{neural_atom_forward.3} parent=1 // pred_fallthru
      _
    // Predicated region
    $region26: #{neural_atom_forward.3} parent=1 // pred_check
      _
    $region27: #{neural_atom_forward.3} parent=1 // pred_check_branch
      %237 = sbr.rel (0) target = $region29
    $region28: #{neural_atom_forward.3} parent=1 // pred_region
      _
    $region29: #{neural_atom_forward.3} parent=1 // pred_fallthru
      _
    %238 = vsyncpa [#allocation3], 1
    %239 = vsyncpa [#allocation5], 1

// kernel: neural_atom_forward.4
$region0: #{neural_atom_forward.4}
  #allocation0 [shape = 'u32[]', space=smem, size = 0x4, offset = 0x4, fixed_abs, tag = 'smem constant byte address 0x4 - core index']
  #allocation1 [shape = 'u32[144,128]{1,0:T(1,128)}', space=vmem, size = 0x12000, scoped, tag = 'internal scratch']
  %s0 = inlined_call_operand.vmem [shape: f32[1,4,32], index: 0, kind: input, shape index: {}]
  %s1 = inlined_call_operand.vmem [shape: f32[2,8,32], index: 1, kind: input, shape index: {}]
  %s2 = inlined_call_operand.vmem [shape: f32[2,1,8], index: 2, kind: input, shape index: {}]
  %s3 = inlined_call_operand.vmem [shape: f32[4,32,32], index: 3, kind: input, shape index: {}]
  %s4 = inlined_call_operand.vmem [shape: f32[8,32], index: 4, kind: input, shape index: {}]
  %s5 = inlined_call_operand.vmem [shape: f32[4,32,32], index: 5, kind: input, shape index: {}]
  %s6 = inlined_call_operand.vmem [shape: f32[8,32], index: 6, kind: input, shape index: {}]
  %s7 = inlined_call_operand.vmem [shape: f32[2,8,32], index: 7, kind: output, shape index: {}]
  %s8 = sld [smem:[#allocation0]]
  $region61: #{neural_atom_forward.4} parent=0
    _
  %s10 = ssub.s32 1, %s8
  %s11 = scalar_select 0, %s10, %s8
  loop: start=0, step=1, limit=4
  $region2: #{neural_atom_forward.4} parent=0 // loop_pre_header
    _
  $region3: #{neural_atom_forward.4} parent=0 // loop_header
    %s13 = sphi 0, %s17
    %p14 = scmp.ge.s32.totalorder %s13, 4
    %s21 = sphi 0, %s21
    %s23 = sphi 0, %s21
    %s24 = sphi 0, %s23
    %s38 = sphi 0, %s24
    %s44 = sphi 0, %s46
    %s47 = sphi 0, %s44
    %s48 = sphi 0, %s47
    %s64 = sphi 0, %s48
    %s70 = sphi 0, %s72
    %s73 = sphi 0, %s70
    %s74 = sphi 0, %s73
    %s90 = sphi 0, %s74
    %s94 = sphi 0, %s94
    %s96 = sphi 0, %s94
    %s97 = sphi 0, %s96
    %s111 = sphi 0, %s97
    %s115 = sphi 0, %s115
    %s117 = sphi 0, %s115
    %s118 = sphi 0, %s117
    %s132 = sphi 0, %s118
    %s136 = sphi 0, %s136
    %s138 = sphi 0, %s136
    %s139 = sphi 0, %s138
    %s153 = sphi 0, %s139
    %s157 = sphi 0, %s157
    %s159 = sphi 0, %s157
    %s160 = sphi 0, %s159
    %s174 = sphi 0, %s160
    %s180 = sphi 0, %s182
    %s183 = sphi 0, %s180
    %s184 = sphi 0, %s183
    %s200 = sphi 0, %s184
  $region4: #{neural_atom_forward.4} parent=0 // loop_header_branch
    %16 = sbr.rel (%p14) target = $region8
  $region5: #{neural_atom_forward.4} parent=0 // loop_body
    %s18 = ssub.s32 %s13, 1
    %s19 = ssub.s32 %s13, 2
    %s20 = sadd.s32 %s13, 1
    %s22 = sadd.s32 %s21, 1
    %p25 = scmp.eq.s32.totalorder %s13, 1
    %p26 = scmp.ne.s32.totalorder %s21, %s23
    %p27 = scmp.eq.s32.totalorder %s13, 0
    %p28 = por %p26, %p27
    %p29 = scmp.ne.s32.totalorder %s21, %s23
    %p30 = scmp.eq.s32.totalorder %s18, 1
    %p31 = por %p29, %p30
    %p32 = scmp.ne.s32.totalorder %s23, %s24
    %p33 = scmp.eq.s32.totalorder %s18, 0
    %p34 = por %p32, %p33
    %p35 = scmp.ne.s32.totalorder %s23, %s24
    %p36 = scmp.eq.s32.totalorder %s19, 1
    %p37 = por %p35, %p36
    %p39 = scmp.ne.s32.totalorder %s24, %s38
    %p40 = scmp.eq.s32.totalorder %s19, 0
    %p41 = por %p39, %p40
    %s42 = ssub.s32 %s13, %s20
    %p43 = scmp.eq.s32.totalorder %s42, 0
    %s45 = sadd.s32 %s44, 1
    %s46 = scalar_select %p43, %s44, %s45
    %p49 = pneg %p43
    %p50 = scmp.eq.s32.totalorder %s13, 1
    %p51 = por %p49, %p50
    %p52 = scmp.ne.s32.totalorder %s44, %s47
    %p53 = scmp.eq.s32.totalorder %s13, 0
    %p54 = por %p52, %p53
    %p55 = scmp.ne.s32.totalorder %s44, %s47
    %p56 = scmp.eq.s32.totalorder %s18, 1
    %p57 = por %p55, %p56
    %p58 = scmp.ne.s32.totalorder %s47, %s48
    %p59 = scmp.eq.s32.totalorder %s18, 0
    %p60 = por %p58, %p59
    %p61 = scmp.ne.s32.totalorder %s47, %s48
    %p62 = scmp.eq.s32.totalorder %s19, 1
    %p63 = por %p61, %p62
    %p65 = scmp.ne.s32.totalorder %s48, %s64
    %p66 = scmp.eq.s32.totalorder %s19, 0
    %p67 = por %p65, %p66
    %s68 = ssub.s32 %s13, %s20
    %p69 = scmp.eq.s32.totalorder %s68, 0
    %s71 = sadd.s32 %s70, 1
    %s72 = scalar_select %p69, %s70, %s71
    %p75 = pneg %p69
    %p76 = scmp.eq.s32.totalorder %s13, 1
    %p77 = por %p75, %p76
    %p78 = scmp.ne.s32.totalorder %s70, %s73
    %p79 = scmp.eq.s32.totalorder %s13, 0
    %p80 = por %p78, %p79
    %p81 = scmp.ne.s32.totalorder %s70, %s73
    %p82 = scmp.eq.s32.totalorder %s18, 1
    %p83 = por %p81, %p82
    %p84 = scmp.ne.s32.totalorder %s73, %s74
    %p85 = scmp.eq.s32.totalorder %s18, 0
    %p86 = por %p84, %p85
    %p87 = scmp.ne.s32.totalorder %s73, %s74
    %p88 = scmp.eq.s32.totalorder %s19, 1
    %p89 = por %p87, %p88
    %p91 = scmp.ne.s32.totalorder %s74, %s90
    %p92 = scmp.eq.s32.totalorder %s19, 0
    %p93 = por %p91, %p92
    %s95 = sadd.s32 %s94, 1
    %p98 = scmp.eq.s32.totalorder %s13, 1
    %p99 = scmp.ne.s32.totalorder %s94, %s96
    %p100 = scmp.eq.s32.totalorder %s13, 0
    %p101 = por %p99, %p100
    %p102 = scmp.ne.s32.totalorder %s94, %s96
    %p103 = scmp.eq.s32.totalorder %s18, 1
    %p104 = por %p102, %p103
    %p105 = scmp.ne.s32.totalorder %s96, %s97
    %p106 = scmp.eq.s32.totalorder %s18, 0
    %p107 = por %p105, %p106
    %p108 = scmp.ne.s32.totalorder %s96, %s97
    %p109 = scmp.eq.s32.totalorder %s19, 1
    %p110 = por %p108, %p109
    %p112 = scmp.ne.s32.totalorder %s97, %s111
    %p113 = scmp.eq.s32.totalorder %s19, 0
    %p114 = por %p112, %p113
    %s116 = sadd.s32 %s115, 1
    %p119 = scmp.eq.s32.totalorder %s13, 1
    %p120 = scmp.ne.s32.totalorder %s115, %s117
    %p121 = scmp.eq.s32.totalorder %s13, 0
    %p122 = por %p120, %p121
    %p123 = scmp.ne.s32.totalorder %s115, %s117
    %p124 = scmp.eq.s32.totalorder %s18, 1
    %p125 = por %p123, %p124
    %p126 = scmp.ne.s32.totalorder %s117, %s118
    %p127 = scmp.eq.s32.totalorder %s18, 0
    %p128 = por %p126, %p127
    %p129 = scmp.ne.s32.totalorder %s117, %s118
    %p130 = scmp.eq.s32.totalorder %s19, 1
    %p131 = por %p129, %p130
    %p133 = scmp.ne.s32.totalorder %s118, %s132
    %p134 = scmp.eq.s32.totalorder %s19, 0
    %p135 = por %p133, %p134
    %s137 = sadd.s32 %s136, 1
    %p140 = scmp.eq.s32.totalorder %s13, 1
    %p141 = scmp.ne.s32.totalorder %s136, %s138
    %p142 = scmp.eq.s32.totalorder %s13, 0
    %p143 = por %p141, %p142
    %p144 = scmp.ne.s32.totalorder %s136, %s138
    %p145 = scmp.eq.s32.totalorder %s18, 1
    %p146 = por %p144, %p145
    %p147 = scmp.ne.s32.totalorder %s138, %s139
    %p148 = scmp.eq.s32.totalorder %s18, 0
    %p149 = por %p147, %p148
    %p150 = scmp.ne.s32.totalorder %s138, %s139
    %p151 = scmp.eq.s32.totalorder %s19, 1
    %p152 = por %p150, %p151
    %p154 = scmp.ne.s32.totalorder %s139, %s153
    %p155 = scmp.eq.s32.totalorder %s19, 0
    %p156 = por %p154, %p155
    %s158 = sadd.s32 %s157, 1
    %p161 = scmp.eq.s32.totalorder %s13, 1
    %p162 = scmp.ne.s32.totalorder %s157, %s159
    %p163 = scmp.eq.s32.totalorder %s13, 0
    %p164 = por %p162, %p163
    %p165 = scmp.ne.s32.totalorder %s157, %s159
    %p166 = scmp.eq.s32.totalorder %s18, 1
    %p167 = por %p165, %p166
    %p168 = scmp.ne.s32.totalorder %s159, %s160
    %p169 = scmp.eq.s32.totalorder %s18, 0
    %p170 = por %p168, %p169
    %p171 = scmp.ne.s32.totalorder %s159, %s160
    %p172 = scmp.eq.s32.totalorder %s19, 1
    %p173 = por %p171, %p172
    %p175 = scmp.ne.s32.totalorder %s160, %s174
    %p176 = scmp.eq.s32.totalorder %s19, 0
    %p177 = por %p175, %p176
    %s178 = ssub.s32 %s13, %s20
    %p179 = scmp.eq.s32.totalorder %s178, 0
    %s181 = sadd.s32 %s180, 1
    %s182 = scalar_select %p179, %s180, %s181
    %p185 = pneg %p179
    %p186 = scmp.eq.s32.totalorder %s13, 1
    %p187 = por %p185, %p186
    %p188 = scmp.ne.s32.totalorder %s180, %s183
    %p189 = scmp.eq.s32.totalorder %s13, 0
    %p190 = por %p188, %p189
    %p191 = scmp.ne.s32.totalorder %s180, %s183
    %p192 = scmp.eq.s32.totalorder %s18, 1
    %p193 = por %p191, %p192
    %p194 = scmp.ne.s32.totalorder %s183, %s184
    %p195 = scmp.eq.s32.totalorder %s18, 0
    %p196 = por %p194, %p195
    %p197 = scmp.ne.s32.totalorder %s183, %s184
    %p198 = scmp.eq.s32.totalorder %s19, 1
    %p199 = por %p197, %p198
    %p201 = scmp.ne.s32.totalorder %s184, %s200
    %p202 = scmp.eq.s32.totalorder %s19, 0
    %p203 = por %p201, %p202
    %p204 = scmp.le.s32.totalorder 1, %s13
    %p205 = scmp.lt.s32.totalorder %s13, 3
    %p206 = pnand %p204, %p205
    %p207 = pneg %p206
    // Predicated region
    $region9: #{neural_atom_forward.4} parent=5 // pred_check
      _
    $region10: #{neural_atom_forward.4} parent=5 // pred_check_branch
      %209 = sbr.rel (%p206) target = $region12
    $region11: #{neural_atom_forward.4} parent=5 // pred_region
      %s210 = ssub.s32 %s13, 1
      // Predicated region
      $region13: #{neural_atom_forward.4} parent=11 // pred_check
        %p211 = pneg %p34
      $region14: #{neural_atom_forward.4} parent=11 // pred_check_branch
        %213 = sbr.rel (%p211) target = $region16
      $region15: #{neural_atom_forward.4} parent=11 // pred_region
        _
      $region16: #{neural_atom_forward.4} parent=11 // pred_fallthru
        _
      // Predicated region
      $region17: #{neural_atom_forward.4} parent=11 // pred_check
        %p214 = pneg %p107
      $region18: #{neural_atom_forward.4} parent=11 // pred_check_branch
        %216 = sbr.rel (%p214) target = $region20
      $region19: #{neural_atom_forward.4} parent=11 // pred_region
        _
      $region20: #{neural_atom_forward.4} parent=11 // pred_fallthru
        _
      // Predicated region
      $region21: #{neural_atom_forward.4} parent=11 // pred_check
        %p217 = pneg %p128
      $region22: #{neural_atom_forward.4} parent=11 // pred_check_branch
        %219 = sbr.rel (%p217) target = $region24
      $region23: #{neural_atom_forward.4} parent=11 // pred_region
        _
      $region24: #{neural_atom_forward.4} parent=11 // pred_fallthru
        _
      // Predicated region
      $region25: #{neural_atom_forward.4} parent=11 // pred_check
        %p220 = pneg %p149
      $region26: #{neural_atom_forward.4} parent=11 // pred_check_branch
        %222 = sbr.rel (%p220) target = $region28
      $region27: #{neural_atom_forward.4} parent=11 // pred_region
        _
      $region28: #{neural_atom_forward.4} parent=11 // pred_fallthru
        _
      // Predicated region
      $region29: #{neural_atom_forward.4} parent=11 // pred_check
        %p223 = pneg %p170
      $region30: #{neural_atom_forward.4} parent=11 // pred_check_branch
        %225 = sbr.rel (%p223) target = $region32
      $region31: #{neural_atom_forward.4} parent=11 // pred_region
        _
      $region32: #{neural_atom_forward.4} parent=11 // pred_fallthru
        _
    $region12: #{neural_atom_forward.4} parent=5 // pred_fallthru
      _
    %p226 = scmp.lt.s32.totalorder %s13, 2
    // Predicated region
    $region33: #{neural_atom_forward.4} parent=5 // pred_check
      %p227 = pneg %p226
    $region34: #{neural_atom_forward.4} parent=5 // pred_check_branch
      %229 = sbr.rel (%p227) target = $region36
    $region35: #{neural_atom_forward.4} parent=5 // pred_region
      // Predicated region
      $region37: #{neural_atom_forward.4} parent=35 // pred_check
        %p230 = pneg %p54
      $region38: #{neural_atom_forward.4} parent=35 // pred_check_branch
        %232 = sbr.rel (%p230) target = $region40
      $region39: #{neural_atom_forward.4} parent=35 // pred_region
        %p233 = scmp.lt.s32.totalorder %s13, 1
        %s234 = scalar_select %p233, %s13, 1
        %s235 = smul.addr %s234, 8
        %s236 = scalar_lea.vmem %s1, %s235
      $region40: #{neural_atom_forward.4} parent=35 // pred_fallthru
        _
      // Predicated region
      $region41: #{neural_atom_forward.4} parent=35 // pred_check
        %p237 = pneg %p80
      $region42: #{neural_atom_forward.4} parent=35 // pred_check_branch
        %239 = sbr.rel (%p237) target = $region44
      $region43: #{neural_atom_forward.4} parent=35 // pred_region
        %p240 = scmp.lt.s32.totalorder %s13, 1
        %s241 = scalar_select %p240, %s13, 1
        %s242 = scalar_lea.vmem %s2, %s241
      $region44: #{neural_atom_forward.4} parent=35 // pred_fallthru
        _
    $region36: #{neural_atom_forward.4} parent=5 // pred_fallthru
      _
    %p243 = scmp.le.s32.totalorder 1, %s13
    %p244 = scmp.lt.s32.totalorder %s13, 3
    %p245 = pnand %p243, %p244
    %p246 = pneg %p245
    // Predicated region
    $region45: #{neural_atom_forward.4} parent=5 // pred_check
      _
    $region46: #{neural_atom_forward.4} parent=5 // pred_check_branch
      %248 = sbr.rel (%p245) target = $region48
    $region47: #{neural_atom_forward.4} parent=5 // pred_region
      %s249 = ssub.s32 %s13, 1
      %p250 = pneg %p34
      %p251 = pneg %p31
      %p252 = scmp.lt.s32.totalorder %s18, 1
      %s253 = scalar_select %p252, %s18, 1
      %s254 = smul.addr %s253, 8
      %s255 = scalar_lea.vmem %s1, %s254
      %p256 = pneg %p60
      %p257 = pneg %p57
      %p258 = scmp.lt.s32.totalorder %s18, 1
      %s259 = scalar_select %p258, %s18, 1
      %s260 = scalar_lea.vmem %s2, %s259
      %p261 = pneg %p86
      %p262 = pneg %p83
      %p263 = pneg %p107
      %p264 = pneg %p104
      %p265 = pneg %p128
      %p266 = pneg %p125
      %p267 = pneg %p149
      %p268 = pneg %p146
      %p269 = pneg %p170
      %p270 = pneg %p167
      %p271 = pneg %p196
      %p272 = pneg %p193
      %p273 = scmp.lt.s32.totalorder %s18, 1
      %s274 = scalar_select %p273, %s18, 1
      %s275 = smul.addr %s274, 8
      %s276 = scalar_lea.vmem %s7, %s275
      %p277 = scmp.lt.s32.totalorder %s18, 1
      %s278 = scalar_select %p277, %s18, 1
      %s279 = smul.addr %s278, 8
      %s280 = scalar_lea.vmem %s1, %s279
      %p281 = scmp.lt.s32.totalorder %s18, 1
      %s282 = scalar_select %p281, %s18, 1
      %s283 = scalar_lea.vmem %s2, %s282
      %p284 = scmp.lt.s32.totalorder %s18, 1
      %s285 = scalar_select %p284, %s18, 1
      %s286 = smul.addr %s285, 8
      %s287 = scalar_lea.vmem %s7, %s286
      %v288 = vld [vmem:[%s0] sm:$0xf]
      %v289 = vld [vmem:[%s3] sm:$0xff]
      %v290 = vld [vmem:[%s3 + $0x8] sm:$0xff]
      %v291 = vld [vmem:[%s3 + $0x10] sm:$0xff]
      %v292 = vld [vmem:[%s3 + $0x18] sm:$0xff]
      %s293 = scalar_lea.vmem %s3, 32
      %v294 = vld [vmem:[%s293] sm:$0xff]
      %v295 = vld [vmem:[%s293 + $0x8] sm:$0xff]
      %v296 = vld [vmem:[%s293 + $0x10] sm:$0xff]
      %v297 = vld [vmem:[%s293 + $0x18] sm:$0xff]
      %s298 = scalar_lea.vmem %s3, 64
      %v299 = vld [vmem:[%s298] sm:$0xff]
      %v300 = vld [vmem:[%s298 + $0x8] sm:$0xff]
      %v301 = vld [vmem:[%s298 + $0x10] sm:$0xff]
      %v302 = vld [vmem:[%s298 + $0x18] sm:$0xff]
      %s303 = scalar_lea.vmem %s3, 96
      %v304 = vld [vmem:[%s303] sm:$0xff]
      %v305 = vld [vmem:[%s303 + $0x8] sm:$0xff]
      %v306 = vld [vmem:[%s303 + $0x10] sm:$0xff]
      %v307 = vld [vmem:[%s303 + $0x18] sm:$0xff]
      %v308 = vld [vmem:[%s4] sm:$0x1]
      %v309 = vld [vmem:[%s4 + $0x1] sm:$0x1]
      %v310 = vld [vmem:[%s4 + $0x2] sm:$0x1]
      %v311 = vld [vmem:[%s4 + $0x3] sm:$0x1]
      %v312 = vld [vmem:[%s4 + $0x4] sm:$0x1]
      %v313 = vld [vmem:[%s4 + $0x5] sm:$0x1]
      %v314 = vld [vmem:[%s4 + $0x6] sm:$0x1]
      %v315 = vld [vmem:[%s4 + $0x7] sm:$0x1]
      %v316 = vld [vmem:[%s5] sm:$0xff]
      %v317 = vld [vmem:[%s5 + $0x8] sm:$0xff]
      %v318 = vld [vmem:[%s5 + $0x10] sm:$0xff]
      %v319 = vld [vmem:[%s5 + $0x18] sm:$0xff]
      %s320 = scalar_lea.vmem %s5, 32
      %v321 = vld [vmem:[%s320] sm:$0xff]
      %v322 = vld [vmem:[%s320 + $0x8] sm:$0xff]
      %v323 = vld [vmem:[%s320 + $0x10] sm:$0xff]
      %v324 = vld [vmem:[%s320 + $0x18] sm:$0xff]
      %s325 = scalar_lea.vmem %s5, 64
      %v326 = vld [vmem:[%s325] sm:$0xff]
      %v327 = vld [vmem:[%s325 + $0x8] sm:$0xff]
      %v328 = vld [vmem:[%s325 + $0x10] sm:$0xff]
      %v329 = vld [vmem:[%s325 + $0x18] sm:$0xff]
      %s330 = scalar_lea.vmem %s5, 96
      %v331 = vld [vmem:[%s330] sm:$0xff]
      %v332 = vld [vmem:[%s330 + $0x8] sm:$0xff]
      %v333 = vld [vmem:[%s330 + $0x10] sm:$0xff]
      %v334 = vld [vmem:[%s330 + $0x18] sm:$0xff]
      %v335 = vld [vmem:[%s6] sm:$0x1]
      %v336 = vld [vmem:[%s6 + $0x1] sm:$0x1]
      %v337 = vld [vmem:[%s6 + $0x2] sm:$0x1]
      %v338 = vld [vmem:[%s6 + $0x3] sm:$0x1]
      %v339 = vld [vmem:[%s6 + $0x4] sm:$0x1]
      %v340 = vld [vmem:[%s6 + $0x5] sm:$0x1]
      %v341 = vld [vmem:[%s6 + $0x6] sm:$0x1]
      %v342 = vld [vmem:[%s6 + $0x7] sm:$0x1]
      %v343 = vlaneseq
      %v344 = vshrl.u32 %v343, 7
      %v345 = vsub.s32 0, %v344
      %v346 = vrot.slane %v308, %v345
      %vm347 = vcmask 261120
      %v349 = vsel %vm347, %v288, 0
      %351 = vmatprep.subr.mxu0 0.0
      %352 = vmatpush1.msra.mxu0 %v289
      %353 = vmatprep.subr.mxu0 0.0
      %354 = vmatpush1.msra.mxu0 %v290
      %355 = vmatprep.subr.mxu0 0.0
      %356 = vmatpush1.msra.mxu0 %v291
      %357 = vmatprep.subr.mxu0 0.0
      %358 = vmatpush1.msra.mxu0 %v292
      %359 = vmatprep.subr.mxu0 0.0
      %360 = vmatpush1.msra.mxu0 0.0
      %361 = vmatprep.subr.mxu0 0.0
      %362 = vmatpush1.msra.mxu0 0.0
      %363 = vmatprep.subr.mxu0 0.0
      %364 = vmatpush1.msra.mxu0 0.0
      %365 = vmatprep.subr.mxu0 0.0
      %366 = vmatpush1.msra.mxu0 0.0
      %367 = vmatprep.subr.mxu0 0.0
      %368 = vmatpush1.msra.mxu0 0.0
      %369 = vmatprep.subr.mxu0 0.0
      %370 = vmatpush1.msra.mxu0 0.0
      %371 = vmatprep.subr.mxu0 0.0
      %372 = vmatpush1.msra.mxu0 0.0
      %373 = vmatprep.subr.mxu0 0.0
      %374 = vmatpush1.msra.mxu0 0.0
      %375 = vmatprep.subr.mxu0 0.0
      %376 = vmatpush1.msra.mxu0 0.0
      %377 = vmatprep.subr.mxu0 0.0
      %378 = vmatpush1.msra.mxu0 0.0
      %379 = vmatprep.subr.mxu0 0.0
      %380 = vmatpush1.msra.mxu0 0.0
      %381 = vmatprep.subr.mxu0 0.0
      %382 = vmatpush1.msra.mxu0 0.0
      %383 = vmatprep.subr.mxu0 0.0
      %384 = vmatpush1.msra.mxu0 0.0
      %385 = vmatprep.subr.mxu0 0.0
      %386 = vmatpush1.msra.mxu0 0.0
      %387 = vmatprep.subr.mxu0 0.0
      %388 = vmatpush1.msra.mxu0 0.0
      %389 = vmatprep.subr.mxu0 0.0
      %390 = vmatpush1.msra.mxu0 0.0
      %391 = vmatprep.subr.mxu0 0.0
      %392 = vmatpush1.msra.mxu0 0.0
      %393 = vmatprep.subr.mxu0 0.0
      %394 = vmatpush1.msra.mxu0 0.0
      %395 = vmatprep.subr.mxu0 0.0
      %396 = vmatpush1.msra.mxu0 0.0
      %397 = vmatprep.subr.mxu0 0.0
      %398 = vmatpush1.msra.mxu0 0.0
      %399 = vmatprep.subr.mxu0 0.0
      %400 = vmatpush1.msra.mxu0 0.0
      %401 = vmatprep.subr.mxu0 0.0
      %402 = vmatpush1.msra.mxu0 0.0
      %403 = vmatprep.subr.mxu0 0.0
      %404 = vmatpush1.msra.mxu0 0.0
      %405 = vmatprep.subr.mxu0 0.0
      %406 = vmatpush1.msra.mxu0 0.0
      %407 = vmatprep.subr.mxu0 0.0
      %408 = vmatpush1.msra.mxu0 0.0
      %409 = vmatprep.subr.mxu0 0.0
      %410 = vmatpush1.msra.mxu0 0.0
      %411 = vmatprep.subr.mxu0 0.0
      %412 = vmatpush1.msra.mxu0 0.0
      %413 = vmatprep.subr.mxu0 0.0
      %414 = vmatpush1.msra.mxu0 0.0
      %415 = vmatprep.mubr.f32.mxu0 0.0
      %416 = vmatmul.mubr.f32.gmra.mrb[0].mxu0 %v349
      %v417 = vpop.f32.mrb[0].mxu0
      %v418 = vadd.f32 %v346, %v417
      %v419 = vpop.f32.mrb[0].mxu0
      %420 = vdwg.mxu0
      %v421 = vlaneseq
      %v422 = vand.u32 %v421, 127
      %vm423 = vcmp.ge.s32.totalorder %v422, 0
      %vm424 = vcmp.lt.s32.totalorder %v422, 16
      %vm425 = vmand %vm423, %vm424
      %v426 = vsel %vm425, 1.0, 0.0
      %vm427 = vcmp.ge.s32.totalorder %v422, 16
      %vm428 = vcmp.lt.s32.totalorder %v422, 32
      %vm429 = vmand %vm427, %vm428
      %v430 = vsel %vm429, 1.0, 0.0
      %v431 = vld [vmem:[%s280] sm:$0xff]
      %v432 = vld [vmem:[%s283] sm:$0x1]
      %v433 = vlaneseq
      %v434 = vshrl.u32 %v433, 7
      %v435 = vsub.s32 0, %v434
      %v436 = vrot.slane %v309, %v435
      %v438 = vsel %vm347, %v431, 0
      %440 = vmatprep.subr.mxu0 0.0
      %441 = vmatpush1.msra.mxu0 %v294
      %442 = vmatprep.subr.mxu0 0.0
      %443 = vmatpush1.msra.mxu0 %v295
      %444 = vmatprep.subr.mxu0 0.0
      %445 = vmatpush1.msra.mxu0 %v296
      %446 = vmatprep.subr.mxu0 0.0
      %447 = vmatpush1.msra.mxu0 %v297
      %448 = vmatprep.subr.mxu0 0.0
      %449 = vmatpush1.msra.mxu0 0.0
      %450 = vmatprep.subr.mxu0 0.0
      %451 = vmatpush1.msra.mxu0 0.0
      %452 = vmatprep.subr.mxu0 0.0
      %453 = vmatpush1.msra.mxu0 0.0
      %454 = vmatprep.subr.mxu0 0.0
      %455 = vmatpush1.msra.mxu0 0.0
      %456 = vmatprep.subr.mxu0 0.0
      %457 = vmatpush1.msra.mxu0 0.0
      %458 = vmatprep.subr.mxu0 0.0
      %459 = vmatpush1.msra.mxu0 0.0
      %460 = vmatprep.subr.mxu0 0.0
      %461 = vmatpush1.msra.mxu0 0.0
      %462 = vmatprep.subr.mxu0 0.0
      %463 = vmatpush1.msra.mxu0 0.0
      %464 = vmatprep.subr.mxu0 0.0
      %465 = vmatpush1.msra.mxu0 0.0
      %466 = vmatprep.subr.mxu0 0.0
      %467 = vmatpush1.msra.mxu0 0.0
      %468 = vmatprep.subr.mxu0 0.0
      %469 = vmatpush1.msra.mxu0 0.0
      %470 = vmatprep.subr.mxu0 0.0
      %471 = vmatpush1.msra.mxu0 0.0
      %472 = vmatprep.subr.mxu0 0.0
      %473 = vmatpush1.msra.mxu0 0.0
      %474 = vmatprep.subr.mxu0 0.0
      %475 = vmatpush1.msra.mxu0 0.0
      %476 = vmatprep.subr.mxu0 0.0
      %477 = vmatpush1.msra.mxu0 0.0
      %478 = vmatprep.subr.mxu0 0.0
      %479 = vmatpush1.msra.mxu0 0.0
      %480 = vmatprep.subr.mxu0 0.0
      %481 = vmatpush1.msra.mxu0 0.0
      %482 = vmatprep.subr.mxu0 0.0
      %483 = vmatpush1.msra.mxu0 0.0
      %484 = vmatprep.subr.mxu0 0.0
      %485 = vmatpush1.msra.mxu0 0.0
      %486 = vmatprep.subr.mxu0 0.0
      %487 = vmatpush1.msra.mxu0 0.0
      %488 = vmatprep.subr.mxu0 0.0
      %489 = vmatpush1.msra.mxu0 0.0
      %490 = vmatprep.subr.mxu0 0.0
      %491 = vmatpush1.msra.mxu0 0.0
      %492 = vmatprep.subr.mxu0 0.0
      %493 = vmatpush1.msra.mxu0 0.0
      %494 = vmatprep.subr.mxu0 0.0
      %495 = vmatpush1.msra.mxu0 0.0
      %496 = vmatprep.subr.mxu0 0.0
      %497 = vmatpush1.msra.mxu0 0.0
      %498 = vmatprep.subr.mxu0 0.0
      %499 = vmatpush1.msra.mxu0 0.0
      %500 = vmatprep.subr.mxu0 0.0
      %501 = vmatpush1.msra.mxu0 0.0
      %502 = vmatprep.subr.mxu0 0.0
      %503 = vmatpush1.msra.mxu0 0.0
      %504 = vmatprep.mubr.f32.mxu0 0.0
      %505 = vmatmul.mubr.f32.gmra.mrb[0].mxu0 %v438
      %v506 = vpop.f32.mrb[0].mxu0
      %v507 = vadd.f32 %v436, %v506
      %v508 = vpop.f32.mrb[0].mxu0
      %509 = vdwg.mxu0
      %v510 = vlaneseq
      %v511 = vshrl.u32 %v510, 7
      %v512 = vsub.s32 0, %v511
      %v513 = vrot.slane %v310, %v512
      %514 = vmatprep.subr.mxu0 0.0
      %515 = vmatpush1.msra.mxu0 %v299
      %516 = vmatprep.subr.mxu0 0.0
      %517 = vmatpush1.msra.mxu0 %v300
      %518 = vmatprep.subr.mxu0 0.0
      %519 = vmatpush1.msra.mxu0 %v301
      %520 = vmatprep.subr.mxu0 0.0
      %521 = vmatpush1.msra.mxu0 %v302
      %522 = vmatprep.subr.mxu0 0.0
      %523 = vmatpush1.msra.mxu0 0.0
      %524 = vmatprep.subr.mxu0 0.0
      %525 = vmatpush1.msra.mxu0 0.0
      %526 = vmatprep.subr.mxu0 0.0
      %527 = vmatpush1.msra.mxu0 0.0
      %528 = vmatprep.subr.mxu0 0.0
      %529 = vmatpush1.msra.mxu0 0.0
      %530 = vmatprep.subr.mxu0 0.0
      %531 = vmatpush1.msra.mxu0 0.0
      %532 = vmatprep.subr.mxu0 0.0
      %533 = vmatpush1.msra.mxu0 0.0
      %534 = vmatprep.subr.mxu0 0.0
      %535 = vmatpush1.msra.mxu0 0.0
      %536 = vmatprep.subr.mxu0 0.0
      %537 = vmatpush1.msra.mxu0 0.0
      %538 = vmatprep.subr.mxu0 0.0
      %539 = vmatpush1.msra.mxu0 0.0
      %540 = vmatprep.subr.mxu0 0.0
      %541 = vmatpush1.msra.mxu0 0.0
      %542 = vmatprep.subr.mxu0 0.0
      %543 = vmatpush1.msra.mxu0 0.0
      %544 = vmatprep.subr.mxu0 0.0
      %545 = vmatpush1.msra.mxu0 0.0
      %546 = vmatprep.subr.mxu0 0.0
      %547 = vmatpush1.msra.mxu0 0.0
      %548 = vmatprep.subr.mxu0 0.0
      %549 = vmatpush1.msra.mxu0 0.0
      %550 = vmatprep.subr.mxu0 0.0
      %551 = vmatpush1.msra.mxu0 0.0
      %552 = vmatprep.subr.mxu0 0.0
      %553 = vmatpush1.msra.mxu0 0.0
      %554 = vmatprep.subr.mxu0 0.0
      %555 = vmatpush1.msra.mxu0 0.0
      %556 = vmatprep.subr.mxu0 0.0
      %557 = vmatpush1.msra.mxu0 0.0
      %558 = vmatprep.subr.mxu0 0.0
      %559 = vmatpush1.msra.mxu0 0.0
      %560 = vmatprep.subr.mxu0 0.0
      %561 = vmatpush1.msra.mxu0 0.0
      %562 = vmatprep.subr.mxu0 0.0
      %563 = vmatpush1.msra.mxu0 0.0
      %564 = vmatprep.subr.mxu0 0.0
      %565 = vmatpush1.msra.mxu0 0.0
      %566 = vmatprep.subr.mxu0 0.0
      %567 = vmatpush1.msra.mxu0 0.0
      %568 = vmatprep.subr.mxu0 0.0
      %569 = vmatpush1.msra.mxu0 0.0
      %570 = vmatprep.subr.mxu0 0.0
      %571 = vmatpush1.msra.mxu0 0.0
      %572 = vmatprep.subr.mxu0 0.0
      %573 = vmatpush1.msra.mxu0 0.0
      %574 = vmatprep.subr.mxu0 0.0
      %575 = vmatpush1.msra.mxu0 0.0
      %576 = vmatprep.subr.mxu0 0.0
      %577 = vmatpush1.msra.mxu0 0.0
      %578 = vmatprep.mubr.f32.mxu0 0.0
      %579 = vmatmul.mubr.f32.gmra.mrb[0].mxu0 %v438
      %v580 = vpop.f32.mrb[0].mxu0
      %v581 = vadd.f32 %v513, %v580
      %v582 = vpop.f32.mrb[0].mxu0
      %583 = vdwg.mxu0
      %v585 = vsel %vm347, %v418, 0
      %v588 = vsel %vm347, %v507, 0
      %590 = vmatprep.subr.mxu0 0.0
      %591 = vmatpush1.xpose.msra.mxu0 %v588
      %592 = vmatprep.subr.mxu0 0.0
      %593 = vmatpush1.xpose.msra.mxu0 0.0
      %594 = vmatprep.subr.mxu0 0.0
      %595 = vmatpush1.xpose.msra.mxu0 0.0
      %596 = vmatprep.subr.mxu0 0.0
      %597 = vmatpush1.xpose.msra.mxu0 0.0
      %598 = vmatprep.subr.mxu0 0.0
      %599 = vmatpush1.xpose.msra.mxu0 0.0
      %600 = vmatprep.subr.mxu0 0.0
      %601 = vmatpush1.xpose.msra.mxu0 0.0
      %602 = vmatprep.subr.mxu0 0.0
      %603 = vmatpush1.xpose.msra.mxu0 0.0
      %604 = vmatprep.subr.mxu0 0.0
      %605 = vmatpush1.xpose.msra.mxu0 0.0
      %606 = vmatprep.subr.mxu0 0.0
      %607 = vmatpush1.xpose.msra.mxu0 0.0
      %608 = vmatprep.subr.mxu0 0.0
      %609 = vmatpush1.xpose.msra.mxu0 0.0
      %610 = vmatprep.subr.mxu0 0.0
      %611 = vmatpush1.xpose.msra.mxu0 0.0
      %612 = vmatprep.subr.mxu0 0.0
      %613 = vmatpush1.xpose.msra.mxu0 0.0
      %614 = vmatprep.subr.mxu0 0.0
      %615 = vmatpush1.xpose.msra.mxu0 0.0
      %616 = vmatprep.subr.mxu0 0.0
      %617 = vmatpush1.xpose.msra.mxu0 0.0
      %618 = vmatprep.subr.mxu0 0.0
      %619 = vmatpush1.xpose.msra.mxu0 0.0
      %620 = vmatprep.subr.mxu0 0.0
      %621 = vmatpush1.xpose.msra.mxu0 0.0
      %622 = vmatprep.subr.mxu0 0.0
      %623 = vmatpush1.xpose.msra.mxu0 0.0
      %624 = vmatprep.subr.mxu0 0.0
      %625 = vmatpush1.xpose.msra.mxu0 0.0
      %626 = vmatprep.subr.mxu0 0.0
      %627 = vmatpush1.xpose.msra.mxu0 0.0
      %628 = vmatprep.subr.mxu0 0.0
      %629 = vmatpush1.xpose.msra.mxu0 0.0
      %630 = vmatprep.subr.mxu0 0.0
      %631 = vmatpush1.xpose.msra.mxu0 0.0
      %632 = vmatprep.subr.mxu0 0.0
      %633 = vmatpush1.xpose.msra.mxu0 0.0
      %634 = vmatprep.subr.mxu0 0.0
      %635 = vmatpush1.xpose.msra.mxu0 0.0
      %636 = vmatprep.subr.mxu0 0.0
      %637 = vmatpush1.xpose.msra.mxu0 0.0
      %638 = vmatprep.subr.mxu0 0.0
      %639 = vmatpush1.xpose.msra.mxu0 0.0
      %640 = vmatprep.subr.mxu0 0.0
      %641 = vmatpush1.xpose.msra.mxu0 0.0
      %642 = vmatprep.subr.mxu0 0.0
      %643 = vmatpush1.xpose.msra.mxu0 0.0
      %644 = vmatprep.subr.mxu0 0.0
      %645 = vmatpush1.xpose.msra.mxu0 0.0
      %646 = vmatprep.subr.mxu0 0.0
      %647 = vmatpush1.xpose.msra.mxu0 0.0
      %648 = vmatprep.subr.mxu0 0.0
      %649 = vmatpush1.xpose.msra.mxu0 0.0
      %650 = vmatprep.subr.mxu0 0.0
      %651 = vmatpush1.xpose.msra.mxu0 0.0
      %652 = vmatprep.subr.mxu0 0.0
      %653 = vmatpush1.xpose.msra.mxu0 0.0
      %654 = vmatprep.mubr.f32.mxu0 0.0
      %655 = vmatmul.mubr.f32.gmra.mrb[0].mxu0 %v585
      %v656 = vpop.f32.mrb[0].mxu0
      %v657 = vadd.f32 0.0, %v656
      %v658 = vpop.f32.mrb[0].mxu0
      %659 = vdwg.mxu0
      %v660 = vmul.f32 %v657, 0.17677669
      %v662 = vlaneseq
      %v663 = vshrl.u32 %v662, 7
      %v664 = vsub.s32 0, %v663
      %v665 = vrot.slane %v432, %v664
      %v667 = vadd.f32 %v660, %v665
      %vm668 = vcmask 60416
      %v669 = vsel %vm668, %v667, -inf
      %v670 = vrot.slane %v669, 4
      %v671 = vmax.f32 %v669, %v670
      %v672 = vrot.slane %v671, 2
      %v673 = vmax.f32 %v671, %v672
      %v674 = vrot.slane %v673, 1
      %v675 = vmax.f32 %v673, %v674
      %v676 = vsub.f32 %v667, %v675
      %v677 = vmul.f32 %v676, 1.442695
      %v678 = vpow.pop %v677
      %v679 = vsel %vm668, %v678, 0.0
      %v680 = vrot.slane %v679, 4
      %v681 = vadd.f32 %v679, %v680
      %v682 = vrot.slane %v681, 2
      %v683 = vadd.f32 %v681, %v682
      %v684 = vrot.slane %v683, 1
      %v685 = vadd.f32 %v683, %v684
      %v686 = vrcp.pop %v685
      %v687 = vmul.f32 %v678, %v686
      %vm688 = vcmask 64512
      %v690 = vsel %vm688, %v687, 0
      %692 = vmatprep.subr.mxu0 0.0
      %693 = vmatpush1.msra.mxu0 %v581
      %694 = vmatprep.subr.mxu0 0.0
      %695 = vmatpush1.msra.mxu0 0.0
      %696 = vmatprep.subr.mxu0 0.0
      %697 = vmatpush1.msra.mxu0 0.0
      %698 = vmatprep.subr.mxu0 0.0
      %699 = vmatpush1.msra.mxu0 0.0
      %700 = vmatprep.subr.mxu0 0.0
      %701 = vmatpush1.msra.mxu0 0.0
      %702 = vmatprep.subr.mxu0 0.0
      %703 = vmatpush1.msra.mxu0 0.0
      %704 = vmatprep.subr.mxu0 0.0
      %705 = vmatpush1.msra.mxu0 0.0
      %706 = vmatprep.subr.mxu0 0.0
      %707 = vmatpush1.msra.mxu0 0.0
      %708 = vmatprep.subr.mxu0 0.0
      %709 = vmatpush1.msra.mxu0 0.0
      %710 = vmatprep.subr.mxu0 0.0
      %711 = vmatpush1.msra.mxu0 0.0
      %712 = vmatprep.subr.mxu0 0.0
      %713 = vmatpush1.msra.mxu0 0.0
      %714 = vmatprep.subr.mxu0 0.0
      %715 = vmatpush1.msra.mxu0 0.0
      %716 = vmatprep.subr.mxu0 0.0
      %717 = vmatpush1.msra.mxu0 0.0
      %718 = vmatprep.subr.mxu0 0.0
      %719 = vmatpush1.msra.mxu0 0.0
      %720 = vmatprep.subr.mxu0 0.0
      %721 = vmatpush1.msra.mxu0 0.0
      %722 = vmatprep.subr.mxu0 0.0
      %723 = vmatpush1.msra.mxu0 0.0
      %724 = vmatprep.subr.mxu0 0.0
      %725 = vmatpush1.msra.mxu0 0.0
      %726 = vmatprep.subr.mxu0 0.0
      %727 = vmatpush1.msra.mxu0 0.0
      %728 = vmatprep.subr.mxu0 0.0
      %729 = vmatpush1.msra.mxu0 0.0
      %730 = vmatprep.subr.mxu0 0.0
      %731 = vmatpush1.msra.mxu0 0.0
      %732 = vmatprep.subr.mxu0 0.0
      %733 = vmatpush1.msra.mxu0 0.0
      %734 = vmatprep.subr.mxu0 0.0
      %735 = vmatpush1.msra.mxu0 0.0
      %736 = vmatprep.subr.mxu0 0.0
      %737 = vmatpush1.msra.mxu0 0.0
      %738 = vmatprep.subr.mxu0 0.0
      %739 = vmatpush1.msra.mxu0 0.0
      %740 = vmatprep.subr.mxu0 0.0
      %741 = vmatpush1.msra.mxu0 0.0
      %742 = vmatprep.subr.mxu0 0.0
      %743 = vmatpush1.msra.mxu0 0.0
      %744 = vmatprep.subr.mxu0 0.0
      %745 = vmatpush1.msra.mxu0 0.0
      %746 = vmatprep.subr.mxu0 0.0
      %747 = vmatpush1.msra.mxu0 0.0
      %748 = vmatprep.subr.mxu0 0.0
      %749 = vmatpush1.msra.mxu0 0.0
      %750 = vmatprep.subr.mxu0 0.0
      %751 = vmatpush1.msra.mxu0 0.0
      %752 = vmatprep.subr.mxu0 0.0
      %753 = vmatpush1.msra.mxu0 0.0
      %754 = vmatprep.subr.mxu0 0.0
      %755 = vmatpush1.msra.mxu0 0.0
      %756 = vmatprep.mubr.f32.mxu0 0.0
      %757 = vmatmul.mubr.f32.gmra.mrb[0].mxu0 %v690
      %v758 = vpop.f32.mrb[0].mxu0
      %v759 = vadd.f32 0.0, %v758
      %v760 = vpop.f32.mrb[0].mxu0
      %761 = vdwg.mxu0
      %v762 = vadd.f32 %v418, %v759
      %vm763 = vcmask 257024
      %v764 = vsel %vm763, %v762, 0.0
      %765 = vadd.xlane.f32.xlu0 %v764
      %v766 = vpop.xlane.xlu0 %765
      %v767 = vrcp.pop 32.0
      %v768 = vmul.f32 %v766, %v767
      %v769 = vsub.f32 %v762, %v768
      %v770 = vmul.f32 %v769, %v769
      %v771 = vsel %vm763, %v770, 0.0
      %772 = vadd.xlane.f32.xlu0 %v771
      %v773 = vpop.xlane.xlu0 %772
      %v774 = vmul.f32 %v773, %v767
      %v775 = vadd.f32 %v774, 1e-05
      %v776 = vrsqrt.pop %v775
      %v777 = vmul.f32 %v769, %v776
      %v778 = vlaneseq
      %v779 = vshrl.u32 %v778, 7
      %v780 = vsub.s32 0, %v779
      %v781 = vrot.slane %v312, %v780
      %v782 = vmul.f32 %v777, %v781
      %v783 = vlaneseq
      %v784 = vshrl.u32 %v783, 7
      %v785 = vsub.s32 0, %v784
      %v786 = vrot.slane %v313, %v785
      %v787 = vadd.f32 %v782, %v786
      %v788 = vlaneseq
      %v789 = vshrl.u32 %v788, 7
      %v790 = vsub.s32 0, %v789
      %v791 = vrot.slane %v311, %v790
      %v793 = vsel %vm347, %v787, 0
      %795 = vmatprep.subr.mxu0 0.0
      %796 = vmatpush1.msra.mxu0 %v304
      %797 = vmatprep.subr.mxu0 0.0
      %798 = vmatpush1.msra.mxu0 %v305
      %799 = vmatprep.subr.mxu0 0.0
      %800 = vmatpush1.msra.mxu0 %v306
      %801 = vmatprep.subr.mxu0 0.0
      %802 = vmatpush1.msra.mxu0 %v307
      %803 = vmatprep.subr.mxu0 0.0
      %804 = vmatpush1.msra.mxu0 0.0
      %805 = vmatprep.subr.mxu0 0.0
      %806 = vmatpush1.msra.mxu0 0.0
      %807 = vmatprep.subr.mxu0 0.0
      %808 = vmatpush1.msra.mxu0 0.0
      %809 = vmatprep.subr.mxu0 0.0
      %810 = vmatpush1.msra.mxu0 0.0
      %811 = vmatprep.subr.mxu0 0.0
      %812 = vmatpush1.msra.mxu0 0.0
      %813 = vmatprep.subr.mxu0 0.0
      %814 = vmatpush1.msra.mxu0 0.0
      %815 = vmatprep.subr.mxu0 0.0
      %816 = vmatpush1.msra.mxu0 0.0
      %817 = vmatprep.subr.mxu0 0.0
      %818 = vmatpush1.msra.mxu0 0.0
      %819 = vmatprep.subr.mxu0 0.0
      %820 = vmatpush1.msra.mxu0 0.0
      %821 = vmatprep.subr.mxu0 0.0
      %822 = vmatpush1.msra.mxu0 0.0
      %823 = vmatprep.subr.mxu0 0.0
      %824 = vmatpush1.msra.mxu0 0.0
      %825 = vmatprep.subr.mxu0 0.0
      %826 = vmatpush1.msra.mxu0 0.0
      %827 = vmatprep.subr.mxu0 0.0
      %828 = vmatpush1.msra.mxu0 0.0
      %829 = vmatprep.subr.mxu0 0.0
      %830 = vmatpush1.msra.mxu0 0.0
      %831 = vmatprep.subr.mxu0 0.0
      %832 = vmatpush1.msra.mxu0 0.0
      %833 = vmatprep.subr.mxu0 0.0
      %834 = vmatpush1.msra.mxu0 0.0
      %835 = vmatprep.subr.mxu0 0.0
      %836 = vmatpush1.msra.mxu0 0.0
      %837 = vmatprep.subr.mxu0 0.0
      %838 = vmatpush1.msra.mxu0 0.0
      %839 = vmatprep.subr.mxu0 0.0
      %840 = vmatpush1.msra.mxu0 0.0
      %841 = vmatprep.subr.mxu0 0.0
      %842 = vmatpush1.msra.mxu0 0.0
      %843 = vmatprep.subr.mxu0 0.0
      %844 = vmatpush1.msra.mxu0 0.0
      %845 = vmatprep.subr.mxu0 0.0
      %846 = vmatpush1.msra.mxu0 0.0
      %847 = vmatprep.subr.mxu0 0.0
      %848 = vmatpush1.msra.mxu0 0.0
      %849 = vmatprep.subr.mxu0 0.0
      %850 = vmatpush1.msra.mxu0 0.0
      %851 = vmatprep.subr.mxu0 0.0
      %852 = vmatpush1.msra.mxu0 0.0
      %853 = vmatprep.subr.mxu0 0.0
      %854 = vmatpush1.msra.mxu0 0.0
      %855 = vmatprep.subr.mxu0 0.0
      %856 = vmatpush1.msra.mxu0 0.0
      %857 = vmatprep.subr.mxu0 0.0
      %858 = vmatpush1.msra.mxu0 0.0
      %859 = vmatprep.mubr.f32.mxu0 0.0
      %860 = vmatmul.mubr.f32.gmra.mrb[0].mxu0 %v793
      %v861 = vpop.f32.mrb[0].mxu0
      %v862 = vadd.f32 %v791, %v861
      %v863 = vpop.f32.mrb[0].mxu0
      %864 = vdwg.mxu0
      %v865 = vmax.f32 %v862, 0.0
      %v866 = vadd.f32 %v787, %v865
      %v867 = vsel %vm763, %v866, 0.0
      %868 = vadd.xlane.f32.xlu0 %v867
      %v869 = vpop.xlane.xlu0 %868
      %v870 = vmul.f32 %v869, %v767
      %v871 = vsub.f32 %v866, %v870
      %v872 = vmul.f32 %v871, %v871
      %v873 = vsel %vm763, %v872, 0.0
      %874 = vadd.xlane.f32.xlu0 %v873
      %v875 = vpop.xlane.xlu0 %874
      %v876 = vmul.f32 %v875, %v767
      %v877 = vadd.f32 %v876, 1e-05
      %v878 = vrsqrt.pop %v877
      %v879 = vmul.f32 %v871, %v878
      %v880 = vlaneseq
      %v881 = vshrl.u32 %v880, 7
      %v882 = vsub.s32 0, %v881
      %v883 = vrot.slane %v314, %v882
      %v884 = vmul.f32 %v879, %v883
      %v885 = vlaneseq
      %v886 = vshrl.u32 %v885, 7
      %v887 = vsub.s32 0, %v886
      %v888 = vrot.slane %v315, %v887
      %v889 = vadd.f32 %v884, %v888
      %v890 = vlaneseq
      %v891 = vshrl.u32 %v890, 7
      %v892 = vsub.s32 0, %v891
      %v893 = vrot.slane %v335, %v892
      %v895 = vsel %vm347, %v889, 0
      %897 = vmatprep.subr.mxu0 0.0
      %898 = vmatpush1.msra.mxu0 %v316
      %899 = vmatprep.subr.mxu0 0.0
      %900 = vmatpush1.msra.mxu0 %v317
      %901 = vmatprep.subr.mxu0 0.0
      %902 = vmatpush1.msra.mxu0 %v318
      %903 = vmatprep.subr.mxu0 0.0
      %904 = vmatpush1.msra.mxu0 %v319
      %905 = vmatprep.subr.mxu0 0.0
      %906 = vmatpush1.msra.mxu0 0.0
      %907 = vmatprep.subr.mxu0 0.0
      %908 = vmatpush1.msra.mxu0 0.0
      %909 = vmatprep.subr.mxu0 0.0
      %910 = vmatpush1.msra.mxu0 0.0
      %911 = vmatprep.subr.mxu0 0.0
      %912 = vmatpush1.msra.mxu0 0.0
      %913 = vmatprep.subr.mxu0 0.0
      %914 = vmatpush1.msra.mxu0 0.0
      %915 = vmatprep.subr.mxu0 0.0
      %916 = vmatpush1.msra.mxu0 0.0
      %917 = vmatprep.subr.mxu0 0.0
      %918 = vmatpush1.msra.mxu0 0.0
      %919 = vmatprep.subr.mxu0 0.0
      %920 = vmatpush1.msra.mxu0 0.0
      %921 = vmatprep.subr.mxu0 0.0
      %922 = vmatpush1.msra.mxu0 0.0
      %923 = vmatprep.subr.mxu0 0.0
      %924 = vmatpush1.msra.mxu0 0.0
      %925 = vmatprep.subr.mxu0 0.0
      %926 = vmatpush1.msra.mxu0 0.0
      %927 = vmatprep.subr.mxu0 0.0
      %928 = vmatpush1.msra.mxu0 0.0
      %929 = vmatprep.subr.mxu0 0.0
      %930 = vmatpush1.msra.mxu0 0.0
      %931 = vmatprep.subr.mxu0 0.0
      %932 = vmatpush1.msra.mxu0 0.0
      %933 = vmatprep.subr.mxu0 0.0
      %934 = vmatpush1.msra.mxu0 0.0
      %935 = vmatprep.subr.mxu0 0.0
      %936 = vmatpush1.msra.mxu0 0.0
      %937 = vmatprep.subr.mxu0 0.0
      %938 = vmatpush1.msra.mxu0 0.0
      %939 = vmatprep.subr.mxu0 0.0
      %940 = vmatpush1.msra.mxu0 0.0
      %941 = vmatprep.subr.mxu0 0.0
      %942 = vmatpush1.msra.mxu0 0.0
      %943 = vmatprep.subr.mxu0 0.0
      %944 = vmatpush1.msra.mxu0 0.0
      %945 = vmatprep.subr.mxu0 0.0
      %946 = vmatpush1.msra.mxu0 0.0
      %947 = vmatprep.subr.mxu0 0.0
      %948 = vmatpush1.msra.mxu0 0.0
      %949 = vmatprep.subr.mxu0 0.0
      %950 = vmatpush1.msra.mxu0 0.0
      %951 = vmatprep.subr.mxu0 0.0
      %952 = vmatpush1.msra.mxu0 0.0
      %953 = vmatprep.subr.mxu0 0.0
      %954 = vmatpush1.msra.mxu0 0.0
      %955 = vmatprep.subr.mxu0 0.0
      %956 = vmatpush1.msra.mxu0 0.0
      %957 = vmatprep.subr.mxu0 0.0
      %958 = vmatpush1.msra.mxu0 0.0
      %959 = vmatprep.subr.mxu0 0.0
      %960 = vmatpush1.msra.mxu0 0.0
      %961 = vmatprep.mubr.f32.mxu0 0.0
      %962 = vmatmul.mubr.f32.gmra.mrb[0].mxu0 %v895
      %v963 = vpop.f32.mrb[0].mxu0
      %v964 = vadd.f32 %v893, %v963
      %v965 = vpop.f32.mrb[0].mxu0
      %966 = vdwg.mxu0
      %v967 = vlaneseq
      %v968 = vshrl.u32 %v967, 7
      %v969 = vsub.s32 0, %v968
      %v970 = vrot.slane %v336, %v969
      %971 = vmatprep.subr.mxu0 0.0
      %972 = vmatpush1.msra.mxu0 %v321
      %973 = vmatprep.subr.mxu0 0.0
      %974 = vmatpush1.msra.mxu0 %v322
      %975 = vmatprep.subr.mxu0 0.0
      %976 = vmatpush1.msra.mxu0 %v323
      %977 = vmatprep.subr.mxu0 0.0
      %978 = vmatpush1.msra.mxu0 %v324
      %979 = vmatprep.subr.mxu0 0.0
      %980 = vmatpush1.msra.mxu0 0.0
      %981 = vmatprep.subr.mxu0 0.0
      %982 = vmatpush1.msra.mxu0 0.0
      %983 = vmatprep.subr.mxu0 0.0
      %984 = vmatpush1.msra.mxu0 0.0
      %985 = vmatprep.subr.mxu0 0.0
      %986 = vmatpush1.msra.mxu0 0.0
      %987 = vmatprep.subr.mxu0 0.0
      %988 = vmatpush1.msra.mxu0 0.0
      %989 = vmatprep.subr.mxu0 0.0
      %990 = vmatpush1.msra.mxu0 0.0
      %991 = vmatprep.subr.mxu0 0.0
      %992 = vmatpush1.msra.mxu0 0.0
      %993 = vmatprep.subr.mxu0 0.0
      %994 = vmatpush1.msra.mxu0 0.0
      %995 = vmatprep.subr.mxu0 0.0
      %996 = vmatpush1.msra.mxu0 0.0
      %997 = vmatprep.subr.mxu0 0.0
      %998 = vmatpush1.msra.mxu0 0.0
      %999 = vmatprep.subr.mxu0 0.0
      %1000 = vmatpush1.msra.mxu0 0.0
      %1001 = vmatprep.subr.mxu0 0.0
      %1002 = vmatpush1.msra.mxu0 0.0
      %1003 = vmatprep.subr.mxu0 0.0
      %1004 = vmatpush1.msra.mxu0 0.0
      %1005 = vmatprep.subr.mxu0 0.0
      %1006 = vmatpush1.msra.mxu0 0.0
      %1007 = vmatprep.subr.mxu0 0.0
      %1008 = vmatpush1.msra.mxu0 0.0
      %1009 = vmatprep.subr.mxu0 0.0
      %1010 = vmatpush1.msra.mxu0 0.0
      %1011 = vmatprep.subr.mxu0 0.0
      %1012 = vmatpush1.msra.mxu0 0.0
      %1013 = vmatprep.subr.mxu0 0.0
      %1014 = vmatpush1.msra.mxu0 0.0
      %1015 = vmatprep.subr.mxu0 0.0
      %1016 = vmatpush1.msra.mxu0 0.0
      %1017 = vmatprep.subr.mxu0 0.0
      %1018 = vmatpush1.msra.mxu0 0.0
      %1019 = vmatprep.subr.mxu0 0.0
      %1020 = vmatpush1.msra.mxu0 0.0
      %1021 = vmatprep.subr.mxu0 0.0
      %1022 = vmatpush1.msra.mxu0 0.0
      %1023 = vmatprep.subr.mxu0 0.0
      %1024 = vmatpush1.msra.mxu0 0.0
      %1025 = vmatprep.subr.mxu0 0.0
      %1026 = vmatpush1.msra.mxu0 0.0
      %1027 = vmatprep.subr.mxu0 0.0
      %1028 = vmatpush1.msra.mxu0 0.0
      %1029 = vmatprep.subr.mxu0 0.0
      %1030 = vmatpush1.msra.mxu0 0.0
      %1031 = vmatprep.subr.mxu0 0.0
      %1032 = vmatpush1.msra.mxu0 0.0
      %1033 = vmatprep.subr.mxu0 0.0
      %1034 = vmatpush1.msra.mxu0 0.0
      %1035 = vmatprep.mubr.f32.mxu0 0.0
      %1036 = vmatmul.mubr.f32.gmra.mrb[0].mxu0 %v895
      %v1037 = vpop.f32.mrb[0].mxu0
      %v1038 = vadd.f32 %v970, %v1037
      %v1039 = vpop.f32.mrb[0].mxu0
      %1040 = vdwg.mxu0
      %v1041 = vlaneseq
      %v1042 = vshrl.u32 %v1041, 7
      %v1043 = vsub.s32 0, %v1042
      %v1044 = vrot.slane %v337, %v1043
      %1045 = vmatprep.subr.mxu0 0.0
      %1046 = vmatpush1.msra.mxu0 %v326
      %1047 = vmatprep.subr.mxu0 0.0
      %1048 = vmatpush1.msra.mxu0 %v327
      %1049 = vmatprep.subr.mxu0 0.0
      %1050 = vmatpush1.msra.mxu0 %v328
      %1051 = vmatprep.subr.mxu0 0.0
      %1052 = vmatpush1.msra.mxu0 %v329
      %1053 = vmatprep.subr.mxu0 0.0
      %1054 = vmatpush1.msra.mxu0 0.0
      %1055 = vmatprep.subr.mxu0 0.0
      %1056 = vmatpush1.msra.mxu0 0.0
      %1057 = vmatprep.subr.mxu0 0.0
      %1058 = vmatpush1.msra.mxu0 0.0
      %1059 = vmatprep.subr.mxu0 0.0
      %1060 = vmatpush1.msra.mxu0 0.0
      %1061 = vmatprep.subr.mxu0 0.0
      %1062 = vmatpush1.msra.mxu0 0.0
      %1063 = vmatprep.subr.mxu0 0.0
      %1064 = vmatpush1.msra.mxu0 0.0
      %1065 = vmatprep.subr.mxu0 0.0
      %1066 = vmatpush1.msra.mxu0 0.0
      %1067 = vmatprep.subr.mxu0 0.0
      %1068 = vmatpush1.msra.mxu0 0.0
      %1069 = vmatprep.subr.mxu0 0.0
      %1070 = vmatpush1.msra.mxu0 0.0
      %1071 = vmatprep.subr.mxu0 0.0
      %1072 = vmatpush1.msra.mxu0 0.0
      %1073 = vmatprep.subr.mxu0 0.0
      %1074 = vmatpush1.msra.mxu0 0.0
      %1075 = vmatprep.subr.mxu0 0.0
      %1076 = vmatpush1.msra.mxu0 0.0
      %1077 = vmatprep.subr.mxu0 0.0
      %1078 = vmatpush1.msra.mxu0 0.0
      %1079 = vmatprep.subr.mxu0 0.0
      %1080 = vmatpush1.msra.mxu0 0.0
      %1081 = vmatprep.subr.mxu0 0.0
      %1082 = vmatpush1.msra.mxu0 0.0
      %1083 = vmatprep.subr.mxu0 0.0
      %1084 = vmatpush1.msra.mxu0 0.0
      %1085 = vmatprep.subr.mxu0 0.0
      %1086 = vmatpush1.msra.mxu0 0.0
      %1087 = vmatprep.subr.mxu0 0.0
      %1088 = vmatpush1.msra.mxu0 0.0
      %1089 = vmatprep.subr.mxu0 0.0
      %1090 = vmatpush1.msra.mxu0 0.0
      %1091 = vmatprep.subr.mxu0 0.0
      %1092 = vmatpush1.msra.mxu0 0.0
      %1093 = vmatprep.subr.mxu0 0.0
      %1094 = vmatpush1.msra.mxu0 0.0
      %1095 = vmatprep.subr.mxu0 0.0
      %1096 = vmatpush1.msra.mxu0 0.0
      %1097 = vmatprep.subr.mxu0 0.0
      %1098 = vmatpush1.msra.mxu0 0.0
      %1099 = vmatprep.subr.mxu0 0.0
      %1100 = vmatpush1.msra.mxu0 0.0
      %1101 = vmatprep.subr.mxu0 0.0
      %1102 = vmatpush1.msra.mxu0 0.0
      %1103 = vmatprep.subr.mxu0 0.0
      %1104 = vmatpush1.msra.mxu0 0.0
      %1105 = vmatprep.subr.mxu0 0.0
      %1106 = vmatpush1.msra.mxu0 0.0
      %1107 = vmatprep.subr.mxu0 0.0
      %1108 = vmatpush1.msra.mxu0 0.0
      %1109 = vmatprep.mubr.f32.mxu0 0.0
      %1110 = vmatmul.mubr.f32.gmra.mrb[0].mxu0 %v895
      %v1111 = vpop.f32.mrb[0].mxu0
      %v1112 = vadd.f32 %v1044, %v1111
      %v1113 = vpop.f32.mrb[0].mxu0
      %1114 = vdwg.mxu0
      %v1115 = vmul.f32 %v964, %v426
      %v1117 = vsel %vm347, %v1115, 0
      %v1120 = vsel %vm347, %v1038, 0
      %1122 = vmatprep.subr.mxu0 0.0
      %1123 = vmatpush1.xpose.msra.mxu0 %v1120
      %1124 = vmatprep.subr.mxu0 0.0
      %1125 = vmatpush1.xpose.msra.mxu0 0.0
      %1126 = vmatprep.subr.mxu0 0.0
      %1127 = vmatpush1.xpose.msra.mxu0 0.0
      %1128 = vmatprep.subr.mxu0 0.0
      %1129 = vmatpush1.xpose.msra.mxu0 0.0
      %1130 = vmatprep.subr.mxu0 0.0
      %1131 = vmatpush1.xpose.msra.mxu0 0.0
      %1132 = vmatprep.subr.mxu0 0.0
      %1133 = vmatpush1.xpose.msra.mxu0 0.0
      %1134 = vmatprep.subr.mxu0 0.0
      %1135 = vmatpush1.xpose.msra.mxu0 0.0
      %1136 = vmatprep.subr.mxu0 0.0
      %1137 = vmatpush1.xpose.msra.mxu0 0.0
      %1138 = vmatprep.subr.mxu0 0.0
      %1139 = vmatpush1.xpose.msra.mxu0 0.0
      %1140 = vmatprep.subr.mxu0 0.0
      %1141 = vmatpush1.xpose.msra.mxu0 0.0
      %1142 = vmatprep.subr.mxu0 0.0
      %1143 = vmatpush1.xpose.msra.mxu0 0.0
      %1144 = vmatprep.subr.mxu0 0.0
      %1145 = vmatpush1.xpose.msra.mxu0 0.0
      %1146 = vmatprep.subr.mxu0 0.0
      %1147 = vmatpush1.xpose.msra.mxu0 0.0
      %1148 = vmatprep.subr.mxu0 0.0
      %1149 = vmatpush1.xpose.msra.mxu0 0.0
      %1150 = vmatprep.subr.mxu0 0.0
      %1151 = vmatpush1.xpose.msra.mxu0 0.0
      %1152 = vmatprep.subr.mxu0 0.0
      %1153 = vmatpush1.xpose.msra.mxu0 0.0
      %1154 = vmatprep.subr.mxu0 0.0
      %1155 = vmatpush1.xpose.msra.mxu0 0.0
      %1156 = vmatprep.subr.mxu0 0.0
      %1157 = vmatpush1.xpose.msra.mxu0 0.0
      %1158 = vmatprep.subr.mxu0 0.0
      %1159 = vmatpush1.xpose.msra.mxu0 0.0
      %1160 = vmatprep.subr.mxu0 0.0
      %1161 = vmatpush1.xpose.msra.mxu0 0.0
      %1162 = vmatprep.subr.mxu0 0.0
      %1163 = vmatpush1.xpose.msra.mxu0 0.0
      %1164 = vmatprep.subr.mxu0 0.0
      %1165 = vmatpush1.xpose.msra.mxu0 0.0
      %1166 = vmatprep.subr.mxu0 0.0
      %1167 = vmatpush1.xpose.msra.mxu0 0.0
      %1168 = vmatprep.subr.mxu0 0.0
      %1169 = vmatpush1.xpose.msra.mxu0 0.0
      %1170 = vmatprep.subr.mxu0 0.0
      %1171 = vmatpush1.xpose.msra.mxu0 0.0
      %1172 = vmatprep.subr.mxu0 0.0
      %1173 = vmatpush1.xpose.msra.mxu0 0.0
      %1174 = vmatprep.subr.mxu0 0.0
      %1175 = vmatpush1.xpose.msra.mxu0 0.0
      %1176 = vmatprep.subr.mxu0 0.0
      %1177 = vmatpush1.xpose.msra.mxu0 0.0
      %1178 = vmatprep.subr.mxu0 0.0
      %1179 = vmatpush1.xpose.msra.mxu0 0.0
      %1180 = vmatprep.subr.mxu0 0.0
      %1181 = vmatpush1.xpose.msra.mxu0 0.0
      %1182 = vmatprep.subr.mxu0 0.0
      %1183 = vmatpush1.xpose.msra.mxu0 0.0
      %1184 = vmatprep.subr.mxu0 0.0
      %1185 = vmatpush1.xpose.msra.mxu0 0.0
      %1186 = vmatprep.mubr.f32.mxu0 0.0
      %1187 = vmatmul.mubr.f32.gmra.mrb[0].mxu0 %v1117
      %v1188 = vpop.f32.mrb[0].mxu0
      %v1189 = vadd.f32 0.0, %v1188
      %v1190 = vpop.f32.mrb[0].mxu0
      %1191 = vdwg.mxu0
      %v1192 = vmul.f32 %v1189, 0.17677669
      %vm1193 = vcmask 27648
      %v1194 = vsel %vm1193, %v1192, -inf
      %v1195 = vrot.slane %v1194, 4
      %v1196 = vmax.f32 %v1194, %v1195
      %v1197 = vrot.slane %v1196, 2
      %v1198 = vmax.f32 %v1196, %v1197
      %v1199 = vrot.slane %v1198, 1
      %v1200 = vmax.f32 %v1198, %v1199
      %v1201 = vsub.f32 %v1192, %v1200
      %v1202 = vmul.f32 %v1201, 1.442695
      %v1203 = vpow.pop %v1202
      %v1204 = vsel %vm1193, %v1203, 0.0
      %v1205 = vrot.slane %v1204, 4
      %v1206 = vadd.f32 %v1204, %v1205
      %v1207 = vrot.slane %v1206, 2
      %v1208 = vadd.f32 %v1206, %v1207
      %v1209 = vrot.slane %v1208, 1
      %v1210 = vadd.f32 %v1208, %v1209
      %v1211 = vrcp.pop %v1210
      %v1212 = vmul.f32 %v1203, %v1211
      %v1213 = vmul.f32 %v1112, %v426
      %vm1214 = vcmask 31744
      %v1216 = vsel %vm1214, %v1212, 0
      %vm1218 = vcmask 1043456
      %v1220 = vsel %vm1218, %v1213, 0
      %1222 = vmatprep.subr.mxu0 0.0
      %1223 = vmatpush1.msra.mxu0 %v1220
      %1224 = vmatprep.subr.mxu0 0.0
      %1225 = vmatpush1.msra.mxu0 0.0
      %1226 = vmatprep.subr.mxu0 0.0
      %1227 = vmatpush1.msra.mxu0 0.0
      %1228 = vmatprep.subr.mxu0 0.0
      %1229 = vmatpush1.msra.mxu0 0.0
      %1230 = vmatprep.subr.mxu0 0.0
      %1231 = vmatpush1.msra.mxu0 0.0
      %1232 = vmatprep.subr.mxu0 0.0
      %1233 = vmatpush1.msra.mxu0 0.0
      %1234 = vmatprep.subr.mxu0 0.0
      %1235 = vmatpush1.msra.mxu0 0.0
      %1236 = vmatprep.subr.mxu0 0.0
      %1237 = vmatpush1.msra.mxu0 0.0
      %1238 = vmatprep.subr.mxu0 0.0
      %1239 = vmatpush1.msra.mxu0 0.0
      %1240 = vmatprep.subr.mxu0 0.0
      %1241 = vmatpush1.msra.mxu0 0.0
      %1242 = vmatprep.subr.mxu0 0.0
      %1243 = vmatpush1.msra.mxu0 0.0
      %1244 = vmatprep.subr.mxu0 0.0
      %1245 = vmatpush1.msra.mxu0 0.0
      %1246 = vmatprep.subr.mxu0 0.0
      %1247 = vmatpush1.msra.mxu0 0.0
      %1248 = vmatprep.subr.mxu0 0.0
      %1249 = vmatpush1.msra.mxu0 0.0
      %1250 = vmatprep.subr.mxu0 0.0
      %1251 = vmatpush1.msra.mxu0 0.0
      %1252 = vmatprep.subr.mxu0 0.0
      %1253 = vmatpush1.msra.mxu0 0.0
      %1254 = vmatprep.subr.mxu0 0.0
      %1255 = vmatpush1.msra.mxu0 0.0
      %1256 = vmatprep.subr.mxu0 0.0
      %1257 = vmatpush1.msra.mxu0 0.0
      %1258 = vmatprep.subr.mxu0 0.0
      %1259 = vmatpush1.msra.mxu0 0.0
      %1260 = vmatprep.subr.mxu0 0.0
      %1261 = vmatpush1.msra.mxu0 0.0
      %1262 = vmatprep.subr.mxu0 0.0
      %1263 = vmatpush1.msra.mxu0 0.0
      %1264 = vmatprep.subr.mxu0 0.0
      %1265 = vmatpush1.msra.mxu0 0.0
      %1266 = vmatprep.subr.mxu0 0.0
      %1267 = vmatpush1.msra.mxu0 0.0
      %1268 = vmatprep.subr.mxu0 0.0
      %1269 = vmatpush1.msra.mxu0 0.0
      %1270 = vmatprep.subr.mxu0 0.0
      %1271 = vmatpush1.msra.mxu0 0.0
      %1272 = vmatprep.subr.mxu0 0.0
      %1273 = vmatpush1.msra.mxu0 0.0
      %1274 = vmatprep.subr.mxu0 0.0
      %1275 = vmatpush1.msra.mxu0 0.0
      %1276 = vmatprep.subr.mxu0 0.0
      %1277 = vmatpush1.msra.mxu0 0.0
      %1278 = vmatprep.subr.mxu0 0.0
      %1279 = vmatpush1.msra.mxu0 0.0
      %1280 = vmatprep.subr.mxu0 0.0
      %1281 = vmatpush1.msra.mxu0 0.0
      %1282 = vmatprep.subr.mxu0 0.0
      %1283 = vmatpush1.msra.mxu0 0.0
      %1284 = vmatprep.subr.mxu0 0.0
      %1285 = vmatpush1.msra.mxu0 0.0
      %1286 = vmatprep.mubr.f32.mxu0 0.0
      %1287 = vmatmul.mubr.f32.gmra.mrb[0].mxu0 %v1216
      %v1288 = vpop.f32.mrb[0].mxu0
      %v1289 = vadd.f32 0.0, %v1288
      %v1290 = vpop.f32.mrb[0].mxu0
      %1291 = vdwg.mxu0
      %v1292 = vadd.f32 %v964, %v1289
      %v1293 = vmul.f32 %v964, %v430
      %v1295 = vsel %vm347, %v1293, 0
      %1297 = vmatprep.subr.mxu0 0.0
      %1298 = vmatpush1.xpose.msra.mxu0 %v1120
      %1299 = vmatprep.subr.mxu0 0.0
      %1300 = vmatpush1.xpose.msra.mxu0 0.0
      %1301 = vmatprep.subr.mxu0 0.0
      %1302 = vmatpush1.xpose.msra.mxu0 0.0
      %1303 = vmatprep.subr.mxu0 0.0
      %1304 = vmatpush1.xpose.msra.mxu0 0.0
      %1305 = vmatprep.subr.mxu0 0.0
      %1306 = vmatpush1.xpose.msra.mxu0 0.0
      %1307 = vmatprep.subr.mxu0 0.0
      %1308 = vmatpush1.xpose.msra.mxu0 0.0
      %1309 = vmatprep.subr.mxu0 0.0
      %1310 = vmatpush1.xpose.msra.mxu0 0.0
      %1311 = vmatprep.subr.mxu0 0.0
      %1312 = vmatpush1.xpose.msra.mxu0 0.0
      %1313 = vmatprep.subr.mxu0 0.0
      %1314 = vmatpush1.xpose.msra.mxu0 0.0
      %1315 = vmatprep.subr.mxu0 0.0
      %1316 = vmatpush1.xpose.msra.mxu0 0.0
      %1317 = vmatprep.subr.mxu0 0.0
      %1318 = vmatpush1.xpose.msra.mxu0 0.0
      %1319 = vmatprep.subr.mxu0 0.0
      %1320 = vmatpush1.xpose.msra.mxu0 0.0
      %1321 = vmatprep.subr.mxu0 0.0
      %1322 = vmatpush1.xpose.msra.mxu0 0.0
      %1323 = vmatprep.subr.mxu0 0.0
      %1324 = vmatpush1.xpose.msra.mxu0 0.0
      %1325 = vmatprep.subr.mxu0 0.0
      %1326 = vmatpush1.xpose.msra.mxu0 0.0
      %1327 = vmatprep.subr.mxu0 0.0
      %1328 = vmatpush1.xpose.msra.mxu0 0.0
      %1329 = vmatprep.subr.mxu0 0.0
      %1330 = vmatpush1.xpose.msra.mxu0 0.0
      %1331 = vmatprep.subr.mxu0 0.0
      %1332 = vmatpush1.xpose.msra.mxu0 0.0
      %1333 = vmatprep.subr.mxu0 0.0
      %1334 = vmatpush1.xpose.msra.mxu0 0.0
      %1335 = vmatprep.subr.mxu0 0.0
      %1336 = vmatpush1.xpose.msra.mxu0 0.0
      %1337 = vmatprep.subr.mxu0 0.0
      %1338 = vmatpush1.xpose.msra.mxu0 0.0
      %1339 = vmatprep.subr.mxu0 0.0
      %1340 = vmatpush1.xpose.msra.mxu0 0.0
      %1341 = vmatprep.subr.mxu0 0.0
      %1342 = vmatpush1.xpose.msra.mxu0 0.0
      %1343 = vmatprep.subr.mxu0 0.0
      %1344 = vmatpush1.xpose.msra.mxu0 0.0
      %1345 = vmatprep.subr.mxu0 0.0
      %1346 = vmatpush1.xpose.msra.mxu0 0.0
      %1347 = vmatprep.subr.mxu0 0.0
      %1348 = vmatpush1.xpose.msra.mxu0 0.0
      %1349 = vmatprep.subr.mxu0 0.0
      %1350 = vmatpush1.xpose.msra.mxu0 0.0
      %1351 = vmatprep.subr.mxu0 0.0
      %1352 = vmatpush1.xpose.msra.mxu0 0.0
      %1353 = vmatprep.subr.mxu0 0.0
      %1354 = vmatpush1.xpose.msra.mxu0 0.0
      %1355 = vmatprep.subr.mxu0 0.0
      %1356 = vmatpush1.xpose.msra.mxu0 0.0
      %1357 = vmatprep.subr.mxu0 0.0
      %1358 = vmatpush1.xpose.msra.mxu0 0.0
      %1359 = vmatprep.subr.mxu0 0.0
      %1360 = vmatpush1.xpose.msra.mxu0 0.0
      %1361 = vmatprep.mubr.f32.mxu0 0.0
      %1362 = vmatmul.mubr.f32.gmra.mrb[0].mxu0 %v1295
      %v1363 = vpop.f32.mrb[0].mxu0
      %v1364 = vadd.f32 0.0, %v1363
      %v1365 = vpop.f32.mrb[0].mxu0
      %1366 = vdwg.mxu0
      %v1367 = vmul.f32 %v1364, 0.17677669
      %v1368 = vsel %vm1193, %v1367, -inf
      %v1369 = vrot.slane %v1368, 4
      %v1370 = vmax.f32 %v1368, %v1369
      %v1371 = vrot.slane %v1370, 2
      %v1372 = vmax.f32 %v1370, %v1371
      %v1373 = vrot.slane %v1372, 1
      %v1374 = vmax.f32 %v1372, %v1373
      %v1375 = vsub.f32 %v1367, %v1374
      %v1376 = vmul.f32 %v1375, 1.442695
      %v1377 = vpow.pop %v1376
      %v1378 = vsel %vm1193, %v1377, 0.0
      %v1379 = vrot.slane %v1378, 4
      %v1380 = vadd.f32 %v1378, %v1379
      %v1381 = vrot.slane %v1380, 2
      %v1382 = vadd.f32 %v1380, %v1381
      %v1383 = vrot.slane %v1382, 1
      %v1384 = vadd.f32 %v1382, %v1383
      %v1385 = vrcp.pop %v1384
      %v1386 = vmul.f32 %v1377, %v1385
      %v1387 = vmul.f32 %v1112, %v430
      %v1389 = vsel %vm1214, %v1386, 0
      %v1392 = vsel %vm1218, %v1387, 0
      %1394 = vmatprep.subr.mxu0 0.0
      %1395 = vmatpush1.msra.mxu0 %v1392
      %1396 = vmatprep.subr.mxu0 0.0
      %1397 = vmatpush1.msra.mxu0 0.0
      %1398 = vmatprep.subr.mxu0 0.0
      %1399 = vmatpush1.msra.mxu0 0.0
      %1400 = vmatprep.subr.mxu0 0.0
      %1401 = vmatpush1.msra.mxu0 0.0
      %1402 = vmatprep.subr.mxu0 0.0
      %1403 = vmatpush1.msra.mxu0 0.0
      %1404 = vmatprep.subr.mxu0 0.0
      %1405 = vmatpush1.msra.mxu0 0.0
      %1406 = vmatprep.subr.mxu0 0.0
      %1407 = vmatpush1.msra.mxu0 0.0
      %1408 = vmatprep.subr.mxu0 0.0
      %1409 = vmatpush1.msra.mxu0 0.0
      %1410 = vmatprep.subr.mxu0 0.0
      %1411 = vmatpush1.msra.mxu0 0.0
      %1412 = vmatprep.subr.mxu0 0.0
      %1413 = vmatpush1.msra.mxu0 0.0
      %1414 = vmatprep.subr.mxu0 0.0
      %1415 = vmatpush1.msra.mxu0 0.0
      %1416 = vmatprep.subr.mxu0 0.0
      %1417 = vmatpush1.msra.mxu0 0.0
      %1418 = vmatprep.subr.mxu0 0.0
      %1419 = vmatpush1.msra.mxu0 0.0
      %1420 = vmatprep.subr.mxu0 0.0
      %1421 = vmatpush1.msra.mxu0 0.0
      %1422 = vmatprep.subr.mxu0 0.0
      %1423 = vmatpush1.msra.mxu0 0.0
      %1424 = vmatprep.subr.mxu0 0.0
      %1425 = vmatpush1.msra.mxu0 0.0
      %1426 = vmatprep.subr.mxu0 0.0
      %1427 = vmatpush1.msra.mxu0 0.0
      %1428 = vmatprep.subr.mxu0 0.0
      %1429 = vmatpush1.msra.mxu0 0.0
      %1430 = vmatprep.subr.mxu0 0.0
      %1431 = vmatpush1.msra.mxu0 0.0
      %1432 = vmatprep.subr.mxu0 0.0
      %1433 = vmatpush1.msra.mxu0 0.0
      %1434 = vmatprep.subr.mxu0 0.0
      %1435 = vmatpush1.msra.mxu0 0.0
      %1436 = vmatprep.subr.mxu0 0.0
      %1437 = vmatpush1.msra.mxu0 0.0
      %1438 = vmatprep.subr.mxu0 0.0
      %1439 = vmatpush1.msra.mxu0 0.0
      %1440 = vmatprep.subr.mxu0 0.0
      %1441 = vmatpush1.msra.mxu0 0.0
      %1442 = vmatprep.subr.mxu0 0.0
      %1443 = vmatpush1.msra.mxu0 0.0
      %1444 = vmatprep.subr.mxu0 0.0
      %1445 = vmatpush1.msra.mxu0 0.0
      %1446 = vmatprep.subr.mxu0 0.0
      %1447 = vmatpush1.msra.mxu0 0.0
      %1448 = vmatprep.subr.mxu0 0.0
      %1449 = vmatpush1.msra.mxu0 0.0
      %1450 = vmatprep.subr.mxu0 0.0
      %1451 = vmatpush1.msra.mxu0 0.0
      %1452 = vmatprep.subr.mxu0 0.0
      %1453 = vmatpush1.msra.mxu0 0.0
      %1454 = vmatprep.subr.mxu0 0.0
      %1455 = vmatpush1.msra.mxu0 0.0
      %1456 = vmatprep.subr.mxu0 0.0
      %1457 = vmatpush1.msra.mxu0 0.0
      %1458 = vmatprep.mubr.f32.mxu0 0.0
      %1459 = vmatmul.mubr.f32.gmra.mrb[0].mxu0 %v1389
      %v1460 = vpop.f32.mrb[0].mxu0
      %v1461 = vadd.f32 0.0, %v1460
      %v1462 = vpop.f32.mrb[0].mxu0
      %1463 = vdwg.mxu0
      %v1464 = vadd.f32 %v1292, %v1461
      %v1465 = vsel %vm763, %v1464, 0.0
      %1466 = vadd.xlane.f32.xlu0 %v1465
      %v1467 = vpop.xlane.xlu0 %1466
      %v1468 = vmul.f32 %v1467, %v767
      %v1469 = vsub.f32 %v1464, %v1468
      %v1470 = vmul.f32 %v1469, %v1469
      %v1471 = vsel %vm763, %v1470, 0.0
      %1472 = vadd.xlane.f32.xlu0 %v1471
      %v1473 = vpop.xlane.xlu0 %1472
      %v1474 = vmul.f32 %v1473, %v767
      %v1475 = vadd.f32 %v1474, 1e-05
      %v1476 = vrsqrt.pop %v1475
      %v1477 = vmul.f32 %v1469, %v1476
      %v1478 = vlaneseq
      %v1479 = vshrl.u32 %v1478, 7
      %v1480 = vsub.s32 0, %v1479
      %v1481 = vrot.slane %v339, %v1480
      %v1482 = vmul.f32 %v1477, %v1481
      %v1483 = vlaneseq
      %v1484 = vshrl.u32 %v1483, 7
      %v1485 = vsub.s32 0, %v1484
      %v1486 = vrot.slane %v340, %v1485
      %v1487 = vadd.f32 %v1482, %v1486
      %v1488 = vlaneseq
      %v1489 = vshrl.u32 %v1488, 7
      %v1490 = vsub.s32 0, %v1489
      %v1491 = vrot.slane %v338, %v1490
      %v1493 = vsel %vm347, %v1487, 0
      %1495 = vmatprep.subr.mxu0 0.0
      %1496 = vmatpush1.msra.mxu0 %v331
      %1497 = vmatprep.subr.mxu0 0.0
      %1498 = vmatpush1.msra.mxu0 %v332
      %1499 = vmatprep.subr.mxu0 0.0
      %1500 = vmatpush1.msra.mxu0 %v333
      %1501 = vmatprep.subr.mxu0 0.0
      %1502 = vmatpush1.msra.mxu0 %v334
      %1503 = vmatprep.subr.mxu0 0.0
      %1504 = vmatpush1.msra.mxu0 0.0
      %1505 = vmatprep.subr.mxu0 0.0
      %1506 = vmatpush1.msra.mxu0 0.0
      %1507 = vmatprep.subr.mxu0 0.0
      %1508 = vmatpush1.msra.mxu0 0.0
      %1509 = vmatprep.subr.mxu0 0.0
      %1510 = vmatpush1.msra.mxu0 0.0
      %1511 = vmatprep.subr.mxu0 0.0
      %1512 = vmatpush1.msra.mxu0 0.0
      %1513 = vmatprep.subr.mxu0 0.0
      %1514 = vmatpush1.msra.mxu0 0.0
      %1515 = vmatprep.subr.mxu0 0.0
      %1516 = vmatpush1.msra.mxu0 0.0
      %1517 = vmatprep.subr.mxu0 0.0
      %1518 = vmatpush1.msra.mxu0 0.0
      %1519 = vmatprep.subr.mxu0 0.0
      %1520 = vmatpush1.msra.mxu0 0.0
      %1521 = vmatprep.subr.mxu0 0.0
      %1522 = vmatpush1.msra.mxu0 0.0
      %1523 = vmatprep.subr.mxu0 0.0
      %1524 = vmatpush1.msra.mxu0 0.0
      %1525 = vmatprep.subr.mxu0 0.0
      %1526 = vmatpush1.msra.mxu0 0.0
      %1527 = vmatprep.subr.mxu0 0.0
      %1528 = vmatpush1.msra.mxu0 0.0
      %1529 = vmatprep.subr.mxu0 0.0
      %1530 = vmatpush1.msra.mxu0 0.0
      %1531 = vmatprep.subr.mxu0 0.0
      %1532 = vmatpush1.msra.mxu0 0.0
      %1533 = vmatprep.subr.mxu0 0.0
      %1534 = vmatpush1.msra.mxu0 0.0
      %1535 = vmatprep.subr.mxu0 0.0
      %1536 = vmatpush1.msra.mxu0 0.0
      %1537 = vmatprep.subr.mxu0 0.0
      %1538 = vmatpush1.msra.mxu0 0.0
      %1539 = vmatprep.subr.mxu0 0.0
      %1540 = vmatpush1.msra.mxu0 0.0
      %1541 = vmatprep.subr.mxu0 0.0
      %1542 = vmatpush1.msra.mxu0 0.0
      %1543 = vmatprep.subr.mxu0 0.0
      %1544 = vmatpush1.msra.mxu0 0.0
      %1545 = vmatprep.subr.mxu0 0.0
      %1546 = vmatpush1.msra.mxu0 0.0
      %1547 = vmatprep.subr.mxu0 0.0
      %1548 = vmatpush1.msra.mxu0 0.0
      %1549 = vmatprep.subr.mxu0 0.0
      %1550 = vmatpush1.msra.mxu0 0.0
      %1551 = vmatprep.subr.mxu0 0.0
      %1552 = vmatpush1.msra.mxu0 0.0
      %1553 = vmatprep.subr.mxu0 0.0
      %1554 = vmatpush1.msra.mxu0 0.0
      %1555 = vmatprep.subr.mxu0 0.0
      %1556 = vmatpush1.msra.mxu0 0.0
      %1557 = vmatprep.subr.mxu0 0.0
      %1558 = vmatpush1.msra.mxu0 0.0
      %1559 = vmatprep.mubr.f32.mxu0 0.0
      %1560 = vmatmul.mubr.f32.gmra.mrb[0].mxu0 %v1493
      %v1561 = vpop.f32.mrb[0].mxu0
      %v1562 = vadd.f32 %v1491, %v1561
      %v1563 = vpop.f32.mrb[0].mxu0
      %1564 = vdwg.mxu0
      %v1565 = vmax.f32 %v1562, 0.0
      %v1566 = vadd.f32 %v1487, %v1565
      %v1567 = vsel %vm763, %v1566, 0.0
      %1568 = vadd.xlane.f32.xlu0 %v1567
      %v1569 = vpop.xlane.xlu0 %1568
      %v1570 = vmul.f32 %v1569, %v767
      %v1571 = vsub.f32 %v1566, %v1570
      %v1572 = vmul.f32 %v1571, %v1571
      %v1573 = vsel %vm763, %v1572, 0.0
      %1574 = vadd.xlane.f32.xlu0 %v1573
      %v1575 = vpop.xlane.xlu0 %1574
      %v1576 = vmul.f32 %v1575, %v767
      %v1577 = vadd.f32 %v1576, 1e-05
      %v1578 = vrsqrt.pop %v1577
      %v1579 = vmul.f32 %v1571, %v1578
      %v1580 = vlaneseq
      %v1581 = vshrl.u32 %v1580, 7
      %v1582 = vsub.s32 0, %v1581
      %v1583 = vrot.slane %v341, %v1582
      %v1584 = vmul.f32 %v1579, %v1583
      %v1585 = vlaneseq
      %v1586 = vshrl.u32 %v1585, 7
      %v1587 = vsub.s32 0, %v1586
      %v1588 = vrot.slane %v342, %v1587
      %v1589 = vadd.f32 %v1584, %v1588
      %1590 = vxpose.xlu0.b32.start [1/16] %v687, 128
      %1591 = vxpose.xlu0.b32.cont [2/16] 0.0, 128
      %1592 = vxpose.xlu0.b32.cont [3/16] 0.0, 128
      %1593 = vxpose.xlu0.b32.cont [4/16] 0.0, 128
      %1594 = vxpose.xlu0.b32.cont [5/16] 0.0, 128
      %1595 = vxpose.xlu0.b32.cont [6/16] 0.0, 128
      %1596 = vxpose.xlu0.b32.cont [7/16] 0.0, 128
      %1597 = vxpose.xlu0.b32.cont [8/16] 0.0, 128
      %1598 = vxpose.xlu0.b32.cont [9/16] 0.0, 128
      %1599 = vxpose.xlu0.b32.cont [10/16] 0.0, 128
      %1600 = vxpose.xlu0.b32.cont [11/16] 0.0, 128
      %1601 = vxpose.xlu0.b32.cont [12/16] 0.0, 128
      %1602 = vxpose.xlu0.b32.cont [13/16] 0.0, 128
      %1603 = vxpose.xlu0.b32.cont [14/16] 0.0, 128
      %1604 = vxpose.xlu0.b32.cont [15/16] 0.0, 128
      %1605 = vxpose.xlu0.b32.end [16/16] 0.0, 128
      %v1606 = vpop.trf.xlu0
      %v1607 = vpop.trf.xlu0
      %v1608 = vpop.trf.xlu0
      %v1609 = vpop.trf.xlu0
      %v1610 = vpop.trf.xlu0
      %v1611 = vpop.trf.xlu0
      %v1612 = vpop.trf.xlu0
      %v1613 = vpop.trf.xlu0
      %v1614 = vpop.trf.xlu0
      %v1615 = vpop.trf.xlu0
      %v1616 = vpop.trf.xlu0
      %v1617 = vpop.trf.xlu0
      %v1618 = vpop.trf.xlu0
      %v1619 = vpop.trf.xlu0
      %v1620 = vpop.trf.xlu0
      %v1621 = vpop.trf.xlu0
      %v1623 = vsel %vm1214, %v1606, 0
      %v1626 = vsel %vm1218, %v1589, 0
      %1628 = vmatprep.subr.mxu0 0.0
      %1629 = vmatpush1.msra.mxu0 %v1626
      %1630 = vmatprep.subr.mxu0 0.0
      %1631 = vmatpush1.msra.mxu0 0.0
      %1632 = vmatprep.subr.mxu0 0.0
      %1633 = vmatpush1.msra.mxu0 0.0
      %1634 = vmatprep.subr.mxu0 0.0
      %1635 = vmatpush1.msra.mxu0 0.0
      %1636 = vmatprep.subr.mxu0 0.0
      %1637 = vmatpush1.msra.mxu0 0.0
      %1638 = vmatprep.subr.mxu0 0.0
      %1639 = vmatpush1.msra.mxu0 0.0
      %1640 = vmatprep.subr.mxu0 0.0
      %1641 = vmatpush1.msra.mxu0 0.0
      %1642 = vmatprep.subr.mxu0 0.0
      %1643 = vmatpush1.msra.mxu0 0.0
      %1644 = vmatprep.subr.mxu0 0.0
      %1645 = vmatpush1.msra.mxu0 0.0
      %1646 = vmatprep.subr.mxu0 0.0
      %1647 = vmatpush1.msra.mxu0 0.0
      %1648 = vmatprep.subr.mxu0 0.0
      %1649 = vmatpush1.msra.mxu0 0.0
      %1650 = vmatprep.subr.mxu0 0.0
      %1651 = vmatpush1.msra.mxu0 0.0
      %1652 = vmatprep.subr.mxu0 0.0
      %1653 = vmatpush1.msra.mxu0 0.0
      %1654 = vmatprep.subr.mxu0 0.0
      %1655 = vmatpush1.msra.mxu0 0.0
      %1656 = vmatprep.subr.mxu0 0.0
      %1657 = vmatpush1.msra.mxu0 0.0
      %1658 = vmatprep.subr.mxu0 0.0
      %1659 = vmatpush1.msra.mxu0 0.0
      %1660 = vmatprep.subr.mxu0 0.0
      %1661 = vmatpush1.msra.mxu0 0.0
      %1662 = vmatprep.subr.mxu0 0.0
      %1663 = vmatpush1.msra.mxu0 0.0
      %1664 = vmatprep.subr.mxu0 0.0
      %1665 = vmatpush1.msra.mxu0 0.0
      %1666 = vmatprep.subr.mxu0 0.0
      %1667 = vmatpush1.msra.mxu0 0.0
      %1668 = vmatprep.subr.mxu0 0.0
      %1669 = vmatpush1.msra.mxu0 0.0
      %1670 = vmatprep.subr.mxu0 0.0
      %1671 = vmatpush1.msra.mxu0 0.0
      %1672 = vmatprep.subr.mxu0 0.0
      %1673 = vmatpush1.msra.mxu0 0.0
      %1674 = vmatprep.subr.mxu0 0.0
      %1675 = vmatpush1.msra.mxu0 0.0
      %1676 = vmatprep.subr.mxu0 0.0
      %1677 = vmatpush1.msra.mxu0 0.0
      %1678 = vmatprep.subr.mxu0 0.0
      %1679 = vmatpush1.msra.mxu0 0.0
      %1680 = vmatprep.subr.mxu0 0.0
      %1681 = vmatpush1.msra.mxu0 0.0
      %1682 = vmatprep.subr.mxu0 0.0
      %1683 = vmatpush1.msra.mxu0 0.0
      %1684 = vmatprep.subr.mxu0 0.0
      %1685 = vmatpush1.msra.mxu0 0.0
      %1686 = vmatprep.subr.mxu0 0.0
      %1687 = vmatpush1.msra.mxu0 0.0
      %1688 = vmatprep.subr.mxu0 0.0
      %1689 = vmatpush1.msra.mxu0 0.0
      %1690 = vmatprep.subr.mxu0 0.0
      %1691 = vmatpush1.msra.mxu0 0.0
      %1692 = vmatprep.mubr.f32.mxu0 0.0
      %1693 = vmatmul.mubr.f32.gmra.mrb[0].mxu0 %v1623
      %v1694 = vpop.f32.mrb[0].mxu0
      %v1695 = vadd.f32 0.0, %v1694
      %v1696 = vpop.f32.mrb[0].mxu0
      %1697 = vdwg.mxu0
      %1698 = vst.msk [vmem:[%s287] sm:$0xff] %vm347, %v1695
      %p1699 = scmp.lt.s32.totalorder %s18, 1
      %s1700 = scalar_select %p1699, %s18, 1
      %s1701 = smul.addr %s1700, 8
      %s1702 = scalar_lea.vmem %s7, %s1701
      // Predicated region
      $region49: #{neural_atom_forward.4} parent=47 // pred_check
        %p1703 = pneg %p193
      $region50: #{neural_atom_forward.4} parent=47 // pred_check_branch
        %1705 = sbr.rel (%p1703) target = $region52
      $region51: #{neural_atom_forward.4} parent=47 // pred_region
        _
      $region52: #{neural_atom_forward.4} parent=47 // pred_fallthru
        _
    $region48: #{neural_atom_forward.4} parent=5 // pred_fallthru
      _
    %p1706 = scmp.le.s32.totalorder 2, %s13
    // Predicated region
    $region53: #{neural_atom_forward.4} parent=5 // pred_check
      %p1707 = pneg %p1706
    $region54: #{neural_atom_forward.4} parent=5 // pred_check_branch
      %1709 = sbr.rel (%p1707) target = $region56
    $region55: #{neural_atom_forward.4} parent=5 // pred_region
      %s1710 = ssub.s32 %s13, 2
      // Predicated region
      $region57: #{neural_atom_forward.4} parent=55 // pred_check
        %p1711 = pneg %p199
      $region58: #{neural_atom_forward.4} parent=55 // pred_check_branch
        %1713 = sbr.rel (%p1711) target = $region60
      $region59: #{neural_atom_forward.4} parent=55 // pred_region
        %p1714 = scmp.lt.s32.totalorder %s19, 1
        %s1715 = scalar_select %p1714, %s19, 1
        %s1716 = smul.addr %s1715, 8
        %s1717 = scalar_lea.vmem %s7, %s1716
      $region60: #{neural_atom_forward.4} parent=55 // pred_fallthru
        _
    $region56: #{neural_atom_forward.4} parent=5 // pred_fallthru
      _
  $region6: #{neural_atom_forward.4} parent=0 // loop_footer
    %s17 = sadd.s32 1, %s13
  $region7: #{neural_atom_forward.4} parent=0 // loop_footer_branch
    %12 = sbr.rel target = $region3
  $region8: #{neural_atom_forward.4} parent=0 // loop_exit
    _

// kernel: neural_atom_forward.5
$region0: #{neural_atom_forward.5}
  #allocation0 [shape = 'u32[]', space=smem, size = 0x4, offset = 0x4, fixed_abs, tag = 'smem constant byte address 0x4 - core index']
  #allocation1 [shape = 'u32[144,128]{1,0:T(1,128)}', space=vmem, size = 0x12000, scoped, tag = 'internal scratch']
  %s0 = inlined_call_operand.vmem [shape: f32[4,128], index: 0, kind: input, shape index: {}]
  %s1 = inlined_call_operand.vmem [shape: f32[128,128], index: 1, kind: input, shape index: {}]
  %s2 = inlined_call_operand.vmem [shape: f32[1,128,128], index: 2, kind: input, shape index: {}]
  %s3 = inlined_call_operand.vmem [shape: f32[1,128,128], index: 3, kind: input, shape index: {}]
  %s4 = inlined_call_operand.vmem [shape: f32[4,128], index: 4, kind: output, shape index: {}]
  %s5 = sld [smem:[#allocation0]]
  $region26: #{neural_atom_forward.5} parent=0
    _
  %s7 = ssub.s32 1, %s5
  %s8 = scalar_select 0, %s7, %s5
  // Predicated region
  $region2: #{neural_atom_forward.5} parent=0 // pred_check
    _
  $region3: #{neural_atom_forward.5} parent=0 // pred_check_branch
    %10 = sbr.rel (0) target = $region5
  $region4: #{neural_atom_forward.5} parent=0 // pred_region
    _
  $region5: #{neural_atom_forward.5} parent=0 // pred_fallthru
    _
  // Predicated region
  $region6: #{neural_atom_forward.5} parent=0 // pred_check
    _
  $region7: #{neural_atom_forward.5} parent=0 // pred_check_branch
    %12 = sbr.rel (0) target = $region9
  $region8: #{neural_atom_forward.5} parent=0 // pred_region
    _
  $region9: #{neural_atom_forward.5} parent=0 // pred_fallthru
    _
  // Predicated region
  $region10: #{neural_atom_forward.5} parent=0 // pred_check
    _
  $region11: #{neural_atom_forward.5} parent=0 // pred_check_branch
    %14 = sbr.rel (0) target = $region13
  $region12: #{neural_atom_forward.5} parent=0 // pred_region
    _
  $region13: #{neural_atom_forward.5} parent=0 // pred_fallthru
    _
  // Predicated region
  $region14: #{neural_atom_forward.5} parent=0 // pred_check
    _
  $region15: #{neural_atom_forward.5} parent=0 // pred_check_branch
    %16 = sbr.rel (0) target = $region17
  $region16: #{neural_atom_forward.5} parent=0 // pred_region
    _
  $region17: #{neural_atom_forward.5} parent=0 // pred_fallthru
    _
  %v17 = vld [vmem:[%s0] sm:$0xf]
  %v18 = vld [vmem:[%s1] sm:$0xff]
  %v19 = vld [vmem:[%s1 + $0x8] sm:$0xff]
  %v20 = vld [vmem:[%s1 + $0x10] sm:$0xff]
  %v21 = vld [vmem:[%s1 + $0x18] sm:$0xff]
  %v22 = vld [vmem:[%s1 + $0x20] sm:$0xff]
  %v23 = vld [vmem:[%s1 + $0x28] sm:$0xff]
  %v24 = vld [vmem:[%s1 + $0x30] sm:$0xff]
  %v25 = vld [vmem:[%s1 + $0x38] sm:$0xff]
  %v26 = vld [vmem:[%s1 + $0x40] sm:$0xff]
  %v27 = vld [vmem:[%s1 + $0x48] sm:$0xff]
  %v28 = vld [vmem:[%s1 + $0x50] sm:$0xff]
  %v29 = vld [vmem:[%s1 + $0x58] sm:$0xff]
  %v30 = vld [vmem:[%s1 + $0x60] sm:$0xff]
  %v31 = vld [vmem:[%s1 + $0x68] sm:$0xff]
  %v32 = vld [vmem:[%s1 + $0x70] sm:$0xff]
  %v33 = vld [vmem:[%s1 + $0x78] sm:$0xff]
  %34 = vmatprep.subr.mxu0 0.0
  %35 = vmatpush1.msra.mxu0 %v18
  %36 = vmatprep.subr.mxu0 0.0
  %37 = vmatpush1.msra.mxu0 %v19
  %38 = vmatprep.subr.mxu0 0.0
  %39 = vmatpush1.msra.mxu0 %v20
  %40 = vmatprep.subr.mxu0 0.0
  %41 = vmatpush1.msra.mxu0 %v21
  %42 = vmatprep.subr.mxu0 0.0
  %43 = vmatpush1.msra.mxu0 %v22
  %44 = vmatprep.subr.mxu0 0.0
  %45 = vmatpush1.msra.mxu0 %v23
  %46 = vmatprep.subr.mxu0 0.0
  %47 = vmatpush1.msra.mxu0 %v24
  %48 = vmatprep.subr.mxu0 0.0
  %49 = vmatpush1.msra.mxu0 %v25
  %50 = vmatprep.subr.mxu0 0.0
  %51 = vmatpush1.msra.mxu0 %v26
  %52 = vmatprep.subr.mxu0 0.0
  %53 = vmatpush1.msra.mxu0 %v27
  %54 = vmatprep.subr.mxu0 0.0
  %55 = vmatpush1.msra.mxu0 %v28
  %56 = vmatprep.subr.mxu0 0.0
  %57 = vmatpush1.msra.mxu0 %v29
  %58 = vmatprep.subr.mxu0 0.0
  %59 = vmatpush1.msra.mxu0 %v30
  %60 = vmatprep.subr.mxu0 0.0
  %61 = vmatpush1.msra.mxu0 %v31
  %62 = vmatprep.subr.mxu0 0.0
  %63 = vmatpush1.msra.mxu0 %v32
  %64 = vmatprep.subr.mxu0 0.0
  %65 = vmatpush1.msra.mxu0 %v33
  %66 = vmatprep.subr.mxu0 0.0
  %67 = vmatpush1.msra.mxu0 0.0
  %68 = vmatprep.subr.mxu0 0.0
  %69 = vmatpush1.msra.mxu0 0.0
  %70 = vmatprep.subr.mxu0 0.0
  %71 = vmatpush1.msra.mxu0 0.0
  %72 = vmatprep.subr.mxu0 0.0
  %73 = vmatpush1.msra.mxu0 0.0
  %74 = vmatprep.subr.mxu0 0.0
  %75 = vmatpush1.msra.mxu0 0.0
  %76 = vmatprep.subr.mxu0 0.0
  %77 = vmatpush1.msra.mxu0 0.0
  %78 = vmatprep.subr.mxu0 0.0
  %79 = vmatpush1.msra.mxu0 0.0
  %80 = vmatprep.subr.mxu0 0.0
  %81 = vmatpush1.msra.mxu0 0.0
  %82 = vmatprep.subr.mxu0 0.0
  %83 = vmatpush1.msra.mxu0 0.0
  %84 = vmatprep.subr.mxu0 0.0
  %85 = vmatpush1.msra.mxu0 0.0
  %86 = vmatprep.subr.mxu0 0.0
  %87 = vmatpush1.msra.mxu0 0.0
  %88 = vmatprep.subr.mxu0 0.0
  %89 = vmatpush1.msra.mxu0 0.0
  %90 = vmatprep.subr.mxu0 0.0
  %91 = vmatpush1.msra.mxu0 0.0
  %92 = vmatprep.subr.mxu0 0.0
  %93 = vmatpush1.msra.mxu0 0.0
  %94 = vmatprep.subr.mxu0 0.0
  %95 = vmatpush1.msra.mxu0 0.0
  %96 = vmatprep.subr.mxu0 0.0
  %97 = vmatpush1.msra.mxu0 0.0
  %98 = vmatprep.mubr.f32.mxu0 0.0
  %99 = vmatmul.mubr.f32.gmra.mrb[0].mxu0 %v17
  %v100 = vpop.f32.mrb[0].mxu0
  %v101 = vadd.f32 0.0, %v100
  %v102 = vpop.f32.mrb[0].mxu0
  %103 = vdwg.mxu0
  %v104 = vxor.u32 %v101, 2147483648
  %v105 = vmul.f32 %v104, 1.442695
  %v106 = vpow.pop %v105
  %v107 = vadd.f32 %v106, 1.0
  %v108 = vrcp.pop %v107
  %v109 = vmul.f32 1.0, %v108
  %v110 = vmul.f32 %v101, %v109
  %v111 = vmul.f32 %v110, 1.6666666
  %v112 = vld [vmem:[%s2] sm:$0xff]
  %v113 = vld [vmem:[%s2 + $0x8] sm:$0xff]
  %v114 = vld [vmem:[%s2 + $0x10] sm:$0xff]
  %v115 = vld [vmem:[%s2 + $0x18] sm:$0xff]
  %v116 = vld [vmem:[%s2 + $0x20] sm:$0xff]
  %v117 = vld [vmem:[%s2 + $0x28] sm:$0xff]
  %v118 = vld [vmem:[%s2 + $0x30] sm:$0xff]
  %v119 = vld [vmem:[%s2 + $0x38] sm:$0xff]
  %v120 = vld [vmem:[%s2 + $0x40] sm:$0xff]
  %v121 = vld [vmem:[%s2 + $0x48] sm:$0xff]
  %v122 = vld [vmem:[%s2 + $0x50] sm:$0xff]
  %v123 = vld [vmem:[%s2 + $0x58] sm:$0xff]
  %v124 = vld [vmem:[%s2 + $0x60] sm:$0xff]
  %v125 = vld [vmem:[%s2 + $0x68] sm:$0xff]
  %v126 = vld [vmem:[%s2 + $0x70] sm:$0xff]
  %v127 = vld [vmem:[%s2 + $0x78] sm:$0xff]
  %128 = vmatprep.subr.mxu0 0.0
  %129 = vmatpush1.msra.mxu0 %v112
  %130 = vmatprep.subr.mxu0 0.0
  %131 = vmatpush1.msra.mxu0 %v113
  %132 = vmatprep.subr.mxu0 0.0
  %133 = vmatpush1.msra.mxu0 %v114
  %134 = vmatprep.subr.mxu0 0.0
  %135 = vmatpush1.msra.mxu0 %v115
  %136 = vmatprep.subr.mxu0 0.0
  %137 = vmatpush1.msra.mxu0 %v116
  %138 = vmatprep.subr.mxu0 0.0
  %139 = vmatpush1.msra.mxu0 %v117
  %140 = vmatprep.subr.mxu0 0.0
  %141 = vmatpush1.msra.mxu0 %v118
  %142 = vmatprep.subr.mxu0 0.0
  %143 = vmatpush1.msra.mxu0 %v119
  %144 = vmatprep.subr.mxu0 0.0
  %145 = vmatpush1.msra.mxu0 %v120
  %146 = vmatprep.subr.mxu0 0.0
  %147 = vmatpush1.msra.mxu0 %v121
  %148 = vmatprep.subr.mxu0 0.0
  %149 = vmatpush1.msra.mxu0 %v122
  %150 = vmatprep.subr.mxu0 0.0
  %151 = vmatpush1.msra.mxu0 %v123
  %152 = vmatprep.subr.mxu0 0.0
  %153 = vmatpush1.msra.mxu0 %v124
  %154 = vmatprep.subr.mxu0 0.0
  %155 = vmatpush1.msra.mxu0 %v125
  %156 = vmatprep.subr.mxu0 0.0
  %157 = vmatpush1.msra.mxu0 %v126
  %158 = vmatprep.subr.mxu0 0.0
  %159 = vmatpush1.msra.mxu0 %v127
  %160 = vmatprep.subr.mxu0 0.0
  %161 = vmatpush1.msra.mxu0 0.0
  %162 = vmatprep.subr.mxu0 0.0
  %163 = vmatpush1.msra.mxu0 0.0
  %164 = vmatprep.subr.mxu0 0.0
  %165 = vmatpush1.msra.mxu0 0.0
  %166 = vmatprep.subr.mxu0 0.0
  %167 = vmatpush1.msra.mxu0 0.0
  %168 = vmatprep.subr.mxu0 0.0
  %169 = vmatpush1.msra.mxu0 0.0
  %170 = vmatprep.subr.mxu0 0.0
  %171 = vmatpush1.msra.mxu0 0.0
  %172 = vmatprep.subr.mxu0 0.0
  %173 = vmatpush1.msra.mxu0 0.0
  %174 = vmatprep.subr.mxu0 0.0
  %175 = vmatpush1.msra.mxu0 0.0
  %176 = vmatprep.subr.mxu0 0.0
  %177 = vmatpush1.msra.mxu0 0.0
  %178 = vmatprep.subr.mxu0 0.0
  %179 = vmatpush1.msra.mxu0 0.0
  %180 = vmatprep.subr.mxu0 0.0
  %181 = vmatpush1.msra.mxu0 0.0
  %182 = vmatprep.subr.mxu0 0.0
  %183 = vmatpush1.msra.mxu0 0.0
  %184 = vmatprep.subr.mxu0 0.0
  %185 = vmatpush1.msra.mxu0 0.0
  %186 = vmatprep.subr.mxu0 0.0
  %187 = vmatpush1.msra.mxu0 0.0
  %188 = vmatprep.subr.mxu0 0.0
  %189 = vmatpush1.msra.mxu0 0.0
  %190 = vmatprep.subr.mxu0 0.0
  %191 = vmatpush1.msra.mxu0 0.0
  %192 = vmatprep.mubr.f32.mxu0 0.0
  %193 = vmatmul.mubr.f32.gmra.mrb[0].mxu0 %v111
  %v194 = vpop.f32.mrb[0].mxu0
  %v195 = vadd.f32 0.0, %v194
  %v196 = vpop.f32.mrb[0].mxu0
  %197 = vdwg.mxu0
  %v198 = vxor.u32 %v195, 2147483648
  %v199 = vmul.f32 %v198, 1.442695
  %v200 = vpow.pop %v199
  %v201 = vadd.f32 %v200, 1.0
  %v202 = vrcp.pop %v201
  %v203 = vmul.f32 1.0, %v202
  %v204 = vmul.f32 %v195, %v203
  %v205 = vmul.f32 %v204, 1.6666666
  %v206 = vld [vmem:[%s3] sm:$0xff]
  %v207 = vld [vmem:[%s3 + $0x8] sm:$0xff]
  %v208 = vld [vmem:[%s3 + $0x10] sm:$0xff]
  %v209 = vld [vmem:[%s3 + $0x18] sm:$0xff]
  %v210 = vld [vmem:[%s3 + $0x20] sm:$0xff]
  %v211 = vld [vmem:[%s3 + $0x28] sm:$0xff]
  %v212 = vld [vmem:[%s3 + $0x30] sm:$0xff]
  %v213 = vld [vmem:[%s3 + $0x38] sm:$0xff]
  %v214 = vld [vmem:[%s3 + $0x40] sm:$0xff]
  %v215 = vld [vmem:[%s3 + $0x48] sm:$0xff]
  %v216 = vld [vmem:[%s3 + $0x50] sm:$0xff]
  %v217 = vld [vmem:[%s3 + $0x58] sm:$0xff]
  %v218 = vld [vmem:[%s3 + $0x60] sm:$0xff]
  %v219 = vld [vmem:[%s3 + $0x68] sm:$0xff]
  %v220 = vld [vmem:[%s3 + $0x70] sm:$0xff]
  %v221 = vld [vmem:[%s3 + $0x78] sm:$0xff]
  %222 = vmatprep.subr.mxu0 0.0
  %223 = vmatpush1.msra.mxu0 %v206
  %224 = vmatprep.subr.mxu0 0.0
  %225 = vmatpush1.msra.mxu0 %v207
  %226 = vmatprep.subr.mxu0 0.0
  %227 = vmatpush1.msra.mxu0 %v208
  %228 = vmatprep.subr.mxu0 0.0
  %229 = vmatpush1.msra.mxu0 %v209
  %230 = vmatprep.subr.mxu0 0.0
  %231 = vmatpush1.msra.mxu0 %v210
  %232 = vmatprep.subr.mxu0 0.0
  %233 = vmatpush1.msra.mxu0 %v211
  %234 = vmatprep.subr.mxu0 0.0
  %235 = vmatpush1.msra.mxu0 %v212
  %236 = vmatprep.subr.mxu0 0.0
  %237 = vmatpush1.msra.mxu0 %v213
  %238 = vmatprep.subr.mxu0 0.0
  %239 = vmatpush1.msra.mxu0 %v214
  %240 = vmatprep.subr.mxu0 0.0
  %241 = vmatpush1.msra.mxu0 %v215
  %242 = vmatprep.subr.mxu0 0.0
  %243 = vmatpush1.msra.mxu0 %v216
  %244 = vmatprep.subr.mxu0 0.0
  %245 = vmatpush1.msra.mxu0 %v217
  %246 = vmatprep.subr.mxu0 0.0
  %247 = vmatpush1.msra.mxu0 %v218
  %248 = vmatprep.subr.mxu0 0.0
  %249 = vmatpush1.msra.mxu0 %v219
  %250 = vmatprep.subr.mxu0 0.0
  %251 = vmatpush1.msra.mxu0 %v220
  %252 = vmatprep.subr.mxu0 0.0
  %253 = vmatpush1.msra.mxu0 %v221
  %254 = vmatprep.subr.mxu0 0.0
  %255 = vmatpush1.msra.mxu0 0.0
  %256 = vmatprep.subr.mxu0 0.0
  %257 = vmatpush1.msra.mxu0 0.0
  %258 = vmatprep.subr.mxu0 0.0
  %259 = vmatpush1.msra.mxu0 0.0
  %260 = vmatprep.subr.mxu0 0.0
  %261 = vmatpush1.msra.mxu0 0.0
  %262 = vmatprep.subr.mxu0 0.0
  %263 = vmatpush1.msra.mxu0 0.0
  %264 = vmatprep.subr.mxu0 0.0
  %265 = vmatpush1.msra.mxu0 0.0
  %266 = vmatprep.subr.mxu0 0.0
  %267 = vmatpush1.msra.mxu0 0.0
  %268 = vmatprep.subr.mxu0 0.0
  %269 = vmatpush1.msra.mxu0 0.0
  %270 = vmatprep.subr.mxu0 0.0
  %271 = vmatpush1.msra.mxu0 0.0
  %272 = vmatprep.subr.mxu0 0.0
  %273 = vmatpush1.msra.mxu0 0.0
  %274 = vmatprep.subr.mxu0 0.0
  %275 = vmatpush1.msra.mxu0 0.0
  %276 = vmatprep.subr.mxu0 0.0
  %277 = vmatpush1.msra.mxu0 0.0
  %278 = vmatprep.subr.mxu0 0.0
  %279 = vmatpush1.msra.mxu0 0.0
  %280 = vmatprep.subr.mxu0 0.0
  %281 = vmatpush1.msra.mxu0 0.0
  %282 = vmatprep.subr.mxu0 0.0
  %283 = vmatpush1.msra.mxu0 0.0
  %284 = vmatprep.subr.mxu0 0.0
  %285 = vmatpush1.msra.mxu0 0.0
  %286 = vmatprep.mubr.f32.mxu0 0.0
  %287 = vmatmul.mubr.f32.gmra.mrb[0].mxu0 %v205
  %v288 = vpop.f32.mrb[0].mxu0
  %v289 = vadd.f32 0.0, %v288
  %v290 = vpop.f32.mrb[0].mxu0
  %291 = vdwg.mxu0
  %v292 = vxor.u32 %v289, 2147483648
  %v293 = vmul.f32 %v292, 1.442695
  %v294 = vpow.pop %v293
  %v295 = vadd.f32 %v294, 1.0
  %v296 = vrcp.pop %v295
  %v297 = vmul.f32 1.0, %v296
  %v298 = vmul.f32 %v289, %v297
  %v299 = vmul.f32 %v298, 1.6666666
  %v300 = vadd.f32 %v111, %v299
  %v301 = vmul.f32 %v300, 0.70710677
  %302 = vst [vmem:[%s4] sm:$0xf] %v301
  // Predicated region
  $region18: #{neural_atom_forward.5} parent=0 // pred_check
    _
  $region19: #{neural_atom_forward.5} parent=0 // pred_check_branch
    %304 = sbr.rel (0) target = $region21
  $region20: #{neural_atom_forward.5} parent=0 // pred_region
    _
  $region21: #{neural_atom_forward.5} parent=0 // pred_fallthru
    _
  // Predicated region
  $region22: #{neural_atom_forward.5} parent=0 // pred_check
    _
  $region23: #{neural_atom_forward.5} parent=0 // pred_check_branch
    %306 = sbr.rel (0) target = $region25
  $region24: #{neural_atom_forward.5} parent=0 // pred_region
    _
  $region25: #{neural_atom_forward.5} parent=0 // pred_fallthru
    _

</llo_original>
